<compile_context>
chip_gen: v7x
topology: tpu7x:2x2x1
jax: 0.10.0
libtpu: 0.0.40
codegen_flags: <defaults>
</compile_context>

<pallas_src>
import functools

import jax
import jax.numpy as jnp
from jax import lax
from jax.experimental import pallas as pl
from jax.experimental.pallas import tpu as pltpu

EPS = 1e-5
NUM_GROUPS = 16


# ------------------------------ in-kernel GroupNorm ---------------------------
def _groupnorm(x, gamma, beta, gmat, gmat_t, relu):
    """GroupNorm on a channels-first (C, HW) tile.

    gamma/beta: (C, 1).  gmat: (C, G) one-hot group membership, gmat_t: (G, C).
    All math in f32; per-group statistics ride the MXU (channel reduce) + XLU (HW reduce),
    then broadcast back as (C, 1) columns on the VPU.
    """
    C, HW = x.shape
    G = gmat.shape[1]
    cg = C // G
    inv_n = 1.0 / float(HW * cg)

    # Group mean.
    grp_sum = jnp.sum(jnp.dot(gmat_t, x, preferred_element_type=jnp.float32),
                      axis=1, keepdims=True)                               # (G, 1)
    mean_c = jnp.dot(gmat, grp_sum, preferred_element_type=jnp.float32) * inv_n  # (C, 1)

    # Two-pass variance: center first, then square (no cancellation).
    xc = x - mean_c                                                        # (C, HW)
    grp_sq = jnp.sum(jnp.dot(gmat_t, xc * xc, preferred_element_type=jnp.float32),
                     axis=1, keepdims=True)                                # (G, 1)
    inv_g = lax.rsqrt(grp_sq * inv_n + EPS)                                # (G, 1)
    inv_c = jnp.dot(gmat, inv_g, preferred_element_type=jnp.float32)       # (C, 1)

    y = xc * (inv_c * gamma) + beta
    if relu:
        y = jnp.maximum(y, 0.0)
    return y


# ------------------------------ fused ResBlock kernel -------------------------
def _resblock_kernel(H, W,
                     x_ref, masks_ref,
                     w1t_ref, w2c_ref, w3t_ref, wst_ref,
                     g1_ref, b1_ref, g2_ref, b2_ref, g3_ref, b3_ref,
                     gs_ref, bs_ref,
                     gm_i_ref, gmt_i_ref, gm_o_ref, gmt_o_ref,
                     o_ref, col_ref):
    HW = H * W
    x = x_ref[0]                                                   # (Cin, HW)
    masks = masks_ref[...]                                         # (9, HW)
    gm_i, gmt_i = gm_i_ref[...], gmt_i_ref[...]
    gm_o, gmt_o = gm_o_ref[...], gmt_o_ref[...]

    # ---- mainstream stage 1: 1x1 conv -> GN -> ReLU ---------------------------
    h = jnp.dot(w1t_ref[...], x, preferred_element_type=jnp.float32)
    h = _groupnorm(h, g1_ref[...], b1_ref[...], gm_i, gmt_i, relu=True)

    # ---- mainstream stage 2: 3x3 conv (pad=1) -> GN -> ReLU --------------------
    # Build a (9*C, HW) im2col in VMEM scratch from flat lane shifts and precomputed
    # edge-validity masks (this IS the zero padding), then one K = 9*C MXU matmul.
    C2 = h.shape[0]
    for dy in range(3):
        for dx in range(3):
            t = dy * 3 + dx
            d = (dy - 1) * W + (dx - 1)            # flat offset of this tap
            shifted = jnp.roll(h, (-d) % HW, axis=1) if d != 0 else h
            col_ref[t * C2:(t + 1) * C2, :] = shifted * masks[t:t + 1, :]
    h = jnp.dot(w2c_ref[...], col_ref[...], preferred_element_type=jnp.float32)
    h = _groupnorm(h, g2_ref[...], b2_ref[...], gm_i, gmt_i, relu=True)

    # ---- mainstream stage 3: 1x1 conv -> GN ------------------------------------
    m = jnp.dot(w3t_ref[...], h, preferred_element_type=jnp.float32)
    m = _groupnorm(m, g3_ref[...], b3_ref[...], gm_o, gmt_o, relu=False)

    # ---- shortcut: 1x1 conv -> GN, then residual add ---------------------------
    s = jnp.dot(wst_ref[...], x, preferred_element_type=jnp.float32)
    s = _groupnorm(s, gs_ref[...], bs_ref[...], gm_o, gmt_o, relu=False)

    o_ref[0] = m + s


def _tap_masks(H, W):
    """(9, H*W) validity masks: mask[t, y*W+x] = 1 iff tap t of a 3x3 SAME conv at
    output (y, x) reads an in-bounds input pixel (otherwise the tap contributes 0)."""
    y = jnp.arange(H).reshape(H, 1)
    x = jnp.arange(W).reshape(1, W)
    rows = []
    for dy in range(3):
        for dx in range(3):
            ry, rx = dy - 1, dx - 1
            valid = ((y + ry >= 0) & (y + ry < H) &
                     (x + rx >= 0) & (x + rx < W))
            rows.append(valid.reshape(-1))
    return jnp.stack(rows).astype(jnp.float32)


def _group_onehots(C, G):
    """(C, G) one-hot group membership matrix and its (G, C) transpose."""
    c = jnp.arange(C)
    g = jnp.arange(G)
    m = (c[:, None] // (C // G) == g[None, :]).astype(jnp.float32)
    return m, m.T


def _const_spec(a):
    nd = a.ndim
    return pl.BlockSpec(a.shape, lambda b: (0,) * nd)


# ------------------------------ ResBlock forward ------------------------------
def resblock_forward(x_nchw, p, num_groups=NUM_GROUPS):
    N, Cin, H, W = x_nchw.shape
    HW = H * W
    inner = p["w1"].shape[1]
    out_ch = p["w3"].shape[1]

    # Channels-first operands (tiny one-time transposes / reshapes of the weights).
    w1t = jnp.transpose(p["w1"])                                       # (inner, Cin)
    w2c = jnp.transpose(p["w2"], (3, 0, 1, 2)).reshape(p["w2"].shape[3], -1)  # (Cout, 9*Cin)
    w3t = jnp.transpose(p["w3"])                                       # (out_ch, inner)
    wst = jnp.transpose(p["ws"])                                       # (out_ch, Cin)
    g1, b1 = p["g1"].reshape(inner, 1), p["b1"].reshape(inner, 1)
    g2, b2 = p["g2"].reshape(inner, 1), p["b2"].reshape(inner, 1)
    g3, b3 = p["g3"].reshape(out_ch, 1), p["b3"].reshape(out_ch, 1)
    gs, bs = p["gs"].reshape(out_ch, 1), p["bs"].reshape(out_ch, 1)
    masks = _tap_masks(H, W)
    gm_i, gmt_i = _group_onehots(inner, num_groups)
    gm_o, gmt_o = _group_onehots(out_ch, num_groups)

    # NCHW -> (N, C, H*W): merges trailing dims only, i.e. a free reshape (no transpose).
    x = x_nchw.reshape(N, Cin, HW)

    out = pl.pallas_call(
        functools.partial(_resblock_kernel, H, W),
        out_shape=jax.ShapeDtypeStruct((N, out_ch, HW), jnp.float32),
        grid=(N,),
        in_specs=[
            pl.BlockSpec((1, Cin, HW), lambda b: (b, 0, 0)),           # x (per batch)
            _const_spec(masks),                                        # 3x3 tap masks
            _const_spec(w1t), _const_spec(w2c),                        # conv weights
            _const_spec(w3t), _const_spec(wst),
            _const_spec(g1), _const_spec(b1),                          # GN affine params
            _const_spec(g2), _const_spec(b2),
            _const_spec(g3), _const_spec(b3),
            _const_spec(gs), _const_spec(bs),
            _const_spec(gm_i), _const_spec(gmt_i),                     # group one-hots
            _const_spec(gm_o), _const_spec(gmt_o),
        ],
        out_specs=pl.BlockSpec((1, out_ch, HW), lambda b: (b, 0, 0)),
        scratch_shapes=[pltpu.VMEM((9 * inner, HW), jnp.float32)],     # im2col buffer
        compiler_params=pltpu.CompilerParams(
            dimension_semantics=("parallel",)),
    )(x, masks, w1t, w2c, w3t, wst,
      g1, b1, g2, b2, g3, b3, gs, bs,
      gm_i, gmt_i, gm_o, gmt_o)

    return out.reshape(N, out_ch, H, W)                                # free reshape


# ------------------------------ plain-JAX reference ---------------------------
def _ref_groupnorm(x, gamma, beta, G=NUM_GROUPS):
    N, HW, C = x.shape
    cg = C // G
    xr = x.reshape(N, HW, G, cg)
    mean = xr.mean(axis=(1, 3), keepdims=True)
    var = ((xr - mean) ** 2).mean(axis=(1, 3), keepdims=True)
    xn = ((xr - mean) / jnp.sqrt(var + EPS)).reshape(N, HW, C)
    return xn * gamma + beta


def reference_forward(x_nchw, p):
    N, Cin, H, W = x_nchw.shape
    x = jnp.transpose(x_nchw, (0, 2, 3, 1)).reshape(N, H * W, Cin)
    h = x @ p["w1"]
    h = jax.nn.relu(_ref_groupnorm(h, p["g1"], p["b1"]))
    h = lax.conv_general_dilated(h.reshape(N, H, W, -1), p["w2"], (1, 1), "SAME",
                                 dimension_numbers=("NHWC", "HWIO", "NHWC"))
    h = jax.nn.relu(_ref_groupnorm(h.reshape(N, H * W, -1), p["g2"], p["b2"]))
    h = h @ p["w3"]
    main = _ref_groupnorm(h, p["g3"], p["b3"])
    s = _ref_groupnorm(x @ p["ws"], p["gs"], p["bs"])
    out = main + s
    return jnp.transpose(out.reshape(N, H, W, -1), (0, 3, 1, 2))


# ------------------------------------ main -------------------------------------
if __name__ == "__main__":
    N, Cin, H, W = 2, 4, 16, 16
    inner, out_ch = 32, 32     # must be multiples of 16 for GroupNorm(16, .)

    key = jax.random.PRNGKey(0)
    ks = jax.random.split(key, 13)

    x_nchw = jax.random.normal(ks[0], (N, Cin, H, W), jnp.float32)

    params = dict(
        w1=0.1 * jax.random.normal(ks[1], (Cin, inner), jnp.float32),
        g1=1.0 + 0.1 * jax.random.normal(ks[2], (1, inner), jnp.float32),
        b1=0.1 * jax.random.normal(ks[3], (1, inner), jnp.float32),
        w2=0.1 * jax.random.normal(ks[4], (3, 3, inner, inner), jnp.float32),
        g2=1.0 + 0.1 * jax.random.normal(ks[5], (1, inner), jnp.float32),
        b2=0.1 * jax.random.normal(ks[6], (1, inner), jnp.float32),
        w3=0.1 * jax.random.normal(ks[7], (inner, out_ch), jnp.float32),
        g3=1.0 + 0.1 * jax.random.normal(ks[8], (1, out_ch), jnp.float32),
        b3=0.1 * jax.random.normal(ks[9], (1, out_ch), jnp.float32),
        ws=0.1 * jax.random.normal(ks[10], (Cin, out_ch), jnp.float32),
        gs=1.0 + 0.1 * jax.random.normal(ks[11], (1, out_ch), jnp.float32),
        bs=0.1 * jax.random.normal(ks[12], (1, out_ch), jnp.float32),
    )

    out = jax.block_until_ready(resblock_forward(x_nchw, params))
    assert out.shape == (N, out_ch, H, W)

    ref = reference_forward(x_nchw, params)
    assert jnp.allclose(out, ref, atol=2e-3, rtol=2e-3), "mismatch vs JAX reference"

    print("KERNEL_OK")
</pallas_src>

<mosaic_0001>
module attributes {stable_mosaic.version = 11 : i64} {
  func.func @_resblock_kernel(%arg0: i32, %arg1: memref<1x4x256xf32, #tpu.memory_space<vmem>>, %arg2: memref<9x256xf32, #tpu.memory_space<vmem>>, %arg3: memref<32x4xf32, #tpu.memory_space<vmem>>, %arg4: memref<32x288xf32, #tpu.memory_space<vmem>>, %arg5: memref<32x32xf32, #tpu.memory_space<vmem>>, %arg6: memref<32x4xf32, #tpu.memory_space<vmem>>, %arg7: memref<32x1xf32, #tpu.memory_space<vmem>>, %arg8: memref<32x1xf32, #tpu.memory_space<vmem>>, %arg9: memref<32x1xf32, #tpu.memory_space<vmem>>, %arg10: memref<32x1xf32, #tpu.memory_space<vmem>>, %arg11: memref<32x1xf32, #tpu.memory_space<vmem>>, %arg12: memref<32x1xf32, #tpu.memory_space<vmem>>, %arg13: memref<32x1xf32, #tpu.memory_space<vmem>>, %arg14: memref<32x1xf32, #tpu.memory_space<vmem>>, %arg15: memref<32x16xf32, #tpu.memory_space<vmem>>, %arg16: memref<16x32xf32, #tpu.memory_space<vmem>>, %arg17: memref<32x16xf32, #tpu.memory_space<vmem>>, %arg18: memref<16x32xf32, #tpu.memory_space<vmem>>, %arg19: memref<1x32x256xf32, #tpu.memory_space<vmem>>, %arg20: memref<288x256xf32, #tpu.memory_space<vmem>>) attributes {dimension_semantics = [#tpu.dimension_semantics<parallel>], iteration_bounds = array<i64: 2>, scalar_prefetch = 0 : i64, scratch_operands = 1 : i64, tpu.core_type = #tpu.core_type<tc>, window_params = [{transform_indices = @transform_0, window_bounds = array<i64: 1, 4, 256>}, {pipeline_mode = #tpu.pipeline_mode<synchronous>, transform_indices = @transform_1, window_bounds = array<i64: 9, 256>}, {pipeline_mode = #tpu.pipeline_mode<synchronous>, transform_indices = @transform_2, window_bounds = array<i64: 32, 4>}, {pipeline_mode = #tpu.pipeline_mode<synchronous>, transform_indices = @transform_3, window_bounds = array<i64: 32, 288>}, {pipeline_mode = #tpu.pipeline_mode<synchronous>, transform_indices = @transform_4, window_bounds = array<i64: 32, 32>}, {pipeline_mode = #tpu.pipeline_mode<synchronous>, transform_indices = @transform_5, window_bounds = array<i64: 32, 4>}, {pipeline_mode = #tpu.pipeline_mode<synchronous>, transform_indices = @transform_6, window_bounds = array<i64: 32, 1>}, {pipeline_mode = #tpu.pipeline_mode<synchronous>, transform_indices = @transform_7, window_bounds = array<i64: 32, 1>}, {pipeline_mode = #tpu.pipeline_mode<synchronous>, transform_indices = @transform_8, window_bounds = array<i64: 32, 1>}, {pipeline_mode = #tpu.pipeline_mode<synchronous>, transform_indices = @transform_9, window_bounds = array<i64: 32, 1>}, {pipeline_mode = #tpu.pipeline_mode<synchronous>, transform_indices = @transform_10, window_bounds = array<i64: 32, 1>}, {pipeline_mode = #tpu.pipeline_mode<synchronous>, transform_indices = @transform_11, window_bounds = array<i64: 32, 1>}, {pipeline_mode = #tpu.pipeline_mode<synchronous>, transform_indices = @transform_12, window_bounds = array<i64: 32, 1>}, {pipeline_mode = #tpu.pipeline_mode<synchronous>, transform_indices = @transform_13, window_bounds = array<i64: 32, 1>}, {pipeline_mode = #tpu.pipeline_mode<synchronous>, transform_indices = @transform_14, window_bounds = array<i64: 32, 16>}, {pipeline_mode = #tpu.pipeline_mode<synchronous>, transform_indices = @transform_15, window_bounds = array<i64: 16, 32>}, {pipeline_mode = #tpu.pipeline_mode<synchronous>, transform_indices = @transform_16, window_bounds = array<i64: 32, 16>}, {pipeline_mode = #tpu.pipeline_mode<synchronous>, transform_indices = @transform_17, window_bounds = array<i64: 16, 32>}, {transform_indices = @transform_18, window_bounds = array<i64: 1, 32, 256>}]} {
    %c0 = arith.constant 0 : index
    %c0_0 = arith.constant 0 : index
    %c0_1 = arith.constant 0 : index
    %0 = vector.load %arg1[%c0, %c0_0, %c0_1] : memref<1x4x256xf32, #tpu.memory_space<vmem>>, vector<1x4x256xf32>
    %1 = vector.shape_cast %0 : vector<1x4x256xf32> to vector<4x256xf32>
    %c0_2 = arith.constant 0 : index
    %c0_3 = arith.constant 0 : index
    %2 = vector.load %arg2[%c0_2, %c0_3] : memref<9x256xf32, #tpu.memory_space<vmem>>, vector<9x256xf32>
    %c0_4 = arith.constant 0 : index
    %c0_5 = arith.constant 0 : index
    %3 = vector.load %arg15[%c0_4, %c0_5] : memref<32x16xf32, #tpu.memory_space<vmem>>, vector<32x16xf32>
    %c0_6 = arith.constant 0 : index
    %c0_7 = arith.constant 0 : index
    %4 = vector.load %arg16[%c0_6, %c0_7] : memref<16x32xf32, #tpu.memory_space<vmem>>, vector<16x32xf32>
    %c0_8 = arith.constant 0 : index
    %c0_9 = arith.constant 0 : index
    %5 = vector.load %arg17[%c0_8, %c0_9] : memref<32x16xf32, #tpu.memory_space<vmem>>, vector<32x16xf32>
    %c0_10 = arith.constant 0 : index
    %c0_11 = arith.constant 0 : index
    %6 = vector.load %arg18[%c0_10, %c0_11] : memref<16x32xf32, #tpu.memory_space<vmem>>, vector<16x32xf32>
    %c0_12 = arith.constant 0 : index
    %c0_13 = arith.constant 0 : index
    %7 = vector.load %arg3[%c0_12, %c0_13] : memref<32x4xf32, #tpu.memory_space<vmem>>, vector<32x4xf32>
    %cst = arith.constant dense<0.000000e+00> : vector<32x256xf32>
    %8 = tpu.matmul %7, %1, %cst {dimension_numbers = #tpu.dot_dimension_numbers<[1], [0], [0], [1], [0, 0, 1, 1], [], []>} : vector<32x4xf32>, vector<4x256xf32>, vector<32x256xf32> -> vector<32x256xf32>
    %c0_14 = arith.constant 0 : index
    %c0_15 = arith.constant 0 : index
    %9 = vector.load %arg7[%c0_14, %c0_15] : memref<32x1xf32, #tpu.memory_space<vmem>>, vector<32x1xf32>
    %c0_16 = arith.constant 0 : index
    %c0_17 = arith.constant 0 : index
    %10 = vector.load %arg8[%c0_16, %c0_17] : memref<32x1xf32, #tpu.memory_space<vmem>>, vector<32x1xf32>
    %cst_18 = arith.constant dense<0.000000e+00> : vector<16x256xf32>
    %11 = tpu.matmul %4, %8, %cst_18 {dimension_numbers = #tpu.dot_dimension_numbers<[1], [0], [0], [1], [0, 0, 1, 1], [], []>} : vector<16x32xf32>, vector<32x256xf32>, vector<16x256xf32> -> vector<16x256xf32>
    %cst_19 = arith.constant dense<0.000000e+00> : vector<16xf32>
    %12 = vector.multi_reduction <add>, %11, %cst_19 [1] : vector<16x256xf32> to vector<16xf32>
    %13 = vector.shape_cast %12 : vector<16xf32> to vector<16x1xf32>
    %cst_20 = arith.constant dense<0.000000e+00> : vector<32x1xf32>
    %14 = tpu.matmul %3, %13, %cst_20 {dimension_numbers = #tpu.dot_dimension_numbers<[1], [0], [0], [1], [0, 0, 1, 1], [], []>} : vector<32x16xf32>, vector<16x1xf32>, vector<32x1xf32> -> vector<32x1xf32>
    %cst_21 = arith.constant 0.001953125 : f32
    %15 = vector.broadcast %cst_21 : f32 to vector<32x1xf32>
    %16 = arith.mulf %14, %15 : vector<32x1xf32>
    %17 = vector.broadcast %16 : vector<32x1xf32> to vector<32x256xf32>
    %18 = arith.subf %8, %17 : vector<32x256xf32>
    %19 = arith.mulf %18, %18 : vector<32x256xf32>
    %cst_22 = arith.constant dense<0.000000e+00> : vector<16x256xf32>
    %20 = tpu.matmul %4, %19, %cst_22 {dimension_numbers = #tpu.dot_dimension_numbers<[1], [0], [0], [1], [0, 0, 1, 1], [], []>} : vector<16x32xf32>, vector<32x256xf32>, vector<16x256xf32> -> vector<16x256xf32>
    %cst_23 = arith.constant dense<0.000000e+00> : vector<16xf32>
    %21 = vector.multi_reduction <add>, %20, %cst_23 [1] : vector<16x256xf32> to vector<16xf32>
    %22 = vector.shape_cast %21 : vector<16xf32> to vector<16x1xf32>
    %cst_24 = arith.constant 0.001953125 : f32
    %23 = vector.broadcast %cst_24 : f32 to vector<16x1xf32>
    %24 = arith.mulf %22, %23 : vector<16x1xf32>
    %cst_25 = arith.constant 9.99999974E-6 : f32
    %25 = vector.broadcast %cst_25 : f32 to vector<16x1xf32>
    %26 = arith.addf %24, %25 : vector<16x1xf32>
    %27 = math.rsqrt %26 : vector<16x1xf32>
    %cst_26 = arith.constant dense<0.000000e+00> : vector<32x1xf32>
    %28 = tpu.matmul %3, %27, %cst_26 {dimension_numbers = #tpu.dot_dimension_numbers<[1], [0], [0], [1], [0, 0, 1, 1], [], []>} : vector<32x16xf32>, vector<16x1xf32>, vector<32x1xf32> -> vector<32x1xf32>
    %29 = arith.mulf %28, %9 : vector<32x1xf32>
    %30 = vector.broadcast %29 : vector<32x1xf32> to vector<32x256xf32>
    %31 = arith.mulf %18, %30 : vector<32x256xf32>
    %32 = vector.broadcast %10 : vector<32x1xf32> to vector<32x256xf32>
    %33 = arith.addf %31, %32 : vector<32x256xf32>
    %cst_27 = arith.constant 0.000000e+00 : f32
    %34 = vector.broadcast %cst_27 : f32 to vector<32x256xf32>
    %35 = arith.maximumf %33, %34 : vector<32x256xf32>
    %36 = vector.extract_strided_slice %35 {offsets = [0, 239], sizes = [32, 17], strides = [1, 1]} : vector<32x256xf32> to vector<32x17xf32>
    %37 = vector.extract_strided_slice %35 {offsets = [0, 0], sizes = [32, 239], strides = [1, 1]} : vector<32x256xf32> to vector<32x239xf32>
    %38 = tpu.concatenate %36, %37 in 1 : vector<32x17xf32>, vector<32x239xf32> -> vector<32x256xf32>
    %39 = vector.extract_strided_slice %2 {offsets = [0, 0], sizes = [1, 256], strides = [1, 1]} : vector<9x256xf32> to vector<1x256xf32>
    %40 = vector.broadcast %39 : vector<1x256xf32> to vector<32x256xf32>
    %41 = arith.mulf %38, %40 : vector<32x256xf32>
    %c0_28 = arith.constant 0 : index
    %c0_29 = arith.constant 0 : index
    %42 = vector.load %arg20[%c0_28, %c0_29] : memref<288x256xf32, #tpu.memory_space<vmem>>, vector<32x256xf32>
    tpu.vector_store %arg20[%c0_28, %c0_29], %41 {strides = array<i32>} : memref<288x256xf32, #tpu.memory_space<vmem>>, vector<32x256xf32>,
    %43 = vector.extract_strided_slice %35 {offsets = [0, 240], sizes = [32, 16], strides = [1, 1]} : vector<32x256xf32> to vector<32x16xf32>
    %44 = vector.extract_strided_slice %35 {offsets = [0, 0], sizes = [32, 240], strides = [1, 1]} : vector<32x256xf32> to vector<32x240xf32>
    %45 = tpu.concatenate %43, %44 in 1 : vector<32x16xf32>, vector<32x240xf32> -> vector<32x256xf32>
    %46 = vector.extract_strided_slice %2 {offsets = [1, 0], sizes = [1, 256], strides = [1, 1]} : vector<9x256xf32> to vector<1x256xf32>
    %47 = vector.broadcast %46 : vector<1x256xf32> to vector<32x256xf32>
    %48 = arith.mulf %45, %47 : vector<32x256xf32>
    %c32 = arith.constant 32 : index
    %c0_30 = arith.constant 0 : index
    %49 = vector.load %arg20[%c32, %c0_30] : memref<288x256xf32, #tpu.memory_space<vmem>>, vector<32x256xf32>
    tpu.vector_store %arg20[%c32, %c0_30], %48 {strides = array<i32>} : memref<288x256xf32, #tpu.memory_space<vmem>>, vector<32x256xf32>,
    %50 = vector.extract_strided_slice %35 {offsets = [0, 241], sizes = [32, 15], strides = [1, 1]} : vector<32x256xf32> to vector<32x15xf32>
    %51 = vector.extract_strided_slice %35 {offsets = [0, 0], sizes = [32, 241], strides = [1, 1]} : vector<32x256xf32> to vector<32x241xf32>
    %52 = tpu.concatenate %50, %51 in 1 : vector<32x15xf32>, vector<32x241xf32> -> vector<32x256xf32>
    %53 = vector.extract_strided_slice %2 {offsets = [2, 0], sizes = [1, 256], strides = [1, 1]} : vector<9x256xf32> to vector<1x256xf32>
    %54 = vector.broadcast %53 : vector<1x256xf32> to vector<32x256xf32>
    %55 = arith.mulf %52, %54 : vector<32x256xf32>
    %c64 = arith.constant 64 : index
    %c0_31 = arith.constant 0 : index
    %56 = vector.load %arg20[%c64, %c0_31] : memref<288x256xf32, #tpu.memory_space<vmem>>, vector<32x256xf32>
    tpu.vector_store %arg20[%c64, %c0_31], %55 {strides = array<i32>} : memref<288x256xf32, #tpu.memory_space<vmem>>, vector<32x256xf32>,
    %57 = vector.extract_strided_slice %35 {offsets = [0, 255], sizes = [32, 1], strides = [1, 1]} : vector<32x256xf32> to vector<32x1xf32>
    %58 = vector.extract_strided_slice %35 {offsets = [0, 0], sizes = [32, 255], strides = [1, 1]} : vector<32x256xf32> to vector<32x255xf32>
    %59 = tpu.concatenate %57, %58 in 1 : vector<32x1xf32>, vector<32x255xf32> -> vector<32x256xf32>
    %60 = vector.extract_strided_slice %2 {offsets = [3, 0], sizes = [1, 256], strides = [1, 1]} : vector<9x256xf32> to vector<1x256xf32>
    %61 = vector.broadcast %60 : vector<1x256xf32> to vector<32x256xf32>
    %62 = arith.mulf %59, %61 : vector<32x256xf32>
    %c96 = arith.constant 96 : index
    %c0_32 = arith.constant 0 : index
    %63 = vector.load %arg20[%c96, %c0_32] : memref<288x256xf32, #tpu.memory_space<vmem>>, vector<32x256xf32>
    tpu.vector_store %arg20[%c96, %c0_32], %62 {strides = array<i32>} : memref<288x256xf32, #tpu.memory_space<vmem>>, vector<32x256xf32>,
    %64 = vector.extract_strided_slice %2 {offsets = [4, 0], sizes = [1, 256], strides = [1, 1]} : vector<9x256xf32> to vector<1x256xf32>
    %65 = vector.broadcast %64 : vector<1x256xf32> to vector<32x256xf32>
    %66 = arith.mulf %35, %65 : vector<32x256xf32>
    %c128 = arith.constant 128 : index
    %c0_33 = arith.constant 0 : index
    %67 = vector.load %arg20[%c128, %c0_33] : memref<288x256xf32, #tpu.memory_space<vmem>>, vector<32x256xf32>
    tpu.vector_store %arg20[%c128, %c0_33], %66 {strides = array<i32>} : memref<288x256xf32, #tpu.memory_space<vmem>>, vector<32x256xf32>,
    %68 = vector.extract_strided_slice %35 {offsets = [0, 1], sizes = [32, 255], strides = [1, 1]} : vector<32x256xf32> to vector<32x255xf32>
    %69 = vector.extract_strided_slice %35 {offsets = [0, 0], sizes = [32, 1], strides = [1, 1]} : vector<32x256xf32> to vector<32x1xf32>
    %70 = tpu.concatenate %68, %69 in 1 : vector<32x255xf32>, vector<32x1xf32> -> vector<32x256xf32>
    %71 = vector.extract_strided_slice %2 {offsets = [5, 0], sizes = [1, 256], strides = [1, 1]} : vector<9x256xf32> to vector<1x256xf32>
    %72 = vector.broadcast %71 : vector<1x256xf32> to vector<32x256xf32>
    %73 = arith.mulf %70, %72 : vector<32x256xf32>
    %c160 = arith.constant 160 : index
    %c0_34 = arith.constant 0 : index
    %74 = vector.load %arg20[%c160, %c0_34] : memref<288x256xf32, #tpu.memory_space<vmem>>, vector<32x256xf32>
    tpu.vector_store %arg20[%c160, %c0_34], %73 {strides = array<i32>} : memref<288x256xf32, #tpu.memory_space<vmem>>, vector<32x256xf32>,
    %75 = vector.extract_strided_slice %35 {offsets = [0, 15], sizes = [32, 241], strides = [1, 1]} : vector<32x256xf32> to vector<32x241xf32>
    %76 = vector.extract_strided_slice %35 {offsets = [0, 0], sizes = [32, 15], strides = [1, 1]} : vector<32x256xf32> to vector<32x15xf32>
    %77 = tpu.concatenate %75, %76 in 1 : vector<32x241xf32>, vector<32x15xf32> -> vector<32x256xf32>
    %78 = vector.extract_strided_slice %2 {offsets = [6, 0], sizes = [1, 256], strides = [1, 1]} : vector<9x256xf32> to vector<1x256xf32>
    %79 = vector.broadcast %78 : vector<1x256xf32> to vector<32x256xf32>
    %80 = arith.mulf %77, %79 : vector<32x256xf32>
    %c192 = arith.constant 192 : index
    %c0_35 = arith.constant 0 : index
    %81 = vector.load %arg20[%c192, %c0_35] : memref<288x256xf32, #tpu.memory_space<vmem>>, vector<32x256xf32>
    tpu.vector_store %arg20[%c192, %c0_35], %80 {strides = array<i32>} : memref<288x256xf32, #tpu.memory_space<vmem>>, vector<32x256xf32>,
    %82 = vector.extract_strided_slice %35 {offsets = [0, 16], sizes = [32, 240], strides = [1, 1]} : vector<32x256xf32> to vector<32x240xf32>
    %83 = vector.extract_strided_slice %35 {offsets = [0, 0], sizes = [32, 16], strides = [1, 1]} : vector<32x256xf32> to vector<32x16xf32>
    %84 = tpu.concatenate %82, %83 in 1 : vector<32x240xf32>, vector<32x16xf32> -> vector<32x256xf32>
    %85 = vector.extract_strided_slice %2 {offsets = [7, 0], sizes = [1, 256], strides = [1, 1]} : vector<9x256xf32> to vector<1x256xf32>
    %86 = vector.broadcast %85 : vector<1x256xf32> to vector<32x256xf32>
    %87 = arith.mulf %84, %86 : vector<32x256xf32>
    %c224 = arith.constant 224 : index
    %c0_36 = arith.constant 0 : index
    %88 = vector.load %arg20[%c224, %c0_36] : memref<288x256xf32, #tpu.memory_space<vmem>>, vector<32x256xf32>
    tpu.vector_store %arg20[%c224, %c0_36], %87 {strides = array<i32>} : memref<288x256xf32, #tpu.memory_space<vmem>>, vector<32x256xf32>,
    %89 = vector.extract_strided_slice %35 {offsets = [0, 17], sizes = [32, 239], strides = [1, 1]} : vector<32x256xf32> to vector<32x239xf32>
    %90 = vector.extract_strided_slice %35 {offsets = [0, 0], sizes = [32, 17], strides = [1, 1]} : vector<32x256xf32> to vector<32x17xf32>
    %91 = tpu.concatenate %89, %90 in 1 : vector<32x239xf32>, vector<32x17xf32> -> vector<32x256xf32>
    %92 = vector.extract_strided_slice %2 {offsets = [8, 0], sizes = [1, 256], strides = [1, 1]} : vector<9x256xf32> to vector<1x256xf32>
    %93 = vector.broadcast %92 : vector<1x256xf32> to vector<32x256xf32>
    %94 = arith.mulf %91, %93 : vector<32x256xf32>
    %c256 = arith.constant 256 : index
    %c0_37 = arith.constant 0 : index
    %95 = vector.load %arg20[%c256, %c0_37] : memref<288x256xf32, #tpu.memory_space<vmem>>, vector<32x256xf32>
    tpu.vector_store %arg20[%c256, %c0_37], %94 {strides = array<i32>} : memref<288x256xf32, #tpu.memory_space<vmem>>, vector<32x256xf32>,
    %c0_38 = arith.constant 0 : index
    %c0_39 = arith.constant 0 : index
    %96 = vector.load %arg4[%c0_38, %c0_39] : memref<32x288xf32, #tpu.memory_space<vmem>>, vector<32x288xf32>
    %c0_40 = arith.constant 0 : index
    %c0_41 = arith.constant 0 : index
    %97 = vector.load %arg20[%c0_40, %c0_41] : memref<288x256xf32, #tpu.memory_space<vmem>>, vector<288x256xf32>
    %cst_42 = arith.constant dense<0.000000e+00> : vector<32x256xf32>
    %98 = tpu.matmul %96, %97, %cst_42 {dimension_numbers = #tpu.dot_dimension_numbers<[1], [0], [0], [1], [0, 0, 1, 1], [], []>} : vector<32x288xf32>, vector<288x256xf32>, vector<32x256xf32> -> vector<32x256xf32>
    %c0_43 = arith.constant 0 : index
    %c0_44 = arith.constant 0 : index
    %99 = vector.load %arg9[%c0_43, %c0_44] : memref<32x1xf32, #tpu.memory_space<vmem>>, vector<32x1xf32>
    %c0_45 = arith.constant 0 : index
    %c0_46 = arith.constant 0 : index
    %100 = vector.load %arg10[%c0_45, %c0_46] : memref<32x1xf32, #tpu.memory_space<vmem>>, vector<32x1xf32>
    %cst_47 = arith.constant dense<0.000000e+00> : vector<16x256xf32>
    %101 = tpu.matmul %4, %98, %cst_47 {dimension_numbers = #tpu.dot_dimension_numbers<[1], [0], [0], [1], [0, 0, 1, 1], [], []>} : vector<16x32xf32>, vector<32x256xf32>, vector<16x256xf32> -> vector<16x256xf32>
    %cst_48 = arith.constant dense<0.000000e+00> : vector<16xf32>
    %102 = vector.multi_reduction <add>, %101, %cst_48 [1] : vector<16x256xf32> to vector<16xf32>
    %103 = vector.shape_cast %102 : vector<16xf32> to vector<16x1xf32>
    %cst_49 = arith.constant dense<0.000000e+00> : vector<32x1xf32>
    %104 = tpu.matmul %3, %103, %cst_49 {dimension_numbers = #tpu.dot_dimension_numbers<[1], [0], [0], [1], [0, 0, 1, 1], [], []>} : vector<32x16xf32>, vector<16x1xf32>, vector<32x1xf32> -> vector<32x1xf32>
    %cst_50 = arith.constant 0.001953125 : f32
    %105 = vector.broadcast %cst_50 : f32 to vector<32x1xf32>
    %106 = arith.mulf %104, %105 : vector<32x1xf32>
    %107 = vector.broadcast %106 : vector<32x1xf32> to vector<32x256xf32>
    %108 = arith.subf %98, %107 : vector<32x256xf32>
    %109 = arith.mulf %108, %108 : vector<32x256xf32>
    %cst_51 = arith.constant dense<0.000000e+00> : vector<16x256xf32>
    %110 = tpu.matmul %4, %109, %cst_51 {dimension_numbers = #tpu.dot_dimension_numbers<[1], [0], [0], [1], [0, 0, 1, 1], [], []>} : vector<16x32xf32>, vector<32x256xf32>, vector<16x256xf32> -> vector<16x256xf32>
    %cst_52 = arith.constant dense<0.000000e+00> : vector<16xf32>
    %111 = vector.multi_reduction <add>, %110, %cst_52 [1] : vector<16x256xf32> to vector<16xf32>
    %112 = vector.shape_cast %111 : vector<16xf32> to vector<16x1xf32>
    %cst_53 = arith.constant 0.001953125 : f32
    %113 = vector.broadcast %cst_53 : f32 to vector<16x1xf32>
    %114 = arith.mulf %112, %113 : vector<16x1xf32>
    %cst_54 = arith.constant 9.99999974E-6 : f32
    %115 = vector.broadcast %cst_54 : f32 to vector<16x1xf32>
    %116 = arith.addf %114, %115 : vector<16x1xf32>
    %117 = math.rsqrt %116 : vector<16x1xf32>
    %cst_55 = arith.constant dense<0.000000e+00> : vector<32x1xf32>
    %118 = tpu.matmul %3, %117, %cst_55 {dimension_numbers = #tpu.dot_dimension_numbers<[1], [0], [0], [1], [0, 0, 1, 1], [], []>} : vector<32x16xf32>, vector<16x1xf32>, vector<32x1xf32> -> vector<32x1xf32>
    %119 = arith.mulf %118, %99 : vector<32x1xf32>
    %120 = vector.broadcast %119 : vector<32x1xf32> to vector<32x256xf32>
    %121 = arith.mulf %108, %120 : vector<32x256xf32>
    %122 = vector.broadcast %100 : vector<32x1xf32> to vector<32x256xf32>
    %123 = arith.addf %121, %122 : vector<32x256xf32>
    %cst_56 = arith.constant 0.000000e+00 : f32
    %124 = vector.broadcast %cst_56 : f32 to vector<32x256xf32>
    %125 = arith.maximumf %123, %124 : vector<32x256xf32>
    %c0_57 = arith.constant 0 : index
    %c0_58 = arith.constant 0 : index
    %126 = vector.load %arg5[%c0_57, %c0_58] : memref<32x32xf32, #tpu.memory_space<vmem>>, vector<32x32xf32>
    %cst_59 = arith.constant dense<0.000000e+00> : vector<32x256xf32>
    %127 = tpu.matmul %126, %125, %cst_59 {dimension_numbers = #tpu.dot_dimension_numbers<[1], [0], [0], [1], [0, 0, 1, 1], [], []>} : vector<32x32xf32>, vector<32x256xf32>, vector<32x256xf32> -> vector<32x256xf32>
    %c0_60 = arith.constant 0 : index
    %c0_61 = arith.constant 0 : index
    %128 = vector.load %arg11[%c0_60, %c0_61] : memref<32x1xf32, #tpu.memory_space<vmem>>, vector<32x1xf32>
    %c0_62 = arith.constant 0 : index
    %c0_63 = arith.constant 0 : index
    %129 = vector.load %arg12[%c0_62, %c0_63] : memref<32x1xf32, #tpu.memory_space<vmem>>, vector<32x1xf32>
    %cst_64 = arith.constant dense<0.000000e+00> : vector<16x256xf32>
    %130 = tpu.matmul %6, %127, %cst_64 {dimension_numbers = #tpu.dot_dimension_numbers<[1], [0], [0], [1], [0, 0, 1, 1], [], []>} : vector<16x32xf32>, vector<32x256xf32>, vector<16x256xf32> -> vector<16x256xf32>
    %cst_65 = arith.constant dense<0.000000e+00> : vector<16xf32>
    %131 = vector.multi_reduction <add>, %130, %cst_65 [1] : vector<16x256xf32> to vector<16xf32>
    %132 = vector.shape_cast %131 : vector<16xf32> to vector<16x1xf32>
    %cst_66 = arith.constant dense<0.000000e+00> : vector<32x1xf32>
    %133 = tpu.matmul %5, %132, %cst_66 {dimension_numbers = #tpu.dot_dimension_numbers<[1], [0], [0], [1], [0, 0, 1, 1], [], []>} : vector<32x16xf32>, vector<16x1xf32>, vector<32x1xf32> -> vector<32x1xf32>
    %cst_67 = arith.constant 0.001953125 : f32
    %134 = vector.broadcast %cst_67 : f32 to vector<32x1xf32>
    %135 = arith.mulf %133, %134 : vector<32x1xf32>
    %136 = vector.broadcast %135 : vector<32x1xf32> to vector<32x256xf32>
    %137 = arith.subf %127, %136 : vector<32x256xf32>
    %138 = arith.mulf %137, %137 : vector<32x256xf32>
    %cst_68 = arith.constant dense<0.000000e+00> : vector<16x256xf32>
    %139 = tpu.matmul %6, %138, %cst_68 {dimension_numbers = #tpu.dot_dimension_numbers<[1], [0], [0], [1], [0, 0, 1, 1], [], []>} : vector<16x32xf32>, vector<32x256xf32>, vector<16x256xf32> -> vector<16x256xf32>
    %cst_69 = arith.constant dense<0.000000e+00> : vector<16xf32>
    %140 = vector.multi_reduction <add>, %139, %cst_69 [1] : vector<16x256xf32> to vector<16xf32>
    %141 = vector.shape_cast %140 : vector<16xf32> to vector<16x1xf32>
    %cst_70 = arith.constant 0.001953125 : f32
    %142 = vector.broadcast %cst_70 : f32 to vector<16x1xf32>
    %143 = arith.mulf %141, %142 : vector<16x1xf32>
    %cst_71 = arith.constant 9.99999974E-6 : f32
    %144 = vector.broadcast %cst_71 : f32 to vector<16x1xf32>
    %145 = arith.addf %143, %144 : vector<16x1xf32>
    %146 = math.rsqrt %145 : vector<16x1xf32>
    %cst_72 = arith.constant dense<0.000000e+00> : vector<32x1xf32>
    %147 = tpu.matmul %5, %146, %cst_72 {dimension_numbers = #tpu.dot_dimension_numbers<[1], [0], [0], [1], [0, 0, 1, 1], [], []>} : vector<32x16xf32>, vector<16x1xf32>, vector<32x1xf32> -> vector<32x1xf32>
    %148 = arith.mulf %147, %128 : vector<32x1xf32>
    %149 = vector.broadcast %148 : vector<32x1xf32> to vector<32x256xf32>
    %150 = arith.mulf %137, %149 : vector<32x256xf32>
    %151 = vector.broadcast %129 : vector<32x1xf32> to vector<32x256xf32>
    %152 = arith.addf %150, %151 : vector<32x256xf32>
    %c0_73 = arith.constant 0 : index
    %c0_74 = arith.constant 0 : index
    %153 = vector.load %arg6[%c0_73, %c0_74] : memref<32x4xf32, #tpu.memory_space<vmem>>, vector<32x4xf32>
    %cst_75 = arith.constant dense<0.000000e+00> : vector<32x256xf32>
    %154 = tpu.matmul %153, %1, %cst_75 {dimension_numbers = #tpu.dot_dimension_numbers<[1], [0], [0], [1], [0, 0, 1, 1], [], []>} : vector<32x4xf32>, vector<4x256xf32>, vector<32x256xf32> -> vector<32x256xf32>
    %c0_76 = arith.constant 0 : index
    %c0_77 = arith.constant 0 : index
    %155 = vector.load %arg13[%c0_76, %c0_77] : memref<32x1xf32, #tpu.memory_space<vmem>>, vector<32x1xf32>
    %c0_78 = arith.constant 0 : index
    %c0_79 = arith.constant 0 : index
    %156 = vector.load %arg14[%c0_78, %c0_79] : memref<32x1xf32, #tpu.memory_space<vmem>>, vector<32x1xf32>
    %cst_80 = arith.constant dense<0.000000e+00> : vector<16x256xf32>
    %157 = tpu.matmul %6, %154, %cst_80 {dimension_numbers = #tpu.dot_dimension_numbers<[1], [0], [0], [1], [0, 0, 1, 1], [], []>} : vector<16x32xf32>, vector<32x256xf32>, vector<16x256xf32> -> vector<16x256xf32>
    %cst_81 = arith.constant dense<0.000000e+00> : vector<16xf32>
    %158 = vector.multi_reduction <add>, %157, %cst_81 [1] : vector<16x256xf32> to vector<16xf32>
    %159 = vector.shape_cast %158 : vector<16xf32> to vector<16x1xf32>
    %cst_82 = arith.constant dense<0.000000e+00> : vector<32x1xf32>
    %160 = tpu.matmul %5, %159, %cst_82 {dimension_numbers = #tpu.dot_dimension_numbers<[1], [0], [0], [1], [0, 0, 1, 1], [], []>} : vector<32x16xf32>, vector<16x1xf32>, vector<32x1xf32> -> vector<32x1xf32>
    %cst_83 = arith.constant 0.001953125 : f32
    %161 = vector.broadcast %cst_83 : f32 to vector<32x1xf32>
    %162 = arith.mulf %160, %161 : vector<32x1xf32>
    %163 = vector.broadcast %162 : vector<32x1xf32> to vector<32x256xf32>
    %164 = arith.subf %154, %163 : vector<32x256xf32>
    %165 = arith.mulf %164, %164 : vector<32x256xf32>
    %cst_84 = arith.constant dense<0.000000e+00> : vector<16x256xf32>
    %166 = tpu.matmul %6, %165, %cst_84 {dimension_numbers = #tpu.dot_dimension_numbers<[1], [0], [0], [1], [0, 0, 1, 1], [], []>} : vector<16x32xf32>, vector<32x256xf32>, vector<16x256xf32> -> vector<16x256xf32>
    %cst_85 = arith.constant dense<0.000000e+00> : vector<16xf32>
    %167 = vector.multi_reduction <add>, %166, %cst_85 [1] : vector<16x256xf32> to vector<16xf32>
    %168 = vector.shape_cast %167 : vector<16xf32> to vector<16x1xf32>
    %cst_86 = arith.constant 0.001953125 : f32
    %169 = vector.broadcast %cst_86 : f32 to vector<16x1xf32>
    %170 = arith.mulf %168, %169 : vector<16x1xf32>
    %cst_87 = arith.constant 9.99999974E-6 : f32
    %171 = vector.broadcast %cst_87 : f32 to vector<16x1xf32>
    %172 = arith.addf %170, %171 : vector<16x1xf32>
    %173 = math.rsqrt %172 : vector<16x1xf32>
    %cst_88 = arith.constant dense<0.000000e+00> : vector<32x1xf32>
    %174 = tpu.matmul %5, %173, %cst_88 {dimension_numbers = #tpu.dot_dimension_numbers<[1], [0], [0], [1], [0, 0, 1, 1], [], []>} : vector<32x16xf32>, vector<16x1xf32>, vector<32x1xf32> -> vector<32x1xf32>
    %175 = arith.mulf %174, %155 : vector<32x1xf32>
    %176 = vector.broadcast %175 : vector<32x1xf32> to vector<32x256xf32>
    %177 = arith.mulf %164, %176 : vector<32x256xf32>
    %178 = vector.broadcast %156 : vector<32x1xf32> to vector<32x256xf32>
    %179 = arith.addf %177, %178 : vector<32x256xf32>
    %180 = arith.addf %152, %179 : vector<32x256xf32>
    %c0_89 = arith.constant 0 : index
    %c0_90 = arith.constant 0 : index
    %c0_91 = arith.constant 0 : index
    %181 = vector.load %arg19[%c0_89, %c0_90, %c0_91] : memref<1x32x256xf32, #tpu.memory_space<vmem>>, vector<1x32x256xf32>
    %182 = vector.shape_cast %181 : vector<1x32x256xf32> to vector<32x256xf32>
    %183 = vector.shape_cast %180 : vector<32x256xf32> to vector<1x32x256xf32>
    tpu.vector_store %arg19[%c0_89, %c0_90, %c0_91], %183 {strides = array<i32>} : memref<1x32x256xf32, #tpu.memory_space<vmem>>, vector<1x32x256xf32>,
    return
  }
  func.func @transform_0(%arg0: i32) -> (i32, i32, i32) {
    %c0_i32 = arith.constant 0 : i32
    %c0_i32_0 = arith.constant 0 : i32
    %c0_i32_1 = arith.constant 0 : i32
    return %arg0, %c0_i32, %c0_i32_0 : i32, i32, i32
  }
  func.func @transform_1(%arg0: i32) -> (i32, i32) {
    %c0_i32 = arith.constant 0 : i32
    %c0_i32_0 = arith.constant 0 : i32
    %c0_i32_1 = arith.constant 0 : i32
    return %c0_i32, %c0_i32_0 : i32, i32
  }
  func.func @transform_2(%arg0: i32) -> (i32, i32) {
    %c0_i32 = arith.constant 0 : i32
    %c0_i32_0 = arith.constant 0 : i32
    %c0_i32_1 = arith.constant 0 : i32
    return %c0_i32, %c0_i32_0 : i32, i32
  }
  func.func @transform_3(%arg0: i32) -> (i32, i32) {
    %c0_i32 = arith.constant 0 : i32
    %c0_i32_0 = arith.constant 0 : i32
    %c0_i32_1 = arith.constant 0 : i32
    return %c0_i32, %c0_i32_0 : i32, i32
  }
  func.func @transform_4(%arg0: i32) -> (i32, i32) {
    %c0_i32 = arith.constant 0 : i32
    %c0_i32_0 = arith.constant 0 : i32
    %c0_i32_1 = arith.constant 0 : i32
    return %c0_i32, %c0_i32_0 : i32, i32
  }
  func.func @transform_5(%arg0: i32) -> (i32, i32) {
    %c0_i32 = arith.constant 0 : i32
    %c0_i32_0 = arith.constant 0 : i32
    %c0_i32_1 = arith.constant 0 : i32
    return %c0_i32, %c0_i32_0 : i32, i32
  }
  func.func @transform_6(%arg0: i32) -> (i32, i32) {
    %c0_i32 = arith.constant 0 : i32
    %c0_i32_0 = arith.constant 0 : i32
    %c0_i32_1 = arith.constant 0 : i32
    return %c0_i32, %c0_i32_0 : i32, i32
  }
  func.func @transform_7(%arg0: i32) -> (i32, i32) {
    %c0_i32 = arith.constant 0 : i32
    %c0_i32_0 = arith.constant 0 : i32
    %c0_i32_1 = arith.constant 0 : i32
    return %c0_i32, %c0_i32_0 : i32, i32
  }
  func.func @transform_8(%arg0: i32) -> (i32, i32) {
    %c0_i32 = arith.constant 0 : i32
    %c0_i32_0 = arith.constant 0 : i32
    %c0_i32_1 = arith.constant 0 : i32
    return %c0_i32, %c0_i32_0 : i32, i32
  }
  func.func @transform_9(%arg0: i32) -> (i32, i32) {
    %c0_i32 = arith.constant 0 : i32
    %c0_i32_0 = arith.constant 0 : i32
    %c0_i32_1 = arith.constant 0 : i32
    return %c0_i32, %c0_i32_0 : i32, i32
  }
  func.func @transform_10(%arg0: i32) -> (i32, i32) {
    %c0_i32 = arith.constant 0 : i32
    %c0_i32_0 = arith.constant 0 : i32
    %c0_i32_1 = arith.constant 0 : i32
    return %c0_i32, %c0_i32_0 : i32, i32
  }
  func.func @transform_11(%arg0: i32) -> (i32, i32) {
    %c0_i32 = arith.constant 0 : i32
    %c0_i32_0 = arith.constant 0 : i32
    %c0_i32_1 = arith.constant 0 : i32
    return %c0_i32, %c0_i32_0 : i32, i32
  }
  func.func @transform_12(%arg0: i32) -> (i32, i32) {
    %c0_i32 = arith.constant 0 : i32
    %c0_i32_0 = arith.constant 0 : i32
    %c0_i32_1 = arith.constant 0 : i32
    return %c0_i32, %c0_i32_0 : i32, i32
  }
  func.func @transform_13(%arg0: i32) -> (i32, i32) {
    %c0_i32 = arith.constant 0 : i32
    %c0_i32_0 = arith.constant 0 : i32
    %c0_i32_1 = arith.constant 0 : i32
    return %c0_i32, %c0_i32_0 : i32, i32
  }
  func.func @transform_14(%arg0: i32) -> (i32, i32) {
    %c0_i32 = arith.constant 0 : i32
    %c0_i32_0 = arith.constant 0 : i32
    %c0_i32_1 = arith.constant 0 : i32
    return %c0_i32, %c0_i32_0 : i32, i32
  }
  func.func @transform_15(%arg0: i32) -> (i32, i32) {
    %c0_i32 = arith.constant 0 : i32
    %c0_i32_0 = arith.constant 0 : i32
    %c0_i32_1 = arith.constant 0 : i32
    return %c0_i32, %c0_i32_0 : i32, i32
  }
  func.func @transform_16(%arg0: i32) -> (i32, i32) {
    %c0_i32 = arith.constant 0 : i32
    %c0_i32_0 = arith.constant 0 : i32
    %c0_i32_1 = arith.constant 0 : i32
    return %c0_i32, %c0_i32_0 : i32, i32
  }
  func.func @transform_17(%arg0: i32) -> (i32, i32) {
    %c0_i32 = arith.constant 0 : i32
    %c0_i32_0 = arith.constant 0 : i32
    %c0_i32_1 = arith.constant 0 : i32
    return %c0_i32, %c0_i32_0 : i32, i32
  }
  func.func @transform_18(%arg0: i32) -> (i32, i32, i32) {
    %c0_i32 = arith.constant 0 : i32
    %c0_i32_0 = arith.constant 0 : i32
    %c0_i32_1 = arith.constant 0 : i32
    return %arg0, %c0_i32, %c0_i32_0 : i32, i32, i32
  }
}

</mosaic_0001>

<llo_original>
// kernel: tpu_custom_call.1
$region0: #{tpu_custom_call.1}
  #allocation0 [shape = 'u32[]', space=smem, size = 0x4, offset = 0x4, fixed_abs, tag = 'smem constant byte address 0x4 - core index']
  #allocation1 [shape = 'u32[144,128]{1,0:T(1,128)}', space=vmem, size = 0x12000, scoped, tag = 'internal scratch']
  #allocation2 [shape = 'f32[288,256]{1,0:T(8,128)}', space=vmem, size = 0x48000, scoped, tag = 'scratch operand']
  %s0 = inlined_call_operand.vmem [shape: f32[2,4,256], index: 0, kind: input, shape index: {}]
  %s1 = inlined_call_operand.vmem [shape: f32[9,256], index: 1, kind: input, shape index: {}]
  %s2 = inlined_call_operand.vmem [shape: f32[32,4], index: 2, kind: input, shape index: {}]
  %s3 = inlined_call_operand.vmem [shape: f32[32,288], index: 3, kind: input, shape index: {}]
  %s4 = inlined_call_operand.vmem [shape: f32[32,32], index: 4, kind: input, shape index: {}]
  %s5 = inlined_call_operand.vmem [shape: f32[32,4], index: 5, kind: input, shape index: {}]
  %s6 = inlined_call_operand.vmem [shape: f32[32,1], index: 6, kind: input, shape index: {}]
  %s7 = inlined_call_operand.vmem [shape: f32[32,1], index: 7, kind: input, shape index: {}]
  %s8 = inlined_call_operand.vmem [shape: f32[32,1], index: 8, kind: input, shape index: {}]
  %s9 = inlined_call_operand.vmem [shape: f32[32,1], index: 9, kind: input, shape index: {}]
  %s10 = inlined_call_operand.vmem [shape: f32[32,1], index: 10, kind: input, shape index: {}]
  %s11 = inlined_call_operand.vmem [shape: f32[32,1], index: 11, kind: input, shape index: {}]
  %s12 = inlined_call_operand.vmem [shape: f32[32,1], index: 12, kind: input, shape index: {}]
  %s13 = inlined_call_operand.vmem [shape: f32[32,1], index: 13, kind: input, shape index: {}]
  %s14 = inlined_call_operand.vmem [shape: f32[32,16], index: 14, kind: input, shape index: {}]
  %s15 = inlined_call_operand.vmem [shape: f32[16,32], index: 15, kind: input, shape index: {}]
  %s16 = inlined_call_operand.vmem [shape: f32[32,16], index: 16, kind: input, shape index: {}]
  %s17 = inlined_call_operand.vmem [shape: f32[16,32], index: 17, kind: input, shape index: {}]
  %s18 = inlined_call_operand.hbm [shape: f32[2,32,256], index: 18, kind: output, shape index: {}]
  %s19 = sld [smem:[#allocation0]]
  $region105: #{tpu_custom_call.1} parent=0
    _
  %s21 = ssub.s32 1, %s19
  %s22 = scalar_select 0, %s21, %s19
  $region1: #{tpu_custom_call.1} parent=0
    #allocation3 [shape = 'u8[65536]{0}', space=vmem, size = 0x10000, scoped, tag = 'output window, operand 0']
    #allocation4 [shape = 's32[2]{0}', space=sflag, size = 0x8, scoped, tag = 'scoped memory for tpu_custom_call.1']
    %23 = vsyncpa [#allocation4], 0
    %s24 = scalar_lea.sflag [#allocation4], 1
    %25 = vsyncpa %s24, 0
    loop: start=0, step=1, limit=4
    $region2: #{tpu_custom_call.1} parent=1 // loop_pre_header
      _
    $region3: #{tpu_custom_call.1} parent=1 // loop_header
      %s27 = sphi 0, %s31
      %p28 = scmp.ge.s32.totalorder %s27, 4
      %s37 = sphi 0, %s39
      %s40 = sphi 0, %s37
      %s41 = sphi 0, %s40
      %s57 = sphi 0, %s41
      %s61 = sphi 0, %s61
      %s63 = sphi 0, %s61
      %s64 = sphi 0, %s63
      %s78 = sphi 0, %s64
      %s82 = sphi 0, %s82
      %s84 = sphi 0, %s82
      %s85 = sphi 0, %s84
      %s99 = sphi 0, %s85
      %s103 = sphi 0, %s103
      %s105 = sphi 0, %s103
      %s106 = sphi 0, %s105
      %s120 = sphi 0, %s106
      %s124 = sphi 0, %s124
      %s126 = sphi 0, %s124
      %s127 = sphi 0, %s126
      %s141 = sphi 0, %s127
      %s145 = sphi 0, %s145
      %s147 = sphi 0, %s145
      %s148 = sphi 0, %s147
      %s162 = sphi 0, %s148
      %s166 = sphi 0, %s166
      %s168 = sphi 0, %s166
      %s169 = sphi 0, %s168
      %s183 = sphi 0, %s169
      %s187 = sphi 0, %s187
      %s189 = sphi 0, %s187
      %s190 = sphi 0, %s189
      %s204 = sphi 0, %s190
      %s208 = sphi 0, %s208
      %s210 = sphi 0, %s208
      %s211 = sphi 0, %s210
      %s225 = sphi 0, %s211
      %s229 = sphi 0, %s229
      %s231 = sphi 0, %s229
      %s232 = sphi 0, %s231
      %s246 = sphi 0, %s232
      %s250 = sphi 0, %s250
      %s252 = sphi 0, %s250
      %s253 = sphi 0, %s252
      %s267 = sphi 0, %s253
      %s271 = sphi 0, %s271
      %s273 = sphi 0, %s271
      %s274 = sphi 0, %s273
      %s288 = sphi 0, %s274
      %s292 = sphi 0, %s292
      %s294 = sphi 0, %s292
      %s295 = sphi 0, %s294
      %s309 = sphi 0, %s295
      %s313 = sphi 0, %s313
      %s315 = sphi 0, %s313
      %s316 = sphi 0, %s315
      %s330 = sphi 0, %s316
      %s334 = sphi 0, %s334
      %s336 = sphi 0, %s334
      %s337 = sphi 0, %s336
      %s351 = sphi 0, %s337
      %s355 = sphi 0, %s355
      %s357 = sphi 0, %s355
      %s358 = sphi 0, %s357
      %s372 = sphi 0, %s358
      %s376 = sphi 0, %s376
      %s378 = sphi 0, %s376
      %s379 = sphi 0, %s378
      %s393 = sphi 0, %s379
      %s397 = sphi 0, %s397
      %s399 = sphi 0, %s397
      %s400 = sphi 0, %s399
      %s414 = sphi 0, %s400
      %s420 = sphi 0, %s422
      %s423 = sphi 0, %s420
      %s424 = sphi 0, %s423
      %s440 = sphi 0, %s424
    $region4: #{tpu_custom_call.1} parent=1 // loop_header_branch
      %30 = sbr.rel (%p28) target = $region8
    $region5: #{tpu_custom_call.1} parent=1 // loop_body
      %s32 = ssub.s32 %s27, 1
      %s33 = ssub.s32 %s27, 2
      %s34 = sadd.s32 %s27, 1
      %s35 = ssub.s32 %s27, %s34
      %p36 = scmp.eq.s32.totalorder %s35, 0
      %s38 = sadd.s32 %s37, 1
      %s39 = scalar_select %p36, %s37, %s38
      %p42 = pneg %p36
      %p43 = scmp.eq.s32.totalorder %s27, 1
      %p44 = por %p42, %p43
      %p45 = scmp.ne.s32.totalorder %s37, %s40
      %p46 = scmp.eq.s32.totalorder %s27, 0
      %p47 = por %p45, %p46
      %p48 = scmp.ne.s32.totalorder %s37, %s40
      %p49 = scmp.eq.s32.totalorder %s32, 1
      %p50 = por %p48, %p49
      %p51 = scmp.ne.s32.totalorder %s40, %s41
      %p52 = scmp.eq.s32.totalorder %s32, 0
      %p53 = por %p51, %p52
      %p54 = scmp.ne.s32.totalorder %s40, %s41
      %p55 = scmp.eq.s32.totalorder %s33, 1
      %p56 = por %p54, %p55
      %p58 = scmp.ne.s32.totalorder %s41, %s57
      %p59 = scmp.eq.s32.totalorder %s33, 0
      %p60 = por %p58, %p59
      %s62 = sadd.s32 %s61, 1
      %p65 = scmp.eq.s32.totalorder %s27, 1
      %p66 = scmp.ne.s32.totalorder %s61, %s63
      %p67 = scmp.eq.s32.totalorder %s27, 0
      %p68 = por %p66, %p67
      %p69 = scmp.ne.s32.totalorder %s61, %s63
      %p70 = scmp.eq.s32.totalorder %s32, 1
      %p71 = por %p69, %p70
      %p72 = scmp.ne.s32.totalorder %s63, %s64
      %p73 = scmp.eq.s32.totalorder %s32, 0
      %p74 = por %p72, %p73
      %p75 = scmp.ne.s32.totalorder %s63, %s64
      %p76 = scmp.eq.s32.totalorder %s33, 1
      %p77 = por %p75, %p76
      %p79 = scmp.ne.s32.totalorder %s64, %s78
      %p80 = scmp.eq.s32.totalorder %s33, 0
      %p81 = por %p79, %p80
      %s83 = sadd.s32 %s82, 1
      %p86 = scmp.eq.s32.totalorder %s27, 1
      %p87 = scmp.ne.s32.totalorder %s82, %s84
      %p88 = scmp.eq.s32.totalorder %s27, 0
      %p89 = por %p87, %p88
      %p90 = scmp.ne.s32.totalorder %s82, %s84
      %p91 = scmp.eq.s32.totalorder %s32, 1
      %p92 = por %p90, %p91
      %p93 = scmp.ne.s32.totalorder %s84, %s85
      %p94 = scmp.eq.s32.totalorder %s32, 0
      %p95 = por %p93, %p94
      %p96 = scmp.ne.s32.totalorder %s84, %s85
      %p97 = scmp.eq.s32.totalorder %s33, 1
      %p98 = por %p96, %p97
      %p100 = scmp.ne.s32.totalorder %s85, %s99
      %p101 = scmp.eq.s32.totalorder %s33, 0
      %p102 = por %p100, %p101
      %s104 = sadd.s32 %s103, 1
      %p107 = scmp.eq.s32.totalorder %s27, 1
      %p108 = scmp.ne.s32.totalorder %s103, %s105
      %p109 = scmp.eq.s32.totalorder %s27, 0
      %p110 = por %p108, %p109
      %p111 = scmp.ne.s32.totalorder %s103, %s105
      %p112 = scmp.eq.s32.totalorder %s32, 1
      %p113 = por %p111, %p112
      %p114 = scmp.ne.s32.totalorder %s105, %s106
      %p115 = scmp.eq.s32.totalorder %s32, 0
      %p116 = por %p114, %p115
      %p117 = scmp.ne.s32.totalorder %s105, %s106
      %p118 = scmp.eq.s32.totalorder %s33, 1
      %p119 = por %p117, %p118
      %p121 = scmp.ne.s32.totalorder %s106, %s120
      %p122 = scmp.eq.s32.totalorder %s33, 0
      %p123 = por %p121, %p122
      %s125 = sadd.s32 %s124, 1
      %p128 = scmp.eq.s32.totalorder %s27, 1
      %p129 = scmp.ne.s32.totalorder %s124, %s126
      %p130 = scmp.eq.s32.totalorder %s27, 0
      %p131 = por %p129, %p130
      %p132 = scmp.ne.s32.totalorder %s124, %s126
      %p133 = scmp.eq.s32.totalorder %s32, 1
      %p134 = por %p132, %p133
      %p135 = scmp.ne.s32.totalorder %s126, %s127
      %p136 = scmp.eq.s32.totalorder %s32, 0
      %p137 = por %p135, %p136
      %p138 = scmp.ne.s32.totalorder %s126, %s127
      %p139 = scmp.eq.s32.totalorder %s33, 1
      %p140 = por %p138, %p139
      %p142 = scmp.ne.s32.totalorder %s127, %s141
      %p143 = scmp.eq.s32.totalorder %s33, 0
      %p144 = por %p142, %p143
      %s146 = sadd.s32 %s145, 1
      %p149 = scmp.eq.s32.totalorder %s27, 1
      %p150 = scmp.ne.s32.totalorder %s145, %s147
      %p151 = scmp.eq.s32.totalorder %s27, 0
      %p152 = por %p150, %p151
      %p153 = scmp.ne.s32.totalorder %s145, %s147
      %p154 = scmp.eq.s32.totalorder %s32, 1
      %p155 = por %p153, %p154
      %p156 = scmp.ne.s32.totalorder %s147, %s148
      %p157 = scmp.eq.s32.totalorder %s32, 0
      %p158 = por %p156, %p157
      %p159 = scmp.ne.s32.totalorder %s147, %s148
      %p160 = scmp.eq.s32.totalorder %s33, 1
      %p161 = por %p159, %p160
      %p163 = scmp.ne.s32.totalorder %s148, %s162
      %p164 = scmp.eq.s32.totalorder %s33, 0
      %p165 = por %p163, %p164
      %s167 = sadd.s32 %s166, 1
      %p170 = scmp.eq.s32.totalorder %s27, 1
      %p171 = scmp.ne.s32.totalorder %s166, %s168
      %p172 = scmp.eq.s32.totalorder %s27, 0
      %p173 = por %p171, %p172
      %p174 = scmp.ne.s32.totalorder %s166, %s168
      %p175 = scmp.eq.s32.totalorder %s32, 1
      %p176 = por %p174, %p175
      %p177 = scmp.ne.s32.totalorder %s168, %s169
      %p178 = scmp.eq.s32.totalorder %s32, 0
      %p179 = por %p177, %p178
      %p180 = scmp.ne.s32.totalorder %s168, %s169
      %p181 = scmp.eq.s32.totalorder %s33, 1
      %p182 = por %p180, %p181
      %p184 = scmp.ne.s32.totalorder %s169, %s183
      %p185 = scmp.eq.s32.totalorder %s33, 0
      %p186 = por %p184, %p185
      %s188 = sadd.s32 %s187, 1
      %p191 = scmp.eq.s32.totalorder %s27, 1
      %p192 = scmp.ne.s32.totalorder %s187, %s189
      %p193 = scmp.eq.s32.totalorder %s27, 0
      %p194 = por %p192, %p193
      %p195 = scmp.ne.s32.totalorder %s187, %s189
      %p196 = scmp.eq.s32.totalorder %s32, 1
      %p197 = por %p195, %p196
      %p198 = scmp.ne.s32.totalorder %s189, %s190
      %p199 = scmp.eq.s32.totalorder %s32, 0
      %p200 = por %p198, %p199
      %p201 = scmp.ne.s32.totalorder %s189, %s190
      %p202 = scmp.eq.s32.totalorder %s33, 1
      %p203 = por %p201, %p202
      %p205 = scmp.ne.s32.totalorder %s190, %s204
      %p206 = scmp.eq.s32.totalorder %s33, 0
      %p207 = por %p205, %p206
      %s209 = sadd.s32 %s208, 1
      %p212 = scmp.eq.s32.totalorder %s27, 1
      %p213 = scmp.ne.s32.totalorder %s208, %s210
      %p214 = scmp.eq.s32.totalorder %s27, 0
      %p215 = por %p213, %p214
      %p216 = scmp.ne.s32.totalorder %s208, %s210
      %p217 = scmp.eq.s32.totalorder %s32, 1
      %p218 = por %p216, %p217
      %p219 = scmp.ne.s32.totalorder %s210, %s211
      %p220 = scmp.eq.s32.totalorder %s32, 0
      %p221 = por %p219, %p220
      %p222 = scmp.ne.s32.totalorder %s210, %s211
      %p223 = scmp.eq.s32.totalorder %s33, 1
      %p224 = por %p222, %p223
      %p226 = scmp.ne.s32.totalorder %s211, %s225
      %p227 = scmp.eq.s32.totalorder %s33, 0
      %p228 = por %p226, %p227
      %s230 = sadd.s32 %s229, 1
      %p233 = scmp.eq.s32.totalorder %s27, 1
      %p234 = scmp.ne.s32.totalorder %s229, %s231
      %p235 = scmp.eq.s32.totalorder %s27, 0
      %p236 = por %p234, %p235
      %p237 = scmp.ne.s32.totalorder %s229, %s231
      %p238 = scmp.eq.s32.totalorder %s32, 1
      %p239 = por %p237, %p238
      %p240 = scmp.ne.s32.totalorder %s231, %s232
      %p241 = scmp.eq.s32.totalorder %s32, 0
      %p242 = por %p240, %p241
      %p243 = scmp.ne.s32.totalorder %s231, %s232
      %p244 = scmp.eq.s32.totalorder %s33, 1
      %p245 = por %p243, %p244
      %p247 = scmp.ne.s32.totalorder %s232, %s246
      %p248 = scmp.eq.s32.totalorder %s33, 0
      %p249 = por %p247, %p248
      %s251 = sadd.s32 %s250, 1
      %p254 = scmp.eq.s32.totalorder %s27, 1
      %p255 = scmp.ne.s32.totalorder %s250, %s252
      %p256 = scmp.eq.s32.totalorder %s27, 0
      %p257 = por %p255, %p256
      %p258 = scmp.ne.s32.totalorder %s250, %s252
      %p259 = scmp.eq.s32.totalorder %s32, 1
      %p260 = por %p258, %p259
      %p261 = scmp.ne.s32.totalorder %s252, %s253
      %p262 = scmp.eq.s32.totalorder %s32, 0
      %p263 = por %p261, %p262
      %p264 = scmp.ne.s32.totalorder %s252, %s253
      %p265 = scmp.eq.s32.totalorder %s33, 1
      %p266 = por %p264, %p265
      %p268 = scmp.ne.s32.totalorder %s253, %s267
      %p269 = scmp.eq.s32.totalorder %s33, 0
      %p270 = por %p268, %p269
      %s272 = sadd.s32 %s271, 1
      %p275 = scmp.eq.s32.totalorder %s27, 1
      %p276 = scmp.ne.s32.totalorder %s271, %s273
      %p277 = scmp.eq.s32.totalorder %s27, 0
      %p278 = por %p276, %p277
      %p279 = scmp.ne.s32.totalorder %s271, %s273
      %p280 = scmp.eq.s32.totalorder %s32, 1
      %p281 = por %p279, %p280
      %p282 = scmp.ne.s32.totalorder %s273, %s274
      %p283 = scmp.eq.s32.totalorder %s32, 0
      %p284 = por %p282, %p283
      %p285 = scmp.ne.s32.totalorder %s273, %s274
      %p286 = scmp.eq.s32.totalorder %s33, 1
      %p287 = por %p285, %p286
      %p289 = scmp.ne.s32.totalorder %s274, %s288
      %p290 = scmp.eq.s32.totalorder %s33, 0
      %p291 = por %p289, %p290
      %s293 = sadd.s32 %s292, 1
      %p296 = scmp.eq.s32.totalorder %s27, 1
      %p297 = scmp.ne.s32.totalorder %s292, %s294
      %p298 = scmp.eq.s32.totalorder %s27, 0
      %p299 = por %p297, %p298
      %p300 = scmp.ne.s32.totalorder %s292, %s294
      %p301 = scmp.eq.s32.totalorder %s32, 1
      %p302 = por %p300, %p301
      %p303 = scmp.ne.s32.totalorder %s294, %s295
      %p304 = scmp.eq.s32.totalorder %s32, 0
      %p305 = por %p303, %p304
      %p306 = scmp.ne.s32.totalorder %s294, %s295
      %p307 = scmp.eq.s32.totalorder %s33, 1
      %p308 = por %p306, %p307
      %p310 = scmp.ne.s32.totalorder %s295, %s309
      %p311 = scmp.eq.s32.totalorder %s33, 0
      %p312 = por %p310, %p311
      %s314 = sadd.s32 %s313, 1
      %p317 = scmp.eq.s32.totalorder %s27, 1
      %p318 = scmp.ne.s32.totalorder %s313, %s315
      %p319 = scmp.eq.s32.totalorder %s27, 0
      %p320 = por %p318, %p319
      %p321 = scmp.ne.s32.totalorder %s313, %s315
      %p322 = scmp.eq.s32.totalorder %s32, 1
      %p323 = por %p321, %p322
      %p324 = scmp.ne.s32.totalorder %s315, %s316
      %p325 = scmp.eq.s32.totalorder %s32, 0
      %p326 = por %p324, %p325
      %p327 = scmp.ne.s32.totalorder %s315, %s316
      %p328 = scmp.eq.s32.totalorder %s33, 1
      %p329 = por %p327, %p328
      %p331 = scmp.ne.s32.totalorder %s316, %s330
      %p332 = scmp.eq.s32.totalorder %s33, 0
      %p333 = por %p331, %p332
      %s335 = sadd.s32 %s334, 1
      %p338 = scmp.eq.s32.totalorder %s27, 1
      %p339 = scmp.ne.s32.totalorder %s334, %s336
      %p340 = scmp.eq.s32.totalorder %s27, 0
      %p341 = por %p339, %p340
      %p342 = scmp.ne.s32.totalorder %s334, %s336
      %p343 = scmp.eq.s32.totalorder %s32, 1
      %p344 = por %p342, %p343
      %p345 = scmp.ne.s32.totalorder %s336, %s337
      %p346 = scmp.eq.s32.totalorder %s32, 0
      %p347 = por %p345, %p346
      %p348 = scmp.ne.s32.totalorder %s336, %s337
      %p349 = scmp.eq.s32.totalorder %s33, 1
      %p350 = por %p348, %p349
      %p352 = scmp.ne.s32.totalorder %s337, %s351
      %p353 = scmp.eq.s32.totalorder %s33, 0
      %p354 = por %p352, %p353
      %s356 = sadd.s32 %s355, 1
      %p359 = scmp.eq.s32.totalorder %s27, 1
      %p360 = scmp.ne.s32.totalorder %s355, %s357
      %p361 = scmp.eq.s32.totalorder %s27, 0
      %p362 = por %p360, %p361
      %p363 = scmp.ne.s32.totalorder %s355, %s357
      %p364 = scmp.eq.s32.totalorder %s32, 1
      %p365 = por %p363, %p364
      %p366 = scmp.ne.s32.totalorder %s357, %s358
      %p367 = scmp.eq.s32.totalorder %s32, 0
      %p368 = por %p366, %p367
      %p369 = scmp.ne.s32.totalorder %s357, %s358
      %p370 = scmp.eq.s32.totalorder %s33, 1
      %p371 = por %p369, %p370
      %p373 = scmp.ne.s32.totalorder %s358, %s372
      %p374 = scmp.eq.s32.totalorder %s33, 0
      %p375 = por %p373, %p374
      %s377 = sadd.s32 %s376, 1
      %p380 = scmp.eq.s32.totalorder %s27, 1
      %p381 = scmp.ne.s32.totalorder %s376, %s378
      %p382 = scmp.eq.s32.totalorder %s27, 0
      %p383 = por %p381, %p382
      %p384 = scmp.ne.s32.totalorder %s376, %s378
      %p385 = scmp.eq.s32.totalorder %s32, 1
      %p386 = por %p384, %p385
      %p387 = scmp.ne.s32.totalorder %s378, %s379
      %p388 = scmp.eq.s32.totalorder %s32, 0
      %p389 = por %p387, %p388
      %p390 = scmp.ne.s32.totalorder %s378, %s379
      %p391 = scmp.eq.s32.totalorder %s33, 1
      %p392 = por %p390, %p391
      %p394 = scmp.ne.s32.totalorder %s379, %s393
      %p395 = scmp.eq.s32.totalorder %s33, 0
      %p396 = por %p394, %p395
      %s398 = sadd.s32 %s397, 1
      %p401 = scmp.eq.s32.totalorder %s27, 1
      %p402 = scmp.ne.s32.totalorder %s397, %s399
      %p403 = scmp.eq.s32.totalorder %s27, 0
      %p404 = por %p402, %p403
      %p405 = scmp.ne.s32.totalorder %s397, %s399
      %p406 = scmp.eq.s32.totalorder %s32, 1
      %p407 = por %p405, %p406
      %p408 = scmp.ne.s32.totalorder %s399, %s400
      %p409 = scmp.eq.s32.totalorder %s32, 0
      %p410 = por %p408, %p409
      %p411 = scmp.ne.s32.totalorder %s399, %s400
      %p412 = scmp.eq.s32.totalorder %s33, 1
      %p413 = por %p411, %p412
      %p415 = scmp.ne.s32.totalorder %s400, %s414
      %p416 = scmp.eq.s32.totalorder %s33, 0
      %p417 = por %p415, %p416
      %s418 = ssub.s32 %s27, %s34
      %p419 = scmp.eq.s32.totalorder %s418, 0
      %s421 = sadd.s32 %s420, 1
      %s422 = scalar_select %p419, %s420, %s421
      %p425 = pneg %p419
      %p426 = scmp.eq.s32.totalorder %s27, 1
      %p427 = por %p425, %p426
      %p428 = scmp.ne.s32.totalorder %s420, %s423
      %p429 = scmp.eq.s32.totalorder %s27, 0
      %p430 = por %p428, %p429
      %p431 = scmp.ne.s32.totalorder %s420, %s423
      %p432 = scmp.eq.s32.totalorder %s32, 1
      %p433 = por %p431, %p432
      %p434 = scmp.ne.s32.totalorder %s423, %s424
      %p435 = scmp.eq.s32.totalorder %s32, 0
      %p436 = por %p434, %p435
      %p437 = scmp.ne.s32.totalorder %s423, %s424
      %p438 = scmp.eq.s32.totalorder %s33, 1
      %p439 = por %p437, %p438
      %p441 = scmp.ne.s32.totalorder %s424, %s440
      %p442 = scmp.eq.s32.totalorder %s33, 0
      %p443 = por %p441, %p442
      %p444 = scmp.le.s32.totalorder 1, %s27
      %p445 = scmp.lt.s32.totalorder %s27, 3
      %p446 = pnand %p444, %p445
      %p447 = pneg %p446
      // Predicated region
      $region9: #{tpu_custom_call.1} parent=5 // pred_check
        _
      $region10: #{tpu_custom_call.1} parent=5 // pred_check_branch
        %449 = sbr.rel (%p446) target = $region12
      $region11: #{tpu_custom_call.1} parent=5 // pred_region
        %s450 = ssub.s32 %s27, 1
        // Predicated region
        $region13: #{tpu_custom_call.1} parent=11 // pred_check
          %p451 = pneg %p74
        $region14: #{tpu_custom_call.1} parent=11 // pred_check_branch
          %453 = sbr.rel (%p451) target = $region16
        $region15: #{tpu_custom_call.1} parent=11 // pred_region
          _
        $region16: #{tpu_custom_call.1} parent=11 // pred_fallthru
          _
        // Predicated region
        $region17: #{tpu_custom_call.1} parent=11 // pred_check
          %p454 = pneg %p95
        $region18: #{tpu_custom_call.1} parent=11 // pred_check_branch
          %456 = sbr.rel (%p454) target = $region20
        $region19: #{tpu_custom_call.1} parent=11 // pred_region
          _
        $region20: #{tpu_custom_call.1} parent=11 // pred_fallthru
          _
        // Predicated region
        $region21: #{tpu_custom_call.1} parent=11 // pred_check
          %p457 = pneg %p116
        $region22: #{tpu_custom_call.1} parent=11 // pred_check_branch
          %459 = sbr.rel (%p457) target = $region24
        $region23: #{tpu_custom_call.1} parent=11 // pred_region
          _
        $region24: #{tpu_custom_call.1} parent=11 // pred_fallthru
          _
        // Predicated region
        $region25: #{tpu_custom_call.1} parent=11 // pred_check
          %p460 = pneg %p137
        $region26: #{tpu_custom_call.1} parent=11 // pred_check_branch
          %462 = sbr.rel (%p460) target = $region28
        $region27: #{tpu_custom_call.1} parent=11 // pred_region
          _
        $region28: #{tpu_custom_call.1} parent=11 // pred_fallthru
          _
        // Predicated region
        $region29: #{tpu_custom_call.1} parent=11 // pred_check
          %p463 = pneg %p158
        $region30: #{tpu_custom_call.1} parent=11 // pred_check_branch
          %465 = sbr.rel (%p463) target = $region32
        $region31: #{tpu_custom_call.1} parent=11 // pred_region
          _
        $region32: #{tpu_custom_call.1} parent=11 // pred_fallthru
          _
        // Predicated region
        $region33: #{tpu_custom_call.1} parent=11 // pred_check
          %p466 = pneg %p179
        $region34: #{tpu_custom_call.1} parent=11 // pred_check_branch
          %468 = sbr.rel (%p466) target = $region36
        $region35: #{tpu_custom_call.1} parent=11 // pred_region
          _
        $region36: #{tpu_custom_call.1} parent=11 // pred_fallthru
          _
        // Predicated region
        $region37: #{tpu_custom_call.1} parent=11 // pred_check
          %p469 = pneg %p200
        $region38: #{tpu_custom_call.1} parent=11 // pred_check_branch
          %471 = sbr.rel (%p469) target = $region40
        $region39: #{tpu_custom_call.1} parent=11 // pred_region
          _
        $region40: #{tpu_custom_call.1} parent=11 // pred_fallthru
          _
        // Predicated region
        $region41: #{tpu_custom_call.1} parent=11 // pred_check
          %p472 = pneg %p221
        $region42: #{tpu_custom_call.1} parent=11 // pred_check_branch
          %474 = sbr.rel (%p472) target = $region44
        $region43: #{tpu_custom_call.1} parent=11 // pred_region
          _
        $region44: #{tpu_custom_call.1} parent=11 // pred_fallthru
          _
        // Predicated region
        $region45: #{tpu_custom_call.1} parent=11 // pred_check
          %p475 = pneg %p242
        $region46: #{tpu_custom_call.1} parent=11 // pred_check_branch
          %477 = sbr.rel (%p475) target = $region48
        $region47: #{tpu_custom_call.1} parent=11 // pred_region
          _
        $region48: #{tpu_custom_call.1} parent=11 // pred_fallthru
          _
        // Predicated region
        $region49: #{tpu_custom_call.1} parent=11 // pred_check
          %p478 = pneg %p263
        $region50: #{tpu_custom_call.1} parent=11 // pred_check_branch
          %480 = sbr.rel (%p478) target = $region52
        $region51: #{tpu_custom_call.1} parent=11 // pred_region
          _
        $region52: #{tpu_custom_call.1} parent=11 // pred_fallthru
          _
        // Predicated region
        $region53: #{tpu_custom_call.1} parent=11 // pred_check
          %p481 = pneg %p284
        $region54: #{tpu_custom_call.1} parent=11 // pred_check_branch
          %483 = sbr.rel (%p481) target = $region56
        $region55: #{tpu_custom_call.1} parent=11 // pred_region
          _
        $region56: #{tpu_custom_call.1} parent=11 // pred_fallthru
          _
        // Predicated region
        $region57: #{tpu_custom_call.1} parent=11 // pred_check
          %p484 = pneg %p305
        $region58: #{tpu_custom_call.1} parent=11 // pred_check_branch
          %486 = sbr.rel (%p484) target = $region60
        $region59: #{tpu_custom_call.1} parent=11 // pred_region
          _
        $region60: #{tpu_custom_call.1} parent=11 // pred_fallthru
          _
        // Predicated region
        $region61: #{tpu_custom_call.1} parent=11 // pred_check
          %p487 = pneg %p326
        $region62: #{tpu_custom_call.1} parent=11 // pred_check_branch
          %489 = sbr.rel (%p487) target = $region64
        $region63: #{tpu_custom_call.1} parent=11 // pred_region
          _
        $region64: #{tpu_custom_call.1} parent=11 // pred_fallthru
          _
        // Predicated region
        $region65: #{tpu_custom_call.1} parent=11 // pred_check
          %p490 = pneg %p347
        $region66: #{tpu_custom_call.1} parent=11 // pred_check_branch
          %492 = sbr.rel (%p490) target = $region68
        $region67: #{tpu_custom_call.1} parent=11 // pred_region
          _
        $region68: #{tpu_custom_call.1} parent=11 // pred_fallthru
          _
        // Predicated region
        $region69: #{tpu_custom_call.1} parent=11 // pred_check
          %p493 = pneg %p368
        $region70: #{tpu_custom_call.1} parent=11 // pred_check_branch
          %495 = sbr.rel (%p493) target = $region72
        $region71: #{tpu_custom_call.1} parent=11 // pred_region
          _
        $region72: #{tpu_custom_call.1} parent=11 // pred_fallthru
          _
        // Predicated region
        $region73: #{tpu_custom_call.1} parent=11 // pred_check
          %p496 = pneg %p389
        $region74: #{tpu_custom_call.1} parent=11 // pred_check_branch
          %498 = sbr.rel (%p496) target = $region76
        $region75: #{tpu_custom_call.1} parent=11 // pred_region
          _
        $region76: #{tpu_custom_call.1} parent=11 // pred_fallthru
          _
        // Predicated region
        $region77: #{tpu_custom_call.1} parent=11 // pred_check
          %p499 = pneg %p410
        $region78: #{tpu_custom_call.1} parent=11 // pred_check_branch
          %501 = sbr.rel (%p499) target = $region80
        $region79: #{tpu_custom_call.1} parent=11 // pred_region
          _
        $region80: #{tpu_custom_call.1} parent=11 // pred_fallthru
          _
      $region12: #{tpu_custom_call.1} parent=5 // pred_fallthru
        _
      %p502 = scmp.lt.s32.totalorder %s27, 2
      // Predicated region
      $region81: #{tpu_custom_call.1} parent=5 // pred_check
        %p503 = pneg %p502
      $region82: #{tpu_custom_call.1} parent=5 // pred_check_branch
        %505 = sbr.rel (%p503) target = $region84
      $region83: #{tpu_custom_call.1} parent=5 // pred_region
        // Predicated region
        $region85: #{tpu_custom_call.1} parent=83 // pred_check
          %p506 = pneg %p47
        $region86: #{tpu_custom_call.1} parent=83 // pred_check_branch
          %508 = sbr.rel (%p506) target = $region88
        $region87: #{tpu_custom_call.1} parent=83 // pred_region
          %p509 = scmp.lt.s32.totalorder %s27, 1
          %s510 = scalar_select %p509, %s27, 1
          %s511 = smul.addr %s510, 2
          %s512 = smul.addr %s511, 4
          %s513 = scalar_lea.vmem %s0, %s512
        $region88: #{tpu_custom_call.1} parent=83 // pred_fallthru
          _
      $region84: #{tpu_custom_call.1} parent=5 // pred_fallthru
        _
      %p514 = scmp.le.s32.totalorder 1, %s27
      %p515 = scmp.lt.s32.totalorder %s27, 3
      %p516 = pnand %p514, %p515
      %p517 = pneg %p516
      // Predicated region
      $region89: #{tpu_custom_call.1} parent=5 // pred_check
        _
      $region90: #{tpu_custom_call.1} parent=5 // pred_check_branch
        %519 = sbr.rel (%p516) target = $region92
      $region91: #{tpu_custom_call.1} parent=5 // pred_region
        %s520 = ssub.s32 %s27, 1
        %p521 = scmp.lt.s32.totalorder %s32, 1
        %s522 = scalar_select %p521, %s32, 1
        %s523 = smul.addr %s522, 2
        %s524 = smul.addr %s523, 4
        %s525 = scalar_lea.vmem %s0, %s524
        %p526 = pneg %p53
        %p527 = pneg %p50
        %p528 = pneg %p74
        %p529 = pneg %p71
        %p530 = pneg %p95
        %p531 = pneg %p92
        %p532 = pneg %p116
        %p533 = pneg %p113
        %p534 = pneg %p137
        %p535 = pneg %p134
        %p536 = pneg %p158
        %p537 = pneg %p155
        %p538 = pneg %p179
        %p539 = pneg %p176
        %p540 = pneg %p200
        %p541 = pneg %p197
        %p542 = pneg %p221
        %p543 = pneg %p218
        %p544 = pneg %p242
        %p545 = pneg %p239
        %p546 = pneg %p263
        %p547 = pneg %p260
        %p548 = pneg %p284
        %p549 = pneg %p281
        %p550 = pneg %p305
        %p551 = pneg %p302
        %p552 = pneg %p326
        %p553 = pneg %p323
        %p554 = pneg %p347
        %p555 = pneg %p344
        %p556 = pneg %p368
        %p557 = pneg %p365
        %p558 = pneg %p389
        %p559 = pneg %p386
        %p560 = pneg %p410
        %p561 = pneg %p407
        %p562 = pneg %p436
        %p563 = pneg %p433
        %s564 = sand.u32 %s423, 1
        %s565 = scalar_lea.sflag [#allocation4], %s564
        %s566 = sand.u32 %s423, 1
        %s567 = smul.addr %s566, 64
        %s568 = scalar_lea.vmem [#allocation3], %s567
        %p569 = scmp.lt.s32.totalorder %s32, 1
        %s570 = scalar_select %p569, %s32, 1
        %s571 = smul.addr %s570, 2
        %s572 = smul.addr %s571, 4
        %s573 = scalar_lea.vmem %s0, %s572
        %v574 = vld [vmem:[%s573] sm:$0xff]
        %v575 = vld [vmem:[%s1] sm:$0xff]
        %v576 = vld [vmem:[%s1 + $0x8] sm:$0xff]
        %v577 = vld [vmem:[%s1 + $0x10] sm:$0x1]
        %v578 = vld [vmem:[%s1 + $0x18] sm:$0x1]
        %v579 = vld [vmem:[%s14] sm:$0xff]
        %v580 = vld [vmem:[%s14 + $0x8] sm:$0xff]
        %v581 = vld [vmem:[%s14 + $0x10] sm:$0xff]
        %v582 = vld [vmem:[%s14 + $0x18] sm:$0xff]
        %v583 = vld [vmem:[%s15] sm:$0xff]
        %v584 = vld [vmem:[%s15 + $0x8] sm:$0xff]
        %v585 = vld [vmem:[%s16] sm:$0xff]
        %v586 = vld [vmem:[%s16 + $0x8] sm:$0xff]
        %v587 = vld [vmem:[%s16 + $0x10] sm:$0xff]
        %v588 = vld [vmem:[%s16 + $0x18] sm:$0xff]
        %v589 = vld [vmem:[%s17] sm:$0xff]
        %v590 = vld [vmem:[%s17 + $0x8] sm:$0xff]
        %v591 = vld [vmem:[%s2] sm:$0xff]
        %v592 = vld [vmem:[%s2 + $0x8] sm:$0xff]
        %v593 = vld [vmem:[%s2 + $0x10] sm:$0xff]
        %v594 = vld [vmem:[%s2 + $0x18] sm:$0xff]
        %v596 = vcombine.high %v574, %v574
        %vm597 = vcmask 31744
        %v599 = vsel %vm597, %v591, 0
        %v602 = vsel %vm597, %v592, 0
        %v605 = vsel %vm597, %v593, 0
        %v608 = vsel %vm597, %v594, 0
        %vm610 = vcmask 1043456
        %v611 = vsel %vm610, %v574, 0
        %v613 = vsel %vm610, %v596, 0
        %615 = vmatprep.subr.mxu0 %v613
        %616 = vmatpush1.msra.mxu0 %v611
        %617 = vmatprep.subr.mxu0 0.0
        %618 = vmatpush1.msra.mxu0 0.0
        %619 = vmatprep.subr.mxu0 0.0
        %620 = vmatpush1.msra.mxu0 0.0
        %621 = vmatprep.subr.mxu0 0.0
        %622 = vmatpush1.msra.mxu0 0.0
        %623 = vmatprep.subr.mxu0 0.0
        %624 = vmatpush1.msra.mxu0 0.0
        %625 = vmatprep.subr.mxu0 0.0
        %626 = vmatpush1.msra.mxu0 0.0
        %627 = vmatprep.subr.mxu0 0.0
        %628 = vmatpush1.msra.mxu0 0.0
        %629 = vmatprep.subr.mxu0 0.0
        %630 = vmatpush1.msra.mxu0 0.0
        %631 = vmatprep.subr.mxu0 0.0
        %632 = vmatpush1.msra.mxu0 0.0
        %633 = vmatprep.subr.mxu0 0.0
        %634 = vmatpush1.msra.mxu0 0.0
        %635 = vmatprep.subr.mxu0 0.0
        %636 = vmatpush1.msra.mxu0 0.0
        %637 = vmatprep.subr.mxu0 0.0
        %638 = vmatpush1.msra.mxu0 0.0
        %639 = vmatprep.subr.mxu0 0.0
        %640 = vmatpush1.msra.mxu0 0.0
        %641 = vmatprep.subr.mxu0 0.0
        %642 = vmatpush1.msra.mxu0 0.0
        %643 = vmatprep.subr.mxu0 0.0
        %644 = vmatpush1.msra.mxu0 0.0
        %645 = vmatprep.subr.mxu0 0.0
        %646 = vmatpush1.msra.mxu0 0.0
        %647 = vmatprep.subr.mxu0 0.0
        %648 = vmatpush1.msra.mxu0 0.0
        %649 = vmatprep.subr.mxu0 0.0
        %650 = vmatpush1.msra.mxu0 0.0
        %651 = vmatprep.subr.mxu0 0.0
        %652 = vmatpush1.msra.mxu0 0.0
        %653 = vmatprep.subr.mxu0 0.0
        %654 = vmatpush1.msra.mxu0 0.0
        %655 = vmatprep.subr.mxu0 0.0
        %656 = vmatpush1.msra.mxu0 0.0
        %657 = vmatprep.subr.mxu0 0.0
        %658 = vmatpush1.msra.mxu0 0.0
        %659 = vmatprep.subr.mxu0 0.0
        %660 = vmatpush1.msra.mxu0 0.0
        %661 = vmatprep.subr.mxu0 0.0
        %662 = vmatpush1.msra.mxu0 0.0
        %663 = vmatprep.subr.mxu0 0.0
        %664 = vmatpush1.msra.mxu0 0.0
        %665 = vmatprep.subr.mxu0 0.0
        %666 = vmatpush1.msra.mxu0 0.0
        %667 = vmatprep.subr.mxu0 0.0
        %668 = vmatpush1.msra.mxu0 0.0
        %669 = vmatprep.subr.mxu0 0.0
        %670 = vmatpush1.msra.mxu0 0.0
        %671 = vmatprep.subr.mxu0 0.0
        %672 = vmatpush1.msra.mxu0 0.0
        %673 = vmatprep.subr.mxu0 0.0
        %674 = vmatpush1.msra.mxu0 0.0
        %675 = vmatprep.subr.mxu0 0.0
        %676 = vmatpush1.msra.mxu0 0.0
        %677 = vmatprep.subr.mxu0 0.0
        %678 = vmatpush1.msra.mxu0 0.0
        %679 = vmatprep.mubr.f32.mxu0 0.0
        %680 = vmatmul.mubr.f32.gmra.mrb[0].mxu0 %v599
        %v681 = vpop.f32.mrb[0].mxu0
        %v682 = vadd.f32 0.0, %v681
        %v683 = vpop.f32.mrb[0].mxu0
        %v684 = vadd.f32 0.0, %v683
        %685 = vmatprep.mubr.f32.mxu0 0.0
        %686 = vmatmul.mubr.f32.gmra.mrb[0].mxu0 %v602
        %v687 = vpop.f32.mrb[0].mxu0
        %v688 = vadd.f32 0.0, %v687
        %v689 = vpop.f32.mrb[0].mxu0
        %v690 = vadd.f32 0.0, %v689
        %691 = vmatprep.mubr.f32.mxu0 0.0
        %692 = vmatmul.mubr.f32.gmra.mrb[0].mxu0 %v605
        %v693 = vpop.f32.mrb[0].mxu0
        %v694 = vadd.f32 0.0, %v693
        %v695 = vpop.f32.mrb[0].mxu0
        %v696 = vadd.f32 0.0, %v695
        %697 = vmatprep.mubr.f32.mxu0 0.0
        %698 = vmatmul.mubr.f32.gmra.mrb[0].mxu0 %v608
        %v699 = vpop.f32.mrb[0].mxu0
        %v700 = vadd.f32 0.0, %v699
        %v701 = vpop.f32.mrb[0].mxu0
        %v702 = vadd.f32 0.0, %v701
        %703 = vdwg.mxu0
        %v704 = vld [vmem:[%s6] sm:$0xff]
        %v705 = vld [vmem:[%s6 + $0x8] sm:$0xff]
        %v706 = vld [vmem:[%s6 + $0x10] sm:$0xff]
        %v707 = vld [vmem:[%s6 + $0x18] sm:$0xff]
        %v708 = vld [vmem:[%s7] sm:$0xff]
        %v709 = vld [vmem:[%s7 + $0x8] sm:$0xff]
        %v710 = vld [vmem:[%s7 + $0x10] sm:$0xff]
        %v711 = vld [vmem:[%s7 + $0x18] sm:$0xff]
        %vm712 = vcmask 261120
        %v714 = vsel %vm712, %v583, 0
        %v717 = vsel %vm712, %v584, 0
        %719 = vmatprep.subr.mxu0 %v684
        %720 = vmatpush1.msra.mxu0 %v682
        %721 = vmatprep.subr.mxu0 %v690
        %722 = vmatpush1.msra.mxu0 %v688
        %723 = vmatprep.subr.mxu0 %v696
        %724 = vmatpush1.msra.mxu0 %v694
        %725 = vmatprep.subr.mxu0 %v702
        %726 = vmatpush1.msra.mxu0 %v700
        %727 = vmatprep.subr.mxu0 0.0
        %728 = vmatpush1.msra.mxu0 0.0
        %729 = vmatprep.subr.mxu0 0.0
        %730 = vmatpush1.msra.mxu0 0.0
        %731 = vmatprep.subr.mxu0 0.0
        %732 = vmatpush1.msra.mxu0 0.0
        %733 = vmatprep.subr.mxu0 0.0
        %734 = vmatpush1.msra.mxu0 0.0
        %735 = vmatprep.subr.mxu0 0.0
        %736 = vmatpush1.msra.mxu0 0.0
        %737 = vmatprep.subr.mxu0 0.0
        %738 = vmatpush1.msra.mxu0 0.0
        %739 = vmatprep.subr.mxu0 0.0
        %740 = vmatpush1.msra.mxu0 0.0
        %741 = vmatprep.subr.mxu0 0.0
        %742 = vmatpush1.msra.mxu0 0.0
        %743 = vmatprep.subr.mxu0 0.0
        %744 = vmatpush1.msra.mxu0 0.0
        %745 = vmatprep.subr.mxu0 0.0
        %746 = vmatpush1.msra.mxu0 0.0
        %747 = vmatprep.subr.mxu0 0.0
        %748 = vmatpush1.msra.mxu0 0.0
        %749 = vmatprep.subr.mxu0 0.0
        %750 = vmatpush1.msra.mxu0 0.0
        %751 = vmatprep.subr.mxu0 0.0
        %752 = vmatpush1.msra.mxu0 0.0
        %753 = vmatprep.subr.mxu0 0.0
        %754 = vmatpush1.msra.mxu0 0.0
        %755 = vmatprep.subr.mxu0 0.0
        %756 = vmatpush1.msra.mxu0 0.0
        %757 = vmatprep.subr.mxu0 0.0
        %758 = vmatpush1.msra.mxu0 0.0
        %759 = vmatprep.subr.mxu0 0.0
        %760 = vmatpush1.msra.mxu0 0.0
        %761 = vmatprep.subr.mxu0 0.0
        %762 = vmatpush1.msra.mxu0 0.0
        %763 = vmatprep.subr.mxu0 0.0
        %764 = vmatpush1.msra.mxu0 0.0
        %765 = vmatprep.subr.mxu0 0.0
        %766 = vmatpush1.msra.mxu0 0.0
        %767 = vmatprep.subr.mxu0 0.0
        %768 = vmatpush1.msra.mxu0 0.0
        %769 = vmatprep.subr.mxu0 0.0
        %770 = vmatpush1.msra.mxu0 0.0
        %771 = vmatprep.subr.mxu0 0.0
        %772 = vmatpush1.msra.mxu0 0.0
        %773 = vmatprep.subr.mxu0 0.0
        %774 = vmatpush1.msra.mxu0 0.0
        %775 = vmatprep.subr.mxu0 0.0
        %776 = vmatpush1.msra.mxu0 0.0
        %777 = vmatprep.subr.mxu0 0.0
        %778 = vmatpush1.msra.mxu0 0.0
        %779 = vmatprep.subr.mxu0 0.0
        %780 = vmatpush1.msra.mxu0 0.0
        %781 = vmatprep.subr.mxu0 0.0
        %782 = vmatpush1.msra.mxu0 0.0
        %783 = vmatprep.mubr.f32.mxu0 0.0
        %784 = vmatmul.mubr.f32.gmra.mrb[0].mxu0 %v714
        %v785 = vpop.f32.mrb[0].mxu0
        %v786 = vadd.f32 0.0, %v785
        %v787 = vpop.f32.mrb[0].mxu0
        %v788 = vadd.f32 0.0, %v787
        %789 = vmatprep.mubr.f32.mxu0 0.0
        %790 = vmatmul.mubr.f32.gmra.mrb[0].mxu0 %v717
        %v791 = vpop.f32.mrb[0].mxu0
        %v792 = vadd.f32 0.0, %v791
        %v793 = vpop.f32.mrb[0].mxu0
        %v794 = vadd.f32 0.0, %v793
        %795 = vdwg.mxu0
        %v796 = vadd.f32 %v786, %v788
        %797 = vadd.xlane.f32.xlu0 %v796
        %v798 = vpop.xlane.xlu0 %797
        %v799 = vadd.f32 %v792, %v794
        %800 = vadd.xlane.f32.xlu0 %v799
        %v801 = vpop.xlane.xlu0 %800
        %vm802 = vcmask 130048
        %v804 = vsel %vm802, %v579, 0
        %v807 = vsel %vm802, %v580, 0
        %v810 = vsel %vm802, %v581, 0
        %v813 = vsel %vm802, %v582, 0
        %815 = vmatprep.subr.mxu0 0.0
        %816 = vmatpush1.msra.mxu0 %v798
        %817 = vmatprep.subr.mxu0 0.0
        %818 = vmatpush1.msra.mxu0 %v801
        %819 = vmatprep.subr.mxu0 0.0
        %820 = vmatpush1.msra.mxu0 0.0
        %821 = vmatprep.subr.mxu0 0.0
        %822 = vmatpush1.msra.mxu0 0.0
        %823 = vmatprep.subr.mxu0 0.0
        %824 = vmatpush1.msra.mxu0 0.0
        %825 = vmatprep.subr.mxu0 0.0
        %826 = vmatpush1.msra.mxu0 0.0
        %827 = vmatprep.subr.mxu0 0.0
        %828 = vmatpush1.msra.mxu0 0.0
        %829 = vmatprep.subr.mxu0 0.0
        %830 = vmatpush1.msra.mxu0 0.0
        %831 = vmatprep.subr.mxu0 0.0
        %832 = vmatpush1.msra.mxu0 0.0
        %833 = vmatprep.subr.mxu0 0.0
        %834 = vmatpush1.msra.mxu0 0.0
        %835 = vmatprep.subr.mxu0 0.0
        %836 = vmatpush1.msra.mxu0 0.0
        %837 = vmatprep.subr.mxu0 0.0
        %838 = vmatpush1.msra.mxu0 0.0
        %839 = vmatprep.subr.mxu0 0.0
        %840 = vmatpush1.msra.mxu0 0.0
        %841 = vmatprep.subr.mxu0 0.0
        %842 = vmatpush1.msra.mxu0 0.0
        %843 = vmatprep.subr.mxu0 0.0
        %844 = vmatpush1.msra.mxu0 0.0
        %845 = vmatprep.subr.mxu0 0.0
        %846 = vmatpush1.msra.mxu0 0.0
        %847 = vmatprep.subr.mxu0 0.0
        %848 = vmatpush1.msra.mxu0 0.0
        %849 = vmatprep.subr.mxu0 0.0
        %850 = vmatpush1.msra.mxu0 0.0
        %851 = vmatprep.subr.mxu0 0.0
        %852 = vmatpush1.msra.mxu0 0.0
        %853 = vmatprep.subr.mxu0 0.0
        %854 = vmatpush1.msra.mxu0 0.0
        %855 = vmatprep.subr.mxu0 0.0
        %856 = vmatpush1.msra.mxu0 0.0
        %857 = vmatprep.subr.mxu0 0.0
        %858 = vmatpush1.msra.mxu0 0.0
        %859 = vmatprep.subr.mxu0 0.0
        %860 = vmatpush1.msra.mxu0 0.0
        %861 = vmatprep.subr.mxu0 0.0
        %862 = vmatpush1.msra.mxu0 0.0
        %863 = vmatprep.subr.mxu0 0.0
        %864 = vmatpush1.msra.mxu0 0.0
        %865 = vmatprep.subr.mxu0 0.0
        %866 = vmatpush1.msra.mxu0 0.0
        %867 = vmatprep.subr.mxu0 0.0
        %868 = vmatpush1.msra.mxu0 0.0
        %869 = vmatprep.subr.mxu0 0.0
        %870 = vmatpush1.msra.mxu0 0.0
        %871 = vmatprep.subr.mxu0 0.0
        %872 = vmatpush1.msra.mxu0 0.0
        %873 = vmatprep.subr.mxu0 0.0
        %874 = vmatpush1.msra.mxu0 0.0
        %875 = vmatprep.subr.mxu0 0.0
        %876 = vmatpush1.msra.mxu0 0.0
        %877 = vmatprep.subr.mxu0 0.0
        %878 = vmatpush1.msra.mxu0 0.0
        %879 = vmatprep.mubr.f32.mxu0 0.0
        %880 = vmatmul.mubr.f32.gmra.mrb[0].mxu0 %v804
        %v881 = vpop.f32.mrb[0].mxu0
        %v882 = vadd.f32 0.0, %v881
        %v883 = vpop.f32.mrb[0].mxu0
        %884 = vmatprep.mubr.f32.mxu0 0.0
        %885 = vmatmul.mubr.f32.gmra.mrb[0].mxu0 %v807
        %v886 = vpop.f32.mrb[0].mxu0
        %v887 = vadd.f32 0.0, %v886
        %v888 = vpop.f32.mrb[0].mxu0
        %889 = vmatprep.mubr.f32.mxu0 0.0
        %890 = vmatmul.mubr.f32.gmra.mrb[0].mxu0 %v810
        %v891 = vpop.f32.mrb[0].mxu0
        %v892 = vadd.f32 0.0, %v891
        %v893 = vpop.f32.mrb[0].mxu0
        %894 = vmatprep.mubr.f32.mxu0 0.0
        %895 = vmatmul.mubr.f32.gmra.mrb[0].mxu0 %v813
        %v896 = vpop.f32.mrb[0].mxu0
        %v897 = vadd.f32 0.0, %v896
        %v898 = vpop.f32.mrb[0].mxu0
        %899 = vdwg.mxu0
        %v900 = vmul.f32 %v882, 0.001953125
        %v901 = vmul.f32 %v887, 0.001953125
        %v902 = vmul.f32 %v892, 0.001953125
        %v903 = vmul.f32 %v897, 0.001953125
        %905 = vset.pattern.permute.xlu0 0
        %906 = vperm.xlu0 %905, %v900
        %v907 = vpop.permute.xlu0 %906
        %910 = vset.pattern.permute.xlu0 0
        %911 = vperm.xlu0 %910, %v901
        %v912 = vpop.permute.xlu0 %911
        %915 = vset.pattern.permute.xlu0 0
        %916 = vperm.xlu0 %915, %v902
        %v917 = vpop.permute.xlu0 %916
        %920 = vset.pattern.permute.xlu0 0
        %921 = vperm.xlu0 %920, %v903
        %v922 = vpop.permute.xlu0 %921
        %v924 = vsub.f32 %v682, %v907
        %v925 = vsub.f32 %v684, %v907
        %v926 = vsub.f32 %v688, %v912
        %v927 = vsub.f32 %v690, %v912
        %v928 = vsub.f32 %v694, %v917
        %v929 = vsub.f32 %v696, %v917
        %v930 = vsub.f32 %v700, %v922
        %v931 = vsub.f32 %v702, %v922
        %v932 = vmul.f32 %v924, %v924
        %v933 = vmul.f32 %v925, %v925
        %v934 = vmul.f32 %v926, %v926
        %v935 = vmul.f32 %v927, %v927
        %v936 = vmul.f32 %v928, %v928
        %v937 = vmul.f32 %v929, %v929
        %v938 = vmul.f32 %v930, %v930
        %v939 = vmul.f32 %v931, %v931
        %940 = vmatprep.subr.mxu0 %v933
        %941 = vmatpush1.msra.mxu0 %v932
        %942 = vmatprep.subr.mxu0 %v935
        %943 = vmatpush1.msra.mxu0 %v934
        %944 = vmatprep.subr.mxu0 %v937
        %945 = vmatpush1.msra.mxu0 %v936
        %946 = vmatprep.subr.mxu0 %v939
        %947 = vmatpush1.msra.mxu0 %v938
        %948 = vmatprep.subr.mxu0 0.0
        %949 = vmatpush1.msra.mxu0 0.0
        %950 = vmatprep.subr.mxu0 0.0
        %951 = vmatpush1.msra.mxu0 0.0
        %952 = vmatprep.subr.mxu0 0.0
        %953 = vmatpush1.msra.mxu0 0.0
        %954 = vmatprep.subr.mxu0 0.0
        %955 = vmatpush1.msra.mxu0 0.0
        %956 = vmatprep.subr.mxu0 0.0
        %957 = vmatpush1.msra.mxu0 0.0
        %958 = vmatprep.subr.mxu0 0.0
        %959 = vmatpush1.msra.mxu0 0.0
        %960 = vmatprep.subr.mxu0 0.0
        %961 = vmatpush1.msra.mxu0 0.0
        %962 = vmatprep.subr.mxu0 0.0
        %963 = vmatpush1.msra.mxu0 0.0
        %964 = vmatprep.subr.mxu0 0.0
        %965 = vmatpush1.msra.mxu0 0.0
        %966 = vmatprep.subr.mxu0 0.0
        %967 = vmatpush1.msra.mxu0 0.0
        %968 = vmatprep.subr.mxu0 0.0
        %969 = vmatpush1.msra.mxu0 0.0
        %970 = vmatprep.subr.mxu0 0.0
        %971 = vmatpush1.msra.mxu0 0.0
        %972 = vmatprep.subr.mxu0 0.0
        %973 = vmatpush1.msra.mxu0 0.0
        %974 = vmatprep.subr.mxu0 0.0
        %975 = vmatpush1.msra.mxu0 0.0
        %976 = vmatprep.subr.mxu0 0.0
        %977 = vmatpush1.msra.mxu0 0.0
        %978 = vmatprep.subr.mxu0 0.0
        %979 = vmatpush1.msra.mxu0 0.0
        %980 = vmatprep.subr.mxu0 0.0
        %981 = vmatpush1.msra.mxu0 0.0
        %982 = vmatprep.subr.mxu0 0.0
        %983 = vmatpush1.msra.mxu0 0.0
        %984 = vmatprep.subr.mxu0 0.0
        %985 = vmatpush1.msra.mxu0 0.0
        %986 = vmatprep.subr.mxu0 0.0
        %987 = vmatpush1.msra.mxu0 0.0
        %988 = vmatprep.subr.mxu0 0.0
        %989 = vmatpush1.msra.mxu0 0.0
        %990 = vmatprep.subr.mxu0 0.0
        %991 = vmatpush1.msra.mxu0 0.0
        %992 = vmatprep.subr.mxu0 0.0
        %993 = vmatpush1.msra.mxu0 0.0
        %994 = vmatprep.subr.mxu0 0.0
        %995 = vmatpush1.msra.mxu0 0.0
        %996 = vmatprep.subr.mxu0 0.0
        %997 = vmatpush1.msra.mxu0 0.0
        %998 = vmatprep.subr.mxu0 0.0
        %999 = vmatpush1.msra.mxu0 0.0
        %1000 = vmatprep.subr.mxu0 0.0
        %1001 = vmatpush1.msra.mxu0 0.0
        %1002 = vmatprep.subr.mxu0 0.0
        %1003 = vmatpush1.msra.mxu0 0.0
        %1004 = vmatprep.mubr.f32.mxu0 0.0
        %1005 = vmatmul.mubr.f32.gmra.mrb[0].mxu0 %v714
        %v1006 = vpop.f32.mrb[0].mxu0
        %v1007 = vadd.f32 0.0, %v1006
        %v1008 = vpop.f32.mrb[0].mxu0
        %v1009 = vadd.f32 0.0, %v1008
        %1010 = vmatprep.mubr.f32.mxu0 0.0
        %1011 = vmatmul.mubr.f32.gmra.mrb[0].mxu0 %v717
        %v1012 = vpop.f32.mrb[0].mxu0
        %v1013 = vadd.f32 0.0, %v1012
        %v1014 = vpop.f32.mrb[0].mxu0
        %v1015 = vadd.f32 0.0, %v1014
        %1016 = vdwg.mxu0
        %v1017 = vadd.f32 %v1007, %v1009
        %1018 = vadd.xlane.f32.xlu0 %v1017
        %v1019 = vpop.xlane.xlu0 %1018
        %v1020 = vadd.f32 %v1013, %v1015
        %1021 = vadd.xlane.f32.xlu0 %v1020
        %v1022 = vpop.xlane.xlu0 %1021
        %v1023 = vmul.f32 %v1019, 0.001953125
        %v1024 = vmul.f32 %v1022, 0.001953125
        %v1025 = vadd.f32 %v1023, 1e-05
        %v1026 = vadd.f32 %v1024, 1e-05
        %v1027 = vrsqrt.pop %v1025
        %v1028 = vrsqrt.pop %v1026
        %1029 = vmatprep.subr.mxu0 0.0
        %1030 = vmatpush1.msra.mxu0 %v1027
        %1031 = vmatprep.subr.mxu0 0.0
        %1032 = vmatpush1.msra.mxu0 %v1028
        %1033 = vmatprep.subr.mxu0 0.0
        %1034 = vmatpush1.msra.mxu0 0.0
        %1035 = vmatprep.subr.mxu0 0.0
        %1036 = vmatpush1.msra.mxu0 0.0
        %1037 = vmatprep.subr.mxu0 0.0
        %1038 = vmatpush1.msra.mxu0 0.0
        %1039 = vmatprep.subr.mxu0 0.0
        %1040 = vmatpush1.msra.mxu0 0.0
        %1041 = vmatprep.subr.mxu0 0.0
        %1042 = vmatpush1.msra.mxu0 0.0
        %1043 = vmatprep.subr.mxu0 0.0
        %1044 = vmatpush1.msra.mxu0 0.0
        %1045 = vmatprep.subr.mxu0 0.0
        %1046 = vmatpush1.msra.mxu0 0.0
        %1047 = vmatprep.subr.mxu0 0.0
        %1048 = vmatpush1.msra.mxu0 0.0
        %1049 = vmatprep.subr.mxu0 0.0
        %1050 = vmatpush1.msra.mxu0 0.0
        %1051 = vmatprep.subr.mxu0 0.0
        %1052 = vmatpush1.msra.mxu0 0.0
        %1053 = vmatprep.subr.mxu0 0.0
        %1054 = vmatpush1.msra.mxu0 0.0
        %1055 = vmatprep.subr.mxu0 0.0
        %1056 = vmatpush1.msra.mxu0 0.0
        %1057 = vmatprep.subr.mxu0 0.0
        %1058 = vmatpush1.msra.mxu0 0.0
        %1059 = vmatprep.subr.mxu0 0.0
        %1060 = vmatpush1.msra.mxu0 0.0
        %1061 = vmatprep.subr.mxu0 0.0
        %1062 = vmatpush1.msra.mxu0 0.0
        %1063 = vmatprep.subr.mxu0 0.0
        %1064 = vmatpush1.msra.mxu0 0.0
        %1065 = vmatprep.subr.mxu0 0.0
        %1066 = vmatpush1.msra.mxu0 0.0
        %1067 = vmatprep.subr.mxu0 0.0
        %1068 = vmatpush1.msra.mxu0 0.0
        %1069 = vmatprep.subr.mxu0 0.0
        %1070 = vmatpush1.msra.mxu0 0.0
        %1071 = vmatprep.subr.mxu0 0.0
        %1072 = vmatpush1.msra.mxu0 0.0
        %1073 = vmatprep.subr.mxu0 0.0
        %1074 = vmatpush1.msra.mxu0 0.0
        %1075 = vmatprep.subr.mxu0 0.0
        %1076 = vmatpush1.msra.mxu0 0.0
        %1077 = vmatprep.subr.mxu0 0.0
        %1078 = vmatpush1.msra.mxu0 0.0
        %1079 = vmatprep.subr.mxu0 0.0
        %1080 = vmatpush1.msra.mxu0 0.0
        %1081 = vmatprep.subr.mxu0 0.0
        %1082 = vmatpush1.msra.mxu0 0.0
        %1083 = vmatprep.subr.mxu0 0.0
        %1084 = vmatpush1.msra.mxu0 0.0
        %1085 = vmatprep.subr.mxu0 0.0
        %1086 = vmatpush1.msra.mxu0 0.0
        %1087 = vmatprep.subr.mxu0 0.0
        %1088 = vmatpush1.msra.mxu0 0.0
        %1089 = vmatprep.subr.mxu0 0.0
        %1090 = vmatpush1.msra.mxu0 0.0
        %1091 = vmatprep.subr.mxu0 0.0
        %1092 = vmatpush1.msra.mxu0 0.0
        %1093 = vmatprep.mubr.f32.mxu0 0.0
        %1094 = vmatmul.mubr.f32.gmra.mrb[0].mxu0 %v804
        %v1095 = vpop.f32.mrb[0].mxu0
        %v1096 = vadd.f32 0.0, %v1095
        %v1097 = vpop.f32.mrb[0].mxu0
        %1098 = vmatprep.mubr.f32.mxu0 0.0
        %1099 = vmatmul.mubr.f32.gmra.mrb[0].mxu0 %v807
        %v1100 = vpop.f32.mrb[0].mxu0
        %v1101 = vadd.f32 0.0, %v1100
        %v1102 = vpop.f32.mrb[0].mxu0
        %1103 = vmatprep.mubr.f32.mxu0 0.0
        %1104 = vmatmul.mubr.f32.gmra.mrb[0].mxu0 %v810
        %v1105 = vpop.f32.mrb[0].mxu0
        %v1106 = vadd.f32 0.0, %v1105
        %v1107 = vpop.f32.mrb[0].mxu0
        %1108 = vmatprep.mubr.f32.mxu0 0.0
        %1109 = vmatmul.mubr.f32.gmra.mrb[0].mxu0 %v813
        %v1110 = vpop.f32.mrb[0].mxu0
        %v1111 = vadd.f32 0.0, %v1110
        %v1112 = vpop.f32.mrb[0].mxu0
        %1113 = vdwg.mxu0
        %v1114 = vmul.f32 %v1096, %v704
        %v1115 = vmul.f32 %v1101, %v705
        %v1116 = vmul.f32 %v1106, %v706
        %v1117 = vmul.f32 %v1111, %v707
        %1119 = vset.pattern.permute.xlu0 0
        %1120 = vperm.xlu0 %1119, %v1114
        %v1121 = vpop.permute.xlu0 %1120
        %1124 = vset.pattern.permute.xlu0 0
        %1125 = vperm.xlu0 %1124, %v1115
        %v1126 = vpop.permute.xlu0 %1125
        %1129 = vset.pattern.permute.xlu0 0
        %1130 = vperm.xlu0 %1129, %v1116
        %v1131 = vpop.permute.xlu0 %1130
        %1134 = vset.pattern.permute.xlu0 0
        %1135 = vperm.xlu0 %1134, %v1117
        %v1136 = vpop.permute.xlu0 %1135
        %v1138 = vmul.f32 %v924, %v1121
        %v1139 = vmul.f32 %v925, %v1121
        %v1140 = vmul.f32 %v926, %v1126
        %v1141 = vmul.f32 %v927, %v1126
        %v1142 = vmul.f32 %v928, %v1131
        %v1143 = vmul.f32 %v929, %v1131
        %v1144 = vmul.f32 %v930, %v1136
        %v1145 = vmul.f32 %v931, %v1136
        %1147 = vset.pattern.permute.xlu0 0
        %1148 = vperm.xlu0 %1147, %v708
        %v1149 = vpop.permute.xlu0 %1148
        %1152 = vset.pattern.permute.xlu0 0
        %1153 = vperm.xlu0 %1152, %v709
        %v1154 = vpop.permute.xlu0 %1153
        %1157 = vset.pattern.permute.xlu0 0
        %1158 = vperm.xlu0 %1157, %v710
        %v1159 = vpop.permute.xlu0 %1158
        %1162 = vset.pattern.permute.xlu0 0
        %1163 = vperm.xlu0 %1162, %v711
        %v1164 = vpop.permute.xlu0 %1163
        %v1166 = vadd.f32 %v1138, %v1149
        %v1167 = vadd.f32 %v1139, %v1149
        %v1168 = vadd.f32 %v1140, %v1154
        %v1169 = vadd.f32 %v1141, %v1154
        %v1170 = vadd.f32 %v1142, %v1159
        %v1171 = vadd.f32 %v1143, %v1159
        %v1172 = vadd.f32 %v1144, %v1164
        %v1173 = vadd.f32 %v1145, %v1164
        %v1174 = vmax.f32 %v1166, 0.0
        %v1175 = vmax.f32 %v1167, 0.0
        %v1176 = vmax.f32 %v1168, 0.0
        %v1177 = vmax.f32 %v1169, 0.0
        %v1178 = vmax.f32 %v1170, 0.0
        %v1179 = vmax.f32 %v1171, 0.0
        %v1180 = vmax.f32 %v1172, 0.0
        %v1181 = vmax.f32 %v1173, 0.0
        %1186 = vrot.lane.b32.xlu0 %v1175, 17
        %v1187 = vpop.permute.xlu0 %1186
        %1188 = vrot.lane.b32.xlu0 %v1177, 17
        %v1189 = vpop.permute.xlu0 %1188
        %1190 = vrot.lane.b32.xlu0 %v1179, 17
        %v1191 = vpop.permute.xlu0 %1190
        %1192 = vrot.lane.b32.xlu0 %v1181, 17
        %v1193 = vpop.permute.xlu0 %1192
        %1202 = vrot.lane.b32.xlu0 %v1174, 17
        %v1203 = vpop.permute.xlu0 %1202
        %1204 = vrot.lane.b32.xlu0 %v1176, 17
        %v1205 = vpop.permute.xlu0 %1204
        %1206 = vrot.lane.b32.xlu0 %v1178, 17
        %v1207 = vpop.permute.xlu0 %1206
        %1208 = vrot.lane.b32.xlu0 %v1180, 17
        %v1209 = vpop.permute.xlu0 %1208
        %vm1210 = vcmask 138240
        %v1211 = vsel %vm1210, %v1203, %v1187
        %v1212 = vsel %vm1210, %v1205, %v1189
        %v1213 = vsel %vm1210, %v1207, %v1191
        %v1214 = vsel %vm1210, %v1209, %v1193
        %v1223 = vsel %vm1210, %v1187, %v1203
        %v1224 = vsel %vm1210, %v1189, %v1205
        %v1225 = vsel %vm1210, %v1191, %v1207
        %v1226 = vsel %vm1210, %v1193, %v1209
        %v1227 = vlaneseq
        %v1228 = vshrl.u32 %v1227, 7
        %v1229 = vsub.s32 0, %v1228
        %v1230 = vrot.slane %v575, %v1229
        %v1231 = vlaneseq
        %v1232 = vshrl.u32 %v1231, 7
        %v1233 = vsub.s32 0, %v1232
        %v1234 = vrot.slane %v576, %v1233
        %v1235 = vmul.f32 %v1223, %v1230
        %v1236 = vmul.f32 %v1211, %v1234
        %v1237 = vmul.f32 %v1224, %v1230
        %v1238 = vmul.f32 %v1212, %v1234
        %v1239 = vmul.f32 %v1225, %v1230
        %v1240 = vmul.f32 %v1213, %v1234
        %v1241 = vmul.f32 %v1226, %v1230
        %v1242 = vmul.f32 %v1214, %v1234
        %1243 = vst [vmem:[#allocation2] sm:$0xff] %v1235
        %1244 = vst [vmem:[#allocation2 + $0x8] sm:$0xff] %v1236
        %1245 = vst [vmem:[#allocation2 + $0x10] sm:$0xff] %v1237
        %1246 = vst [vmem:[#allocation2 + $0x18] sm:$0xff] %v1238
        %1247 = vst [vmem:[#allocation2 + $0x20] sm:$0xff] %v1239
        %1248 = vst [vmem:[#allocation2 + $0x28] sm:$0xff] %v1240
        %1249 = vst [vmem:[#allocation2 + $0x30] sm:$0xff] %v1241
        %1250 = vst [vmem:[#allocation2 + $0x38] sm:$0xff] %v1242
        %1251 = vrot.lane.b32.xlu0 %v1175, 16
        %v1252 = vpop.permute.xlu0 %1251
        %1253 = vrot.lane.b32.xlu0 %v1177, 16
        %v1254 = vpop.permute.xlu0 %1253
        %1255 = vrot.lane.b32.xlu0 %v1179, 16
        %v1256 = vpop.permute.xlu0 %1255
        %1257 = vrot.lane.b32.xlu0 %v1181, 16
        %v1258 = vpop.permute.xlu0 %1257
        %1263 = vrot.lane.b32.xlu0 %v1174, 16
        %v1264 = vpop.permute.xlu0 %1263
        %1265 = vrot.lane.b32.xlu0 %v1176, 16
        %v1266 = vpop.permute.xlu0 %1265
        %1267 = vrot.lane.b32.xlu0 %v1178, 16
        %v1268 = vpop.permute.xlu0 %1267
        %1269 = vrot.lane.b32.xlu0 %v1180, 16
        %v1270 = vpop.permute.xlu0 %1269
        %v1271 = vsel %vm802, %v1264, %v1252
        %v1272 = vsel %vm802, %v1266, %v1254
        %v1273 = vsel %vm802, %v1268, %v1256
        %v1274 = vsel %vm802, %v1270, %v1258
        %v1283 = vsel %vm802, %v1252, %v1264
        %v1284 = vsel %vm802, %v1254, %v1266
        %v1285 = vsel %vm802, %v1256, %v1268
        %v1286 = vsel %vm802, %v1258, %v1270
        %v1287 = vlaneseq
        %v1288 = vshrl.u32 %v1287, 7
        %v1289 = vsub.s32 1, %v1288
        %v1290 = vrot.slane %v575, %v1289
        %v1291 = vlaneseq
        %v1292 = vshrl.u32 %v1291, 7
        %v1293 = vsub.s32 1, %v1292
        %v1294 = vrot.slane %v576, %v1293
        %v1295 = vmul.f32 %v1283, %v1290
        %v1296 = vmul.f32 %v1271, %v1294
        %v1297 = vmul.f32 %v1284, %v1290
        %v1298 = vmul.f32 %v1272, %v1294
        %v1299 = vmul.f32 %v1285, %v1290
        %v1300 = vmul.f32 %v1273, %v1294
        %v1301 = vmul.f32 %v1286, %v1290
        %v1302 = vmul.f32 %v1274, %v1294
        %1303 = vst [vmem:[#allocation2 + $0x40] sm:$0xff] %v1295
        %1304 = vst [vmem:[#allocation2 + $0x48] sm:$0xff] %v1296
        %1305 = vst [vmem:[#allocation2 + $0x50] sm:$0xff] %v1297
        %1306 = vst [vmem:[#allocation2 + $0x58] sm:$0xff] %v1298
        %1307 = vst [vmem:[#allocation2 + $0x60] sm:$0xff] %v1299
        %1308 = vst [vmem:[#allocation2 + $0x68] sm:$0xff] %v1300
        %1309 = vst [vmem:[#allocation2 + $0x70] sm:$0xff] %v1301
        %1310 = vst [vmem:[#allocation2 + $0x78] sm:$0xff] %v1302
        %1311 = vrot.lane.b32.xlu0 %v1175, 15
        %v1312 = vpop.permute.xlu0 %1311
        %1313 = vrot.lane.b32.xlu0 %v1177, 15
        %v1314 = vpop.permute.xlu0 %1313
        %1315 = vrot.lane.b32.xlu0 %v1179, 15
        %v1316 = vpop.permute.xlu0 %1315
        %1317 = vrot.lane.b32.xlu0 %v1181, 15
        %v1318 = vpop.permute.xlu0 %1317
        %1323 = vrot.lane.b32.xlu0 %v1174, 15
        %v1324 = vpop.permute.xlu0 %1323
        %1325 = vrot.lane.b32.xlu0 %v1176, 15
        %v1326 = vpop.permute.xlu0 %1325
        %1327 = vrot.lane.b32.xlu0 %v1178, 15
        %v1328 = vpop.permute.xlu0 %1327
        %1329 = vrot.lane.b32.xlu0 %v1180, 15
        %v1330 = vpop.permute.xlu0 %1329
        %vm1331 = vcmask 121856
        %v1332 = vsel %vm1331, %v1324, %v1312
        %v1333 = vsel %vm1331, %v1326, %v1314
        %v1334 = vsel %vm1331, %v1328, %v1316
        %v1335 = vsel %vm1331, %v1330, %v1318
        %v1344 = vsel %vm1331, %v1312, %v1324
        %v1345 = vsel %vm1331, %v1314, %v1326
        %v1346 = vsel %vm1331, %v1316, %v1328
        %v1347 = vsel %vm1331, %v1318, %v1330
        %v1348 = vlaneseq
        %v1349 = vshrl.u32 %v1348, 7
        %v1350 = vsub.s32 2, %v1349
        %v1351 = vrot.slane %v575, %v1350
        %v1352 = vlaneseq
        %v1353 = vshrl.u32 %v1352, 7
        %v1354 = vsub.s32 2, %v1353
        %v1355 = vrot.slane %v576, %v1354
        %v1356 = vmul.f32 %v1344, %v1351
        %v1357 = vmul.f32 %v1332, %v1355
        %v1358 = vmul.f32 %v1345, %v1351
        %v1359 = vmul.f32 %v1333, %v1355
        %v1360 = vmul.f32 %v1346, %v1351
        %v1361 = vmul.f32 %v1334, %v1355
        %v1362 = vmul.f32 %v1347, %v1351
        %v1363 = vmul.f32 %v1335, %v1355
        %1364 = vst [vmem:[#allocation2 + $0x80] sm:$0xff] %v1356
        %1365 = vst [vmem:[#allocation2 + $0x88] sm:$0xff] %v1357
        %1366 = vst [vmem:[#allocation2 + $0x90] sm:$0xff] %v1358
        %1367 = vst [vmem:[#allocation2 + $0x98] sm:$0xff] %v1359
        %1368 = vst [vmem:[#allocation2 + $0xa0] sm:$0xff] %v1360
        %1369 = vst [vmem:[#allocation2 + $0xa8] sm:$0xff] %v1361
        %1370 = vst [vmem:[#allocation2 + $0xb0] sm:$0xff] %v1362
        %1371 = vst [vmem:[#allocation2 + $0xb8] sm:$0xff] %v1363
        %1372 = vrot.lane.b32.xlu0 %v1175, 1
        %v1373 = vpop.permute.xlu0 %1372
        %1374 = vrot.lane.b32.xlu0 %v1177, 1
        %v1375 = vpop.permute.xlu0 %1374
        %1376 = vrot.lane.b32.xlu0 %v1179, 1
        %v1377 = vpop.permute.xlu0 %1376
        %1378 = vrot.lane.b32.xlu0 %v1181, 1
        %v1379 = vpop.permute.xlu0 %1378
        %1384 = vrot.lane.b32.xlu0 %v1174, 1
        %v1385 = vpop.permute.xlu0 %1384
        %1386 = vrot.lane.b32.xlu0 %v1176, 1
        %v1387 = vpop.permute.xlu0 %1386
        %1388 = vrot.lane.b32.xlu0 %v1178, 1
        %v1389 = vpop.permute.xlu0 %1388
        %1390 = vrot.lane.b32.xlu0 %v1180, 1
        %v1391 = vpop.permute.xlu0 %1390
        %vm1392 = vcmask 7168
        %v1393 = vsel %vm1392, %v1385, %v1373
        %v1394 = vsel %vm1392, %v1387, %v1375
        %v1395 = vsel %vm1392, %v1389, %v1377
        %v1396 = vsel %vm1392, %v1391, %v1379
        %v1405 = vsel %vm1392, %v1373, %v1385
        %v1406 = vsel %vm1392, %v1375, %v1387
        %v1407 = vsel %vm1392, %v1377, %v1389
        %v1408 = vsel %vm1392, %v1379, %v1391
        %v1409 = vlaneseq
        %v1410 = vshrl.u32 %v1409, 7
        %v1411 = vsub.s32 3, %v1410
        %v1412 = vrot.slane %v575, %v1411
        %v1413 = vlaneseq
        %v1414 = vshrl.u32 %v1413, 7
        %v1415 = vsub.s32 3, %v1414
        %v1416 = vrot.slane %v576, %v1415
        %v1417 = vmul.f32 %v1405, %v1412
        %v1418 = vmul.f32 %v1393, %v1416
        %v1419 = vmul.f32 %v1406, %v1412
        %v1420 = vmul.f32 %v1394, %v1416
        %v1421 = vmul.f32 %v1407, %v1412
        %v1422 = vmul.f32 %v1395, %v1416
        %v1423 = vmul.f32 %v1408, %v1412
        %v1424 = vmul.f32 %v1396, %v1416
        %1425 = vst [vmem:[#allocation2 + $0xc0] sm:$0xff] %v1417
        %1426 = vst [vmem:[#allocation2 + $0xc8] sm:$0xff] %v1418
        %1427 = vst [vmem:[#allocation2 + $0xd0] sm:$0xff] %v1419
        %1428 = vst [vmem:[#allocation2 + $0xd8] sm:$0xff] %v1420
        %1429 = vst [vmem:[#allocation2 + $0xe0] sm:$0xff] %v1421
        %1430 = vst [vmem:[#allocation2 + $0xe8] sm:$0xff] %v1422
        %1431 = vst [vmem:[#allocation2 + $0xf0] sm:$0xff] %v1423
        %1432 = vst [vmem:[#allocation2 + $0xf8] sm:$0xff] %v1424
        %v1433 = vlaneseq
        %v1434 = vshrl.u32 %v1433, 7
        %v1435 = vsub.s32 4, %v1434
        %v1436 = vrot.slane %v575, %v1435
        %v1437 = vlaneseq
        %v1438 = vshrl.u32 %v1437, 7
        %v1439 = vsub.s32 4, %v1438
        %v1440 = vrot.slane %v576, %v1439
        %v1441 = vmul.f32 %v1174, %v1436
        %v1442 = vmul.f32 %v1175, %v1440
        %v1443 = vmul.f32 %v1176, %v1436
        %v1444 = vmul.f32 %v1177, %v1440
        %v1445 = vmul.f32 %v1178, %v1436
        %v1446 = vmul.f32 %v1179, %v1440
        %v1447 = vmul.f32 %v1180, %v1436
        %v1448 = vmul.f32 %v1181, %v1440
        %1449 = vst [vmem:[#allocation2 + $0x100] sm:$0xff] %v1441
        %1450 = vst [vmem:[#allocation2 + $0x108] sm:$0xff] %v1442
        %1451 = vst [vmem:[#allocation2 + $0x110] sm:$0xff] %v1443
        %1452 = vst [vmem:[#allocation2 + $0x118] sm:$0xff] %v1444
        %1453 = vst [vmem:[#allocation2 + $0x120] sm:$0xff] %v1445
        %1454 = vst [vmem:[#allocation2 + $0x128] sm:$0xff] %v1446
        %1455 = vst [vmem:[#allocation2 + $0x130] sm:$0xff] %v1447
        %1456 = vst [vmem:[#allocation2 + $0x138] sm:$0xff] %v1448
        %1457 = vrot.lane.b32.xlu0 %v1174, 127
        %v1458 = vpop.permute.xlu0 %1457
        %1459 = vrot.lane.b32.xlu0 %v1175, 127
        %v1460 = vpop.permute.xlu0 %1459
        %1461 = vrot.lane.b32.xlu0 %v1176, 127
        %v1462 = vpop.permute.xlu0 %1461
        %1463 = vrot.lane.b32.xlu0 %v1177, 127
        %v1464 = vpop.permute.xlu0 %1463
        %1465 = vrot.lane.b32.xlu0 %v1178, 127
        %v1466 = vpop.permute.xlu0 %1465
        %1467 = vrot.lane.b32.xlu0 %v1179, 127
        %v1468 = vpop.permute.xlu0 %1467
        %1469 = vrot.lane.b32.xlu0 %v1180, 127
        %v1470 = vpop.permute.xlu0 %1469
        %1471 = vrot.lane.b32.xlu0 %v1181, 127
        %v1472 = vpop.permute.xlu0 %1471
        %vm1473 = vcmask 1039360
        %v1474 = vsel %vm1473, %v1458, %v1460
        %v1475 = vsel %vm1473, %v1462, %v1464
        %v1476 = vsel %vm1473, %v1466, %v1468
        %v1477 = vsel %vm1473, %v1470, %v1472
        %v1490 = vsel %vm1473, %v1460, %v1458
        %v1491 = vsel %vm1473, %v1464, %v1462
        %v1492 = vsel %vm1473, %v1468, %v1466
        %v1493 = vsel %vm1473, %v1472, %v1470
        %v1494 = vlaneseq
        %v1495 = vshrl.u32 %v1494, 7
        %v1496 = vsub.s32 5, %v1495
        %v1497 = vrot.slane %v575, %v1496
        %v1498 = vlaneseq
        %v1499 = vshrl.u32 %v1498, 7
        %v1500 = vsub.s32 5, %v1499
        %v1501 = vrot.slane %v576, %v1500
        %v1502 = vmul.f32 %v1474, %v1497
        %v1503 = vmul.f32 %v1490, %v1501
        %v1504 = vmul.f32 %v1475, %v1497
        %v1505 = vmul.f32 %v1491, %v1501
        %v1506 = vmul.f32 %v1476, %v1497
        %v1507 = vmul.f32 %v1492, %v1501
        %v1508 = vmul.f32 %v1477, %v1497
        %v1509 = vmul.f32 %v1493, %v1501
        %1510 = vst [vmem:[#allocation2 + $0x140] sm:$0xff] %v1502
        %1511 = vst [vmem:[#allocation2 + $0x148] sm:$0xff] %v1503
        %1512 = vst [vmem:[#allocation2 + $0x150] sm:$0xff] %v1504
        %1513 = vst [vmem:[#allocation2 + $0x158] sm:$0xff] %v1505
        %1514 = vst [vmem:[#allocation2 + $0x160] sm:$0xff] %v1506
        %1515 = vst [vmem:[#allocation2 + $0x168] sm:$0xff] %v1507
        %1516 = vst [vmem:[#allocation2 + $0x170] sm:$0xff] %v1508
        %1517 = vst [vmem:[#allocation2 + $0x178] sm:$0xff] %v1509
        %1518 = vrot.lane.b32.xlu0 %v1174, 113
        %v1519 = vpop.permute.xlu0 %1518
        %1520 = vrot.lane.b32.xlu0 %v1175, 113
        %v1521 = vpop.permute.xlu0 %1520
        %1522 = vrot.lane.b32.xlu0 %v1176, 113
        %v1523 = vpop.permute.xlu0 %1522
        %1524 = vrot.lane.b32.xlu0 %v1177, 113
        %v1525 = vpop.permute.xlu0 %1524
        %1526 = vrot.lane.b32.xlu0 %v1178, 113
        %v1527 = vpop.permute.xlu0 %1526
        %1528 = vrot.lane.b32.xlu0 %v1179, 113
        %v1529 = vpop.permute.xlu0 %1528
        %1530 = vrot.lane.b32.xlu0 %v1180, 113
        %v1531 = vpop.permute.xlu0 %1530
        %1532 = vrot.lane.b32.xlu0 %v1181, 113
        %v1533 = vpop.permute.xlu0 %1532
        %vm1534 = vcmask 924672
        %v1535 = vsel %vm1534, %v1519, %v1521
        %v1536 = vsel %vm1534, %v1523, %v1525
        %v1537 = vsel %vm1534, %v1527, %v1529
        %v1538 = vsel %vm1534, %v1531, %v1533
        %v1551 = vsel %vm1534, %v1521, %v1519
        %v1552 = vsel %vm1534, %v1525, %v1523
        %v1553 = vsel %vm1534, %v1529, %v1527
        %v1554 = vsel %vm1534, %v1533, %v1531
        %v1555 = vlaneseq
        %v1556 = vshrl.u32 %v1555, 7
        %v1557 = vsub.s32 6, %v1556
        %v1558 = vrot.slane %v575, %v1557
        %v1559 = vlaneseq
        %v1560 = vshrl.u32 %v1559, 7
        %v1561 = vsub.s32 6, %v1560
        %v1562 = vrot.slane %v576, %v1561
        %v1563 = vmul.f32 %v1535, %v1558
        %v1564 = vmul.f32 %v1551, %v1562
        %v1565 = vmul.f32 %v1536, %v1558
        %v1566 = vmul.f32 %v1552, %v1562
        %v1567 = vmul.f32 %v1537, %v1558
        %v1568 = vmul.f32 %v1553, %v1562
        %v1569 = vmul.f32 %v1538, %v1558
        %v1570 = vmul.f32 %v1554, %v1562
        %1571 = vst [vmem:[#allocation2 + $0x180] sm:$0xff] %v1563
        %1572 = vst [vmem:[#allocation2 + $0x188] sm:$0xff] %v1564
        %1573 = vst [vmem:[#allocation2 + $0x190] sm:$0xff] %v1565
        %1574 = vst [vmem:[#allocation2 + $0x198] sm:$0xff] %v1566
        %1575 = vst [vmem:[#allocation2 + $0x1a0] sm:$0xff] %v1567
        %1576 = vst [vmem:[#allocation2 + $0x1a8] sm:$0xff] %v1568
        %1577 = vst [vmem:[#allocation2 + $0x1b0] sm:$0xff] %v1569
        %1578 = vst [vmem:[#allocation2 + $0x1b8] sm:$0xff] %v1570
        %1579 = vrot.lane.b32.xlu0 %v1174, 112
        %v1580 = vpop.permute.xlu0 %1579
        %1581 = vrot.lane.b32.xlu0 %v1175, 112
        %v1582 = vpop.permute.xlu0 %1581
        %1583 = vrot.lane.b32.xlu0 %v1176, 112
        %v1584 = vpop.permute.xlu0 %1583
        %1585 = vrot.lane.b32.xlu0 %v1177, 112
        %v1586 = vpop.permute.xlu0 %1585
        %1587 = vrot.lane.b32.xlu0 %v1178, 112
        %v1588 = vpop.permute.xlu0 %1587
        %1589 = vrot.lane.b32.xlu0 %v1179, 112
        %v1590 = vpop.permute.xlu0 %1589
        %1591 = vrot.lane.b32.xlu0 %v1180, 112
        %v1592 = vpop.permute.xlu0 %1591
        %1593 = vrot.lane.b32.xlu0 %v1181, 112
        %v1594 = vpop.permute.xlu0 %1593
        %vm1595 = vcmask 916480
        %v1596 = vsel %vm1595, %v1580, %v1582
        %v1597 = vsel %vm1595, %v1584, %v1586
        %v1598 = vsel %vm1595, %v1588, %v1590
        %v1599 = vsel %vm1595, %v1592, %v1594
        %v1612 = vsel %vm1595, %v1582, %v1580
        %v1613 = vsel %vm1595, %v1586, %v1584
        %v1614 = vsel %vm1595, %v1590, %v1588
        %v1615 = vsel %vm1595, %v1594, %v1592
        %v1616 = vlaneseq
        %v1617 = vshrl.u32 %v1616, 7
        %v1618 = vsub.s32 7, %v1617
        %v1619 = vrot.slane %v575, %v1618
        %v1620 = vlaneseq
        %v1621 = vshrl.u32 %v1620, 7
        %v1622 = vsub.s32 7, %v1621
        %v1623 = vrot.slane %v576, %v1622
        %v1624 = vmul.f32 %v1596, %v1619
        %v1625 = vmul.f32 %v1612, %v1623
        %v1626 = vmul.f32 %v1597, %v1619
        %v1627 = vmul.f32 %v1613, %v1623
        %v1628 = vmul.f32 %v1598, %v1619
        %v1629 = vmul.f32 %v1614, %v1623
        %v1630 = vmul.f32 %v1599, %v1619
        %v1631 = vmul.f32 %v1615, %v1623
        %1632 = vst [vmem:[#allocation2 + $0x1c0] sm:$0xff] %v1624
        %1633 = vst [vmem:[#allocation2 + $0x1c8] sm:$0xff] %v1625
        %1634 = vst [vmem:[#allocation2 + $0x1d0] sm:$0xff] %v1626
        %1635 = vst [vmem:[#allocation2 + $0x1d8] sm:$0xff] %v1627
        %1636 = vst [vmem:[#allocation2 + $0x1e0] sm:$0xff] %v1628
        %1637 = vst [vmem:[#allocation2 + $0x1e8] sm:$0xff] %v1629
        %1638 = vst [vmem:[#allocation2 + $0x1f0] sm:$0xff] %v1630
        %1639 = vst [vmem:[#allocation2 + $0x1f8] sm:$0xff] %v1631
        %1640 = vrot.lane.b32.xlu0 %v1174, 111
        %v1641 = vpop.permute.xlu0 %1640
        %1642 = vrot.lane.b32.xlu0 %v1175, 111
        %v1643 = vpop.permute.xlu0 %1642
        %1644 = vrot.lane.b32.xlu0 %v1176, 111
        %v1645 = vpop.permute.xlu0 %1644
        %1646 = vrot.lane.b32.xlu0 %v1177, 111
        %v1647 = vpop.permute.xlu0 %1646
        %1648 = vrot.lane.b32.xlu0 %v1178, 111
        %v1649 = vpop.permute.xlu0 %1648
        %1650 = vrot.lane.b32.xlu0 %v1179, 111
        %v1651 = vpop.permute.xlu0 %1650
        %1652 = vrot.lane.b32.xlu0 %v1180, 111
        %v1653 = vpop.permute.xlu0 %1652
        %1654 = vrot.lane.b32.xlu0 %v1181, 111
        %v1655 = vpop.permute.xlu0 %1654
        %vm1656 = vcmask 908288
        %v1657 = vsel %vm1656, %v1641, %v1643
        %v1658 = vsel %vm1656, %v1645, %v1647
        %v1659 = vsel %vm1656, %v1649, %v1651
        %v1660 = vsel %vm1656, %v1653, %v1655
        %v1673 = vsel %vm1656, %v1643, %v1641
        %v1674 = vsel %vm1656, %v1647, %v1645
        %v1675 = vsel %vm1656, %v1651, %v1649
        %v1676 = vsel %vm1656, %v1655, %v1653
        %v1677 = vlaneseq
        %v1678 = vshrl.u32 %v1677, 7
        %v1679 = vsub.s32 0, %v1678
        %v1680 = vrot.slane %v577, %v1679
        %v1681 = vlaneseq
        %v1682 = vshrl.u32 %v1681, 7
        %v1683 = vsub.s32 0, %v1682
        %v1684 = vrot.slane %v578, %v1683
        %v1685 = vmul.f32 %v1657, %v1680
        %v1686 = vmul.f32 %v1673, %v1684
        %v1687 = vmul.f32 %v1658, %v1680
        %v1688 = vmul.f32 %v1674, %v1684
        %v1689 = vmul.f32 %v1659, %v1680
        %v1690 = vmul.f32 %v1675, %v1684
        %v1691 = vmul.f32 %v1660, %v1680
        %v1692 = vmul.f32 %v1676, %v1684
        %1693 = vst [vmem:[#allocation2 + $0x200] sm:$0xff] %v1685
        %1694 = vst [vmem:[#allocation2 + $0x208] sm:$0xff] %v1686
        %1695 = vst [vmem:[#allocation2 + $0x210] sm:$0xff] %v1687
        %1696 = vst [vmem:[#allocation2 + $0x218] sm:$0xff] %v1688
        %1697 = vst [vmem:[#allocation2 + $0x220] sm:$0xff] %v1689
        %1698 = vst [vmem:[#allocation2 + $0x228] sm:$0xff] %v1690
        %1699 = vst [vmem:[#allocation2 + $0x230] sm:$0xff] %v1691
        %1700 = vst [vmem:[#allocation2 + $0x238] sm:$0xff] %v1692
        %v1701 = vld [vmem:[%s3] sm:$0xff]
        %v1702 = vld [vmem:[%s3 + $0x8] sm:$0xff]
        %v1703 = vld [vmem:[%s3 + $0x10] sm:$0xff]
        %v1704 = vld [vmem:[%s3 + $0x18] sm:$0xff]
        %v1705 = vld [vmem:[%s3 + $0x20] sm:$0xff]
        %v1706 = vld [vmem:[%s3 + $0x28] sm:$0xff]
        %v1707 = vld [vmem:[%s3 + $0x30] sm:$0xff]
        %v1708 = vld [vmem:[%s3 + $0x38] sm:$0xff]
        %v1709 = vld [vmem:[%s3 + $0x40] sm:$0xff]
        %v1710 = vld [vmem:[%s3 + $0x48] sm:$0xff]
        %v1711 = vld [vmem:[%s3 + $0x50] sm:$0xff]
        %v1712 = vld [vmem:[%s3 + $0x58] sm:$0xff]
        %v1713 = vld [vmem:[#allocation2] sm:$0xff]
        %v1714 = vld [vmem:[#allocation2 + $0x8] sm:$0xff]
        %v1715 = vld [vmem:[#allocation2 + $0x10] sm:$0xff]
        %v1716 = vld [vmem:[#allocation2 + $0x18] sm:$0xff]
        %v1717 = vld [vmem:[#allocation2 + $0x20] sm:$0xff]
        %v1718 = vld [vmem:[#allocation2 + $0x28] sm:$0xff]
        %v1719 = vld [vmem:[#allocation2 + $0x30] sm:$0xff]
        %v1720 = vld [vmem:[#allocation2 + $0x38] sm:$0xff]
        %v1721 = vld [vmem:[#allocation2 + $0x40] sm:$0xff]
        %v1722 = vld [vmem:[#allocation2 + $0x48] sm:$0xff]
        %v1723 = vld [vmem:[#allocation2 + $0x50] sm:$0xff]
        %v1724 = vld [vmem:[#allocation2 + $0x58] sm:$0xff]
        %v1725 = vld [vmem:[#allocation2 + $0x60] sm:$0xff]
        %v1726 = vld [vmem:[#allocation2 + $0x68] sm:$0xff]
        %v1727 = vld [vmem:[#allocation2 + $0x70] sm:$0xff]
        %v1728 = vld [vmem:[#allocation2 + $0x78] sm:$0xff]
        %v1729 = vld [vmem:[#allocation2 + $0x80] sm:$0xff]
        %v1730 = vld [vmem:[#allocation2 + $0x88] sm:$0xff]
        %v1731 = vld [vmem:[#allocation2 + $0x90] sm:$0xff]
        %v1732 = vld [vmem:[#allocation2 + $0x98] sm:$0xff]
        %v1733 = vld [vmem:[#allocation2 + $0xa0] sm:$0xff]
        %v1734 = vld [vmem:[#allocation2 + $0xa8] sm:$0xff]
        %v1735 = vld [vmem:[#allocation2 + $0xb0] sm:$0xff]
        %v1736 = vld [vmem:[#allocation2 + $0xb8] sm:$0xff]
        %v1737 = vld [vmem:[#allocation2 + $0xc0] sm:$0xff]
        %v1738 = vld [vmem:[#allocation2 + $0xc8] sm:$0xff]
        %v1739 = vld [vmem:[#allocation2 + $0xd0] sm:$0xff]
        %v1740 = vld [vmem:[#allocation2 + $0xd8] sm:$0xff]
        %v1741 = vld [vmem:[#allocation2 + $0xe0] sm:$0xff]
        %v1742 = vld [vmem:[#allocation2 + $0xe8] sm:$0xff]
        %v1743 = vld [vmem:[#allocation2 + $0xf0] sm:$0xff]
        %v1744 = vld [vmem:[#allocation2 + $0xf8] sm:$0xff]
        %v1745 = vld [vmem:[#allocation2 + $0x100] sm:$0xff]
        %v1746 = vld [vmem:[#allocation2 + $0x108] sm:$0xff]
        %v1747 = vld [vmem:[#allocation2 + $0x110] sm:$0xff]
        %v1748 = vld [vmem:[#allocation2 + $0x118] sm:$0xff]
        %v1749 = vld [vmem:[#allocation2 + $0x120] sm:$0xff]
        %v1750 = vld [vmem:[#allocation2 + $0x128] sm:$0xff]
        %v1751 = vld [vmem:[#allocation2 + $0x130] sm:$0xff]
        %v1752 = vld [vmem:[#allocation2 + $0x138] sm:$0xff]
        %v1753 = vld [vmem:[#allocation2 + $0x140] sm:$0xff]
        %v1754 = vld [vmem:[#allocation2 + $0x148] sm:$0xff]
        %v1755 = vld [vmem:[#allocation2 + $0x150] sm:$0xff]
        %v1756 = vld [vmem:[#allocation2 + $0x158] sm:$0xff]
        %v1757 = vld [vmem:[#allocation2 + $0x160] sm:$0xff]
        %v1758 = vld [vmem:[#allocation2 + $0x168] sm:$0xff]
        %v1759 = vld [vmem:[#allocation2 + $0x170] sm:$0xff]
        %v1760 = vld [vmem:[#allocation2 + $0x178] sm:$0xff]
        %v1761 = vld [vmem:[#allocation2 + $0x180] sm:$0xff]
        %v1762 = vld [vmem:[#allocation2 + $0x188] sm:$0xff]
        %v1763 = vld [vmem:[#allocation2 + $0x190] sm:$0xff]
        %v1764 = vld [vmem:[#allocation2 + $0x198] sm:$0xff]
        %v1765 = vld [vmem:[#allocation2 + $0x1a0] sm:$0xff]
        %v1766 = vld [vmem:[#allocation2 + $0x1a8] sm:$0xff]
        %v1767 = vld [vmem:[#allocation2 + $0x1b0] sm:$0xff]
        %v1768 = vld [vmem:[#allocation2 + $0x1b8] sm:$0xff]
        %v1769 = vld [vmem:[#allocation2 + $0x1c0] sm:$0xff]
        %v1770 = vld [vmem:[#allocation2 + $0x1c8] sm:$0xff]
        %v1771 = vld [vmem:[#allocation2 + $0x1d0] sm:$0xff]
        %v1772 = vld [vmem:[#allocation2 + $0x1d8] sm:$0xff]
        %v1773 = vld [vmem:[#allocation2 + $0x1e0] sm:$0xff]
        %v1774 = vld [vmem:[#allocation2 + $0x1e8] sm:$0xff]
        %v1775 = vld [vmem:[#allocation2 + $0x1f0] sm:$0xff]
        %v1776 = vld [vmem:[#allocation2 + $0x1f8] sm:$0xff]
        %v1777 = vld [vmem:[#allocation2 + $0x200] sm:$0xff]
        %v1778 = vld [vmem:[#allocation2 + $0x208] sm:$0xff]
        %v1779 = vld [vmem:[#allocation2 + $0x210] sm:$0xff]
        %v1780 = vld [vmem:[#allocation2 + $0x218] sm:$0xff]
        %v1781 = vld [vmem:[#allocation2 + $0x220] sm:$0xff]
        %v1782 = vld [vmem:[#allocation2 + $0x228] sm:$0xff]
        %v1783 = vld [vmem:[#allocation2 + $0x230] sm:$0xff]
        %v1784 = vld [vmem:[#allocation2 + $0x238] sm:$0xff]
        %v1786 = vsel %vm712, %v1703, 0
        %v1789 = vsel %vm712, %v1706, 0
        %v1792 = vsel %vm712, %v1709, 0
        %v1795 = vsel %vm712, %v1712, 0
        %1797 = vmatprep.subr.mxu0 %v1714
        %1798 = vmatpush1.msra.mxu0 %v1713
        %1799 = vmatprep.subr.mxu0 %v1716
        %1800 = vmatpush1.msra.mxu0 %v1715
        %1801 = vmatprep.subr.mxu0 %v1718
        %1802 = vmatpush1.msra.mxu0 %v1717
        %1803 = vmatprep.subr.mxu0 %v1720
        %1804 = vmatpush1.msra.mxu0 %v1719
        %1805 = vmatprep.subr.mxu0 %v1722
        %1806 = vmatpush1.msra.mxu0 %v1721
        %1807 = vmatprep.subr.mxu0 %v1724
        %1808 = vmatpush1.msra.mxu0 %v1723
        %1809 = vmatprep.subr.mxu0 %v1726
        %1810 = vmatpush1.msra.mxu0 %v1725
        %1811 = vmatprep.subr.mxu0 %v1728
        %1812 = vmatpush1.msra.mxu0 %v1727
        %1813 = vmatprep.subr.mxu0 %v1730
        %1814 = vmatpush1.msra.mxu0 %v1729
        %1815 = vmatprep.subr.mxu0 %v1732
        %1816 = vmatpush1.msra.mxu0 %v1731
        %1817 = vmatprep.subr.mxu0 %v1734
        %1818 = vmatpush1.msra.mxu0 %v1733
        %1819 = vmatprep.subr.mxu0 %v1736
        %1820 = vmatpush1.msra.mxu0 %v1735
        %1821 = vmatprep.subr.mxu0 %v1738
        %1822 = vmatpush1.msra.mxu0 %v1737
        %1823 = vmatprep.subr.mxu0 %v1740
        %1824 = vmatpush1.msra.mxu0 %v1739
        %1825 = vmatprep.subr.mxu0 %v1742
        %1826 = vmatpush1.msra.mxu0 %v1741
        %1827 = vmatprep.subr.mxu0 %v1744
        %1828 = vmatpush1.msra.mxu0 %v1743
        %1829 = vmatprep.subr.mxu0 %v1746
        %1830 = vmatpush1.msra.mxu0 %v1745
        %1831 = vmatprep.subr.mxu0 %v1748
        %1832 = vmatpush1.msra.mxu0 %v1747
        %1833 = vmatprep.subr.mxu0 %v1750
        %1834 = vmatpush1.msra.mxu0 %v1749
        %1835 = vmatprep.subr.mxu0 %v1752
        %1836 = vmatpush1.msra.mxu0 %v1751
        %1837 = vmatprep.subr.mxu0 %v1754
        %1838 = vmatpush1.msra.mxu0 %v1753
        %1839 = vmatprep.subr.mxu0 %v1756
        %1840 = vmatpush1.msra.mxu0 %v1755
        %1841 = vmatprep.subr.mxu0 %v1758
        %1842 = vmatpush1.msra.mxu0 %v1757
        %1843 = vmatprep.subr.mxu0 %v1760
        %1844 = vmatpush1.msra.mxu0 %v1759
        %1845 = vmatprep.subr.mxu0 %v1762
        %1846 = vmatpush1.msra.mxu0 %v1761
        %1847 = vmatprep.subr.mxu0 %v1764
        %1848 = vmatpush1.msra.mxu0 %v1763
        %1849 = vmatprep.subr.mxu0 %v1766
        %1850 = vmatpush1.msra.mxu0 %v1765
        %1851 = vmatprep.subr.mxu0 %v1768
        %1852 = vmatpush1.msra.mxu0 %v1767
        %1853 = vmatprep.subr.mxu0 %v1770
        %1854 = vmatpush1.msra.mxu0 %v1769
        %1855 = vmatprep.subr.mxu0 %v1772
        %1856 = vmatpush1.msra.mxu0 %v1771
        %1857 = vmatprep.subr.mxu0 %v1774
        %1858 = vmatpush1.msra.mxu0 %v1773
        %1859 = vmatprep.subr.mxu0 %v1776
        %1860 = vmatpush1.msra.mxu0 %v1775
        %1861 = vmatprep.mubr.f32.mxu0 %v1702
        %1862 = vmatmul.mubr.f32.gmra.mrb[0].mxu0 %v1701
        %v1863 = vpop.f32.mrb[0].mxu0
        %v1864 = vadd.f32 0.0, %v1863
        %v1865 = vpop.f32.mrb[0].mxu0
        %v1866 = vadd.f32 0.0, %v1865
        %1867 = vmatprep.mubr.f32.mxu0 %v1705
        %1868 = vmatmul.mubr.f32.gmra.mrb[0].mxu0 %v1704
        %v1869 = vpop.f32.mrb[0].mxu0
        %v1870 = vadd.f32 0.0, %v1869
        %v1871 = vpop.f32.mrb[0].mxu0
        %v1872 = vadd.f32 0.0, %v1871
        %1873 = vmatprep.mubr.f32.mxu0 %v1708
        %1874 = vmatmul.mubr.f32.gmra.mrb[0].mxu0 %v1707
        %v1875 = vpop.f32.mrb[0].mxu0
        %v1876 = vadd.f32 0.0, %v1875
        %v1877 = vpop.f32.mrb[0].mxu0
        %v1878 = vadd.f32 0.0, %v1877
        %1879 = vmatprep.mubr.f32.mxu0 %v1711
        %1880 = vmatmul.mubr.f32.gmra.mrb[0].mxu0 %v1710
        %v1881 = vpop.f32.mrb[0].mxu0
        %v1882 = vadd.f32 0.0, %v1881
        %v1883 = vpop.f32.mrb[0].mxu0
        %v1884 = vadd.f32 0.0, %v1883
        %1885 = vdwg.mxu0
        %1886 = vmatprep.subr.mxu0 %v1778
        %1887 = vmatpush1.msra.mxu0 %v1777
        %1888 = vmatprep.subr.mxu0 %v1780
        %1889 = vmatpush1.msra.mxu0 %v1779
        %1890 = vmatprep.subr.mxu0 %v1782
        %1891 = vmatpush1.msra.mxu0 %v1781
        %1892 = vmatprep.subr.mxu0 %v1784
        %1893 = vmatpush1.msra.mxu0 %v1783
        %1894 = vmatprep.subr.mxu0 0.0
        %1895 = vmatpush1.msra.mxu0 0.0
        %1896 = vmatprep.subr.mxu0 0.0
        %1897 = vmatpush1.msra.mxu0 0.0
        %1898 = vmatprep.subr.mxu0 0.0
        %1899 = vmatpush1.msra.mxu0 0.0
        %1900 = vmatprep.subr.mxu0 0.0
        %1901 = vmatpush1.msra.mxu0 0.0
        %1902 = vmatprep.subr.mxu0 0.0
        %1903 = vmatpush1.msra.mxu0 0.0
        %1904 = vmatprep.subr.mxu0 0.0
        %1905 = vmatpush1.msra.mxu0 0.0
        %1906 = vmatprep.subr.mxu0 0.0
        %1907 = vmatpush1.msra.mxu0 0.0
        %1908 = vmatprep.subr.mxu0 0.0
        %1909 = vmatpush1.msra.mxu0 0.0
        %1910 = vmatprep.subr.mxu0 0.0
        %1911 = vmatpush1.msra.mxu0 0.0
        %1912 = vmatprep.subr.mxu0 0.0
        %1913 = vmatpush1.msra.mxu0 0.0
        %1914 = vmatprep.subr.mxu0 0.0
        %1915 = vmatpush1.msra.mxu0 0.0
        %1916 = vmatprep.subr.mxu0 0.0
        %1917 = vmatpush1.msra.mxu0 0.0
        %1918 = vmatprep.subr.mxu0 0.0
        %1919 = vmatpush1.msra.mxu0 0.0
        %1920 = vmatprep.subr.mxu0 0.0
        %1921 = vmatpush1.msra.mxu0 0.0
        %1922 = vmatprep.subr.mxu0 0.0
        %1923 = vmatpush1.msra.mxu0 0.0
        %1924 = vmatprep.subr.mxu0 0.0
        %1925 = vmatpush1.msra.mxu0 0.0
        %1926 = vmatprep.subr.mxu0 0.0
        %1927 = vmatpush1.msra.mxu0 0.0
        %1928 = vmatprep.subr.mxu0 0.0
        %1929 = vmatpush1.msra.mxu0 0.0
        %1930 = vmatprep.subr.mxu0 0.0
        %1931 = vmatpush1.msra.mxu0 0.0
        %1932 = vmatprep.subr.mxu0 0.0
        %1933 = vmatpush1.msra.mxu0 0.0
        %1934 = vmatprep.subr.mxu0 0.0
        %1935 = vmatpush1.msra.mxu0 0.0
        %1936 = vmatprep.subr.mxu0 0.0
        %1937 = vmatpush1.msra.mxu0 0.0
        %1938 = vmatprep.subr.mxu0 0.0
        %1939 = vmatpush1.msra.mxu0 0.0
        %1940 = vmatprep.subr.mxu0 0.0
        %1941 = vmatpush1.msra.mxu0 0.0
        %1942 = vmatprep.subr.mxu0 0.0
        %1943 = vmatpush1.msra.mxu0 0.0
        %1944 = vmatprep.subr.mxu0 0.0
        %1945 = vmatpush1.msra.mxu0 0.0
        %1946 = vmatprep.subr.mxu0 0.0
        %1947 = vmatpush1.msra.mxu0 0.0
        %1948 = vmatprep.subr.mxu0 0.0
        %1949 = vmatpush1.msra.mxu0 0.0
        %1950 = vmatprep.mubr.f32.mxu0 0.0
        %1951 = vmatmul.mubr.f32.gmra.mrb[0].mxu0 %v1786
        %v1952 = vpop.f32.mrb[0].mxu0
        %v1953 = vadd.f32 %v1864, %v1952
        %v1954 = vpop.f32.mrb[0].mxu0
        %v1955 = vadd.f32 %v1866, %v1954
        %1956 = vmatprep.mubr.f32.mxu0 0.0
        %1957 = vmatmul.mubr.f32.gmra.mrb[0].mxu0 %v1789
        %v1958 = vpop.f32.mrb[0].mxu0
        %v1959 = vadd.f32 %v1870, %v1958
        %v1960 = vpop.f32.mrb[0].mxu0
        %v1961 = vadd.f32 %v1872, %v1960
        %1962 = vmatprep.mubr.f32.mxu0 0.0
        %1963 = vmatmul.mubr.f32.gmra.mrb[0].mxu0 %v1792
        %v1964 = vpop.f32.mrb[0].mxu0
        %v1965 = vadd.f32 %v1876, %v1964
        %v1966 = vpop.f32.mrb[0].mxu0
        %v1967 = vadd.f32 %v1878, %v1966
        %1968 = vmatprep.mubr.f32.mxu0 0.0
        %1969 = vmatmul.mubr.f32.gmra.mrb[0].mxu0 %v1795
        %v1970 = vpop.f32.mrb[0].mxu0
        %v1971 = vadd.f32 %v1882, %v1970
        %v1972 = vpop.f32.mrb[0].mxu0
        %v1973 = vadd.f32 %v1884, %v1972
        %1974 = vdwg.mxu0
        %v1975 = vld [vmem:[%s8] sm:$0xff]
        %v1976 = vld [vmem:[%s8 + $0x8] sm:$0xff]
        %v1977 = vld [vmem:[%s8 + $0x10] sm:$0xff]
        %v1978 = vld [vmem:[%s8 + $0x18] sm:$0xff]
        %v1979 = vld [vmem:[%s9] sm:$0xff]
        %v1980 = vld [vmem:[%s9 + $0x8] sm:$0xff]
        %v1981 = vld [vmem:[%s9 + $0x10] sm:$0xff]
        %v1982 = vld [vmem:[%s9 + $0x18] sm:$0xff]
        %1983 = vmatprep.subr.mxu0 %v1955
        %1984 = vmatpush1.msra.mxu0 %v1953
        %1985 = vmatprep.subr.mxu0 %v1961
        %1986 = vmatpush1.msra.mxu0 %v1959
        %1987 = vmatprep.subr.mxu0 %v1967
        %1988 = vmatpush1.msra.mxu0 %v1965
        %1989 = vmatprep.subr.mxu0 %v1973
        %1990 = vmatpush1.msra.mxu0 %v1971
        %1991 = vmatprep.subr.mxu0 0.0
        %1992 = vmatpush1.msra.mxu0 0.0
        %1993 = vmatprep.subr.mxu0 0.0
        %1994 = vmatpush1.msra.mxu0 0.0
        %1995 = vmatprep.subr.mxu0 0.0
        %1996 = vmatpush1.msra.mxu0 0.0
        %1997 = vmatprep.subr.mxu0 0.0
        %1998 = vmatpush1.msra.mxu0 0.0
        %1999 = vmatprep.subr.mxu0 0.0
        %2000 = vmatpush1.msra.mxu0 0.0
        %2001 = vmatprep.subr.mxu0 0.0
        %2002 = vmatpush1.msra.mxu0 0.0
        %2003 = vmatprep.subr.mxu0 0.0
        %2004 = vmatpush1.msra.mxu0 0.0
        %2005 = vmatprep.subr.mxu0 0.0
        %2006 = vmatpush1.msra.mxu0 0.0
        %2007 = vmatprep.subr.mxu0 0.0
        %2008 = vmatpush1.msra.mxu0 0.0
        %2009 = vmatprep.subr.mxu0 0.0
        %2010 = vmatpush1.msra.mxu0 0.0
        %2011 = vmatprep.subr.mxu0 0.0
        %2012 = vmatpush1.msra.mxu0 0.0
        %2013 = vmatprep.subr.mxu0 0.0
        %2014 = vmatpush1.msra.mxu0 0.0
        %2015 = vmatprep.subr.mxu0 0.0
        %2016 = vmatpush1.msra.mxu0 0.0
        %2017 = vmatprep.subr.mxu0 0.0
        %2018 = vmatpush1.msra.mxu0 0.0
        %2019 = vmatprep.subr.mxu0 0.0
        %2020 = vmatpush1.msra.mxu0 0.0
        %2021 = vmatprep.subr.mxu0 0.0
        %2022 = vmatpush1.msra.mxu0 0.0
        %2023 = vmatprep.subr.mxu0 0.0
        %2024 = vmatpush1.msra.mxu0 0.0
        %2025 = vmatprep.subr.mxu0 0.0
        %2026 = vmatpush1.msra.mxu0 0.0
        %2027 = vmatprep.subr.mxu0 0.0
        %2028 = vmatpush1.msra.mxu0 0.0
        %2029 = vmatprep.subr.mxu0 0.0
        %2030 = vmatpush1.msra.mxu0 0.0
        %2031 = vmatprep.subr.mxu0 0.0
        %2032 = vmatpush1.msra.mxu0 0.0
        %2033 = vmatprep.subr.mxu0 0.0
        %2034 = vmatpush1.msra.mxu0 0.0
        %2035 = vmatprep.subr.mxu0 0.0
        %2036 = vmatpush1.msra.mxu0 0.0
        %2037 = vmatprep.subr.mxu0 0.0
        %2038 = vmatpush1.msra.mxu0 0.0
        %2039 = vmatprep.subr.mxu0 0.0
        %2040 = vmatpush1.msra.mxu0 0.0
        %2041 = vmatprep.subr.mxu0 0.0
        %2042 = vmatpush1.msra.mxu0 0.0
        %2043 = vmatprep.subr.mxu0 0.0
        %2044 = vmatpush1.msra.mxu0 0.0
        %2045 = vmatprep.subr.mxu0 0.0
        %2046 = vmatpush1.msra.mxu0 0.0
        %2047 = vmatprep.mubr.f32.mxu0 0.0
        %2048 = vmatmul.mubr.f32.gmra.mrb[0].mxu0 %v714
        %v2049 = vpop.f32.mrb[0].mxu0
        %v2050 = vadd.f32 0.0, %v2049
        %v2051 = vpop.f32.mrb[0].mxu0
        %v2052 = vadd.f32 0.0, %v2051
        %2053 = vmatprep.mubr.f32.mxu0 0.0
        %2054 = vmatmul.mubr.f32.gmra.mrb[0].mxu0 %v717
        %v2055 = vpop.f32.mrb[0].mxu0
        %v2056 = vadd.f32 0.0, %v2055
        %v2057 = vpop.f32.mrb[0].mxu0
        %v2058 = vadd.f32 0.0, %v2057
        %2059 = vdwg.mxu0
        %v2060 = vadd.f32 %v2050, %v2052
        %2061 = vadd.xlane.f32.xlu0 %v2060
        %v2062 = vpop.xlane.xlu0 %2061
        %v2063 = vadd.f32 %v2056, %v2058
        %2064 = vadd.xlane.f32.xlu0 %v2063
        %v2065 = vpop.xlane.xlu0 %2064
        %2066 = vmatprep.subr.mxu0 0.0
        %2067 = vmatpush1.msra.mxu0 %v2062
        %2068 = vmatprep.subr.mxu0 0.0
        %2069 = vmatpush1.msra.mxu0 %v2065
        %2070 = vmatprep.subr.mxu0 0.0
        %2071 = vmatpush1.msra.mxu0 0.0
        %2072 = vmatprep.subr.mxu0 0.0
        %2073 = vmatpush1.msra.mxu0 0.0
        %2074 = vmatprep.subr.mxu0 0.0
        %2075 = vmatpush1.msra.mxu0 0.0
        %2076 = vmatprep.subr.mxu0 0.0
        %2077 = vmatpush1.msra.mxu0 0.0
        %2078 = vmatprep.subr.mxu0 0.0
        %2079 = vmatpush1.msra.mxu0 0.0
        %2080 = vmatprep.subr.mxu0 0.0
        %2081 = vmatpush1.msra.mxu0 0.0
        %2082 = vmatprep.subr.mxu0 0.0
        %2083 = vmatpush1.msra.mxu0 0.0
        %2084 = vmatprep.subr.mxu0 0.0
        %2085 = vmatpush1.msra.mxu0 0.0
        %2086 = vmatprep.subr.mxu0 0.0
        %2087 = vmatpush1.msra.mxu0 0.0
        %2088 = vmatprep.subr.mxu0 0.0
        %2089 = vmatpush1.msra.mxu0 0.0
        %2090 = vmatprep.subr.mxu0 0.0
        %2091 = vmatpush1.msra.mxu0 0.0
        %2092 = vmatprep.subr.mxu0 0.0
        %2093 = vmatpush1.msra.mxu0 0.0
        %2094 = vmatprep.subr.mxu0 0.0
        %2095 = vmatpush1.msra.mxu0 0.0
        %2096 = vmatprep.subr.mxu0 0.0
        %2097 = vmatpush1.msra.mxu0 0.0
        %2098 = vmatprep.subr.mxu0 0.0
        %2099 = vmatpush1.msra.mxu0 0.0
        %2100 = vmatprep.subr.mxu0 0.0
        %2101 = vmatpush1.msra.mxu0 0.0
        %2102 = vmatprep.subr.mxu0 0.0
        %2103 = vmatpush1.msra.mxu0 0.0
        %2104 = vmatprep.subr.mxu0 0.0
        %2105 = vmatpush1.msra.mxu0 0.0
        %2106 = vmatprep.subr.mxu0 0.0
        %2107 = vmatpush1.msra.mxu0 0.0
        %2108 = vmatprep.subr.mxu0 0.0
        %2109 = vmatpush1.msra.mxu0 0.0
        %2110 = vmatprep.subr.mxu0 0.0
        %2111 = vmatpush1.msra.mxu0 0.0
        %2112 = vmatprep.subr.mxu0 0.0
        %2113 = vmatpush1.msra.mxu0 0.0
        %2114 = vmatprep.subr.mxu0 0.0
        %2115 = vmatpush1.msra.mxu0 0.0
        %2116 = vmatprep.subr.mxu0 0.0
        %2117 = vmatpush1.msra.mxu0 0.0
        %2118 = vmatprep.subr.mxu0 0.0
        %2119 = vmatpush1.msra.mxu0 0.0
        %2120 = vmatprep.subr.mxu0 0.0
        %2121 = vmatpush1.msra.mxu0 0.0
        %2122 = vmatprep.subr.mxu0 0.0
        %2123 = vmatpush1.msra.mxu0 0.0
        %2124 = vmatprep.subr.mxu0 0.0
        %2125 = vmatpush1.msra.mxu0 0.0
        %2126 = vmatprep.subr.mxu0 0.0
        %2127 = vmatpush1.msra.mxu0 0.0
        %2128 = vmatprep.subr.mxu0 0.0
        %2129 = vmatpush1.msra.mxu0 0.0
        %2130 = vmatprep.mubr.f32.mxu0 0.0
        %2131 = vmatmul.mubr.f32.gmra.mrb[0].mxu0 %v804
        %v2132 = vpop.f32.mrb[0].mxu0
        %v2133 = vadd.f32 0.0, %v2132
        %v2134 = vpop.f32.mrb[0].mxu0
        %2135 = vmatprep.mubr.f32.mxu0 0.0
        %2136 = vmatmul.mubr.f32.gmra.mrb[0].mxu0 %v807
        %v2137 = vpop.f32.mrb[0].mxu0
        %v2138 = vadd.f32 0.0, %v2137
        %v2139 = vpop.f32.mrb[0].mxu0
        %2140 = vmatprep.mubr.f32.mxu0 0.0
        %2141 = vmatmul.mubr.f32.gmra.mrb[0].mxu0 %v810
        %v2142 = vpop.f32.mrb[0].mxu0
        %v2143 = vadd.f32 0.0, %v2142
        %v2144 = vpop.f32.mrb[0].mxu0
        %2145 = vmatprep.mubr.f32.mxu0 0.0
        %2146 = vmatmul.mubr.f32.gmra.mrb[0].mxu0 %v813
        %v2147 = vpop.f32.mrb[0].mxu0
        %v2148 = vadd.f32 0.0, %v2147
        %v2149 = vpop.f32.mrb[0].mxu0
        %2150 = vdwg.mxu0
        %v2151 = vmul.f32 %v2133, 0.001953125
        %v2152 = vmul.f32 %v2138, 0.001953125
        %v2153 = vmul.f32 %v2143, 0.001953125
        %v2154 = vmul.f32 %v2148, 0.001953125
        %2156 = vset.pattern.permute.xlu0 0
        %2157 = vperm.xlu0 %2156, %v2151
        %v2158 = vpop.permute.xlu0 %2157
        %2161 = vset.pattern.permute.xlu0 0
        %2162 = vperm.xlu0 %2161, %v2152
        %v2163 = vpop.permute.xlu0 %2162
        %2166 = vset.pattern.permute.xlu0 0
        %2167 = vperm.xlu0 %2166, %v2153
        %v2168 = vpop.permute.xlu0 %2167
        %2171 = vset.pattern.permute.xlu0 0
        %2172 = vperm.xlu0 %2171, %v2154
        %v2173 = vpop.permute.xlu0 %2172
        %v2175 = vsub.f32 %v1953, %v2158
        %v2176 = vsub.f32 %v1955, %v2158
        %v2177 = vsub.f32 %v1959, %v2163
        %v2178 = vsub.f32 %v1961, %v2163
        %v2179 = vsub.f32 %v1965, %v2168
        %v2180 = vsub.f32 %v1967, %v2168
        %v2181 = vsub.f32 %v1971, %v2173
        %v2182 = vsub.f32 %v1973, %v2173
        %v2183 = vmul.f32 %v2175, %v2175
        %v2184 = vmul.f32 %v2176, %v2176
        %v2185 = vmul.f32 %v2177, %v2177
        %v2186 = vmul.f32 %v2178, %v2178
        %v2187 = vmul.f32 %v2179, %v2179
        %v2188 = vmul.f32 %v2180, %v2180
        %v2189 = vmul.f32 %v2181, %v2181
        %v2190 = vmul.f32 %v2182, %v2182
        %2191 = vmatprep.subr.mxu0 %v2184
        %2192 = vmatpush1.msra.mxu0 %v2183
        %2193 = vmatprep.subr.mxu0 %v2186
        %2194 = vmatpush1.msra.mxu0 %v2185
        %2195 = vmatprep.subr.mxu0 %v2188
        %2196 = vmatpush1.msra.mxu0 %v2187
        %2197 = vmatprep.subr.mxu0 %v2190
        %2198 = vmatpush1.msra.mxu0 %v2189
        %2199 = vmatprep.subr.mxu0 0.0
        %2200 = vmatpush1.msra.mxu0 0.0
        %2201 = vmatprep.subr.mxu0 0.0
        %2202 = vmatpush1.msra.mxu0 0.0
        %2203 = vmatprep.subr.mxu0 0.0
        %2204 = vmatpush1.msra.mxu0 0.0
        %2205 = vmatprep.subr.mxu0 0.0
        %2206 = vmatpush1.msra.mxu0 0.0
        %2207 = vmatprep.subr.mxu0 0.0
        %2208 = vmatpush1.msra.mxu0 0.0
        %2209 = vmatprep.subr.mxu0 0.0
        %2210 = vmatpush1.msra.mxu0 0.0
        %2211 = vmatprep.subr.mxu0 0.0
        %2212 = vmatpush1.msra.mxu0 0.0
        %2213 = vmatprep.subr.mxu0 0.0
        %2214 = vmatpush1.msra.mxu0 0.0
        %2215 = vmatprep.subr.mxu0 0.0
        %2216 = vmatpush1.msra.mxu0 0.0
        %2217 = vmatprep.subr.mxu0 0.0
        %2218 = vmatpush1.msra.mxu0 0.0
        %2219 = vmatprep.subr.mxu0 0.0
        %2220 = vmatpush1.msra.mxu0 0.0
        %2221 = vmatprep.subr.mxu0 0.0
        %2222 = vmatpush1.msra.mxu0 0.0
        %2223 = vmatprep.subr.mxu0 0.0
        %2224 = vmatpush1.msra.mxu0 0.0
        %2225 = vmatprep.subr.mxu0 0.0
        %2226 = vmatpush1.msra.mxu0 0.0
        %2227 = vmatprep.subr.mxu0 0.0
        %2228 = vmatpush1.msra.mxu0 0.0
        %2229 = vmatprep.subr.mxu0 0.0
        %2230 = vmatpush1.msra.mxu0 0.0
        %2231 = vmatprep.subr.mxu0 0.0
        %2232 = vmatpush1.msra.mxu0 0.0
        %2233 = vmatprep.subr.mxu0 0.0
        %2234 = vmatpush1.msra.mxu0 0.0
        %2235 = vmatprep.subr.mxu0 0.0
        %2236 = vmatpush1.msra.mxu0 0.0
        %2237 = vmatprep.subr.mxu0 0.0
        %2238 = vmatpush1.msra.mxu0 0.0
        %2239 = vmatprep.subr.mxu0 0.0
        %2240 = vmatpush1.msra.mxu0 0.0
        %2241 = vmatprep.subr.mxu0 0.0
        %2242 = vmatpush1.msra.mxu0 0.0
        %2243 = vmatprep.subr.mxu0 0.0
        %2244 = vmatpush1.msra.mxu0 0.0
        %2245 = vmatprep.subr.mxu0 0.0
        %2246 = vmatpush1.msra.mxu0 0.0
        %2247 = vmatprep.subr.mxu0 0.0
        %2248 = vmatpush1.msra.mxu0 0.0
        %2249 = vmatprep.subr.mxu0 0.0
        %2250 = vmatpush1.msra.mxu0 0.0
        %2251 = vmatprep.subr.mxu0 0.0
        %2252 = vmatpush1.msra.mxu0 0.0
        %2253 = vmatprep.subr.mxu0 0.0
        %2254 = vmatpush1.msra.mxu0 0.0
        %2255 = vmatprep.mubr.f32.mxu0 0.0
        %2256 = vmatmul.mubr.f32.gmra.mrb[0].mxu0 %v714
        %v2257 = vpop.f32.mrb[0].mxu0
        %v2258 = vadd.f32 0.0, %v2257
        %v2259 = vpop.f32.mrb[0].mxu0
        %v2260 = vadd.f32 0.0, %v2259
        %2261 = vmatprep.mubr.f32.mxu0 0.0
        %2262 = vmatmul.mubr.f32.gmra.mrb[0].mxu0 %v717
        %v2263 = vpop.f32.mrb[0].mxu0
        %v2264 = vadd.f32 0.0, %v2263
        %v2265 = vpop.f32.mrb[0].mxu0
        %v2266 = vadd.f32 0.0, %v2265
        %2267 = vdwg.mxu0
        %v2268 = vadd.f32 %v2258, %v2260
        %2269 = vadd.xlane.f32.xlu0 %v2268
        %v2270 = vpop.xlane.xlu0 %2269
        %v2271 = vadd.f32 %v2264, %v2266
        %2272 = vadd.xlane.f32.xlu0 %v2271
        %v2273 = vpop.xlane.xlu0 %2272
        %v2274 = vmul.f32 %v2270, 0.001953125
        %v2275 = vmul.f32 %v2273, 0.001953125
        %v2276 = vadd.f32 %v2274, 1e-05
        %v2277 = vadd.f32 %v2275, 1e-05
        %v2278 = vrsqrt.pop %v2276
        %v2279 = vrsqrt.pop %v2277
        %2280 = vmatprep.subr.mxu0 0.0
        %2281 = vmatpush1.msra.mxu0 %v2278
        %2282 = vmatprep.subr.mxu0 0.0
        %2283 = vmatpush1.msra.mxu0 %v2279
        %2284 = vmatprep.subr.mxu0 0.0
        %2285 = vmatpush1.msra.mxu0 0.0
        %2286 = vmatprep.subr.mxu0 0.0
        %2287 = vmatpush1.msra.mxu0 0.0
        %2288 = vmatprep.subr.mxu0 0.0
        %2289 = vmatpush1.msra.mxu0 0.0
        %2290 = vmatprep.subr.mxu0 0.0
        %2291 = vmatpush1.msra.mxu0 0.0
        %2292 = vmatprep.subr.mxu0 0.0
        %2293 = vmatpush1.msra.mxu0 0.0
        %2294 = vmatprep.subr.mxu0 0.0
        %2295 = vmatpush1.msra.mxu0 0.0
        %2296 = vmatprep.subr.mxu0 0.0
        %2297 = vmatpush1.msra.mxu0 0.0
        %2298 = vmatprep.subr.mxu0 0.0
        %2299 = vmatpush1.msra.mxu0 0.0
        %2300 = vmatprep.subr.mxu0 0.0
        %2301 = vmatpush1.msra.mxu0 0.0
        %2302 = vmatprep.subr.mxu0 0.0
        %2303 = vmatpush1.msra.mxu0 0.0
        %2304 = vmatprep.subr.mxu0 0.0
        %2305 = vmatpush1.msra.mxu0 0.0
        %2306 = vmatprep.subr.mxu0 0.0
        %2307 = vmatpush1.msra.mxu0 0.0
        %2308 = vmatprep.subr.mxu0 0.0
        %2309 = vmatpush1.msra.mxu0 0.0
        %2310 = vmatprep.subr.mxu0 0.0
        %2311 = vmatpush1.msra.mxu0 0.0
        %2312 = vmatprep.subr.mxu0 0.0
        %2313 = vmatpush1.msra.mxu0 0.0
        %2314 = vmatprep.subr.mxu0 0.0
        %2315 = vmatpush1.msra.mxu0 0.0
        %2316 = vmatprep.subr.mxu0 0.0
        %2317 = vmatpush1.msra.mxu0 0.0
        %2318 = vmatprep.subr.mxu0 0.0
        %2319 = vmatpush1.msra.mxu0 0.0
        %2320 = vmatprep.subr.mxu0 0.0
        %2321 = vmatpush1.msra.mxu0 0.0
        %2322 = vmatprep.subr.mxu0 0.0
        %2323 = vmatpush1.msra.mxu0 0.0
        %2324 = vmatprep.subr.mxu0 0.0
        %2325 = vmatpush1.msra.mxu0 0.0
        %2326 = vmatprep.subr.mxu0 0.0
        %2327 = vmatpush1.msra.mxu0 0.0
        %2328 = vmatprep.subr.mxu0 0.0
        %2329 = vmatpush1.msra.mxu0 0.0
        %2330 = vmatprep.subr.mxu0 0.0
        %2331 = vmatpush1.msra.mxu0 0.0
        %2332 = vmatprep.subr.mxu0 0.0
        %2333 = vmatpush1.msra.mxu0 0.0
        %2334 = vmatprep.subr.mxu0 0.0
        %2335 = vmatpush1.msra.mxu0 0.0
        %2336 = vmatprep.subr.mxu0 0.0
        %2337 = vmatpush1.msra.mxu0 0.0
        %2338 = vmatprep.subr.mxu0 0.0
        %2339 = vmatpush1.msra.mxu0 0.0
        %2340 = vmatprep.subr.mxu0 0.0
        %2341 = vmatpush1.msra.mxu0 0.0
        %2342 = vmatprep.subr.mxu0 0.0
        %2343 = vmatpush1.msra.mxu0 0.0
        %2344 = vmatprep.mubr.f32.mxu0 0.0
        %2345 = vmatmul.mubr.f32.gmra.mrb[0].mxu0 %v804
        %v2346 = vpop.f32.mrb[0].mxu0
        %v2347 = vadd.f32 0.0, %v2346
        %v2348 = vpop.f32.mrb[0].mxu0
        %2349 = vmatprep.mubr.f32.mxu0 0.0
        %2350 = vmatmul.mubr.f32.gmra.mrb[0].mxu0 %v807
        %v2351 = vpop.f32.mrb[0].mxu0
        %v2352 = vadd.f32 0.0, %v2351
        %v2353 = vpop.f32.mrb[0].mxu0
        %2354 = vmatprep.mubr.f32.mxu0 0.0
        %2355 = vmatmul.mubr.f32.gmra.mrb[0].mxu0 %v810
        %v2356 = vpop.f32.mrb[0].mxu0
        %v2357 = vadd.f32 0.0, %v2356
        %v2358 = vpop.f32.mrb[0].mxu0
        %2359 = vmatprep.mubr.f32.mxu0 0.0
        %2360 = vmatmul.mubr.f32.gmra.mrb[0].mxu0 %v813
        %v2361 = vpop.f32.mrb[0].mxu0
        %v2362 = vadd.f32 0.0, %v2361
        %v2363 = vpop.f32.mrb[0].mxu0
        %2364 = vdwg.mxu0
        %v2365 = vmul.f32 %v2347, %v1975
        %v2366 = vmul.f32 %v2352, %v1976
        %v2367 = vmul.f32 %v2357, %v1977
        %v2368 = vmul.f32 %v2362, %v1978
        %2370 = vset.pattern.permute.xlu0 0
        %2371 = vperm.xlu0 %2370, %v2365
        %v2372 = vpop.permute.xlu0 %2371
        %2375 = vset.pattern.permute.xlu0 0
        %2376 = vperm.xlu0 %2375, %v2366
        %v2377 = vpop.permute.xlu0 %2376
        %2380 = vset.pattern.permute.xlu0 0
        %2381 = vperm.xlu0 %2380, %v2367
        %v2382 = vpop.permute.xlu0 %2381
        %2385 = vset.pattern.permute.xlu0 0
        %2386 = vperm.xlu0 %2385, %v2368
        %v2387 = vpop.permute.xlu0 %2386
        %v2389 = vmul.f32 %v2175, %v2372
        %v2390 = vmul.f32 %v2176, %v2372
        %v2391 = vmul.f32 %v2177, %v2377
        %v2392 = vmul.f32 %v2178, %v2377
        %v2393 = vmul.f32 %v2179, %v2382
        %v2394 = vmul.f32 %v2180, %v2382
        %v2395 = vmul.f32 %v2181, %v2387
        %v2396 = vmul.f32 %v2182, %v2387
        %2398 = vset.pattern.permute.xlu0 0
        %2399 = vperm.xlu0 %2398, %v1979
        %v2400 = vpop.permute.xlu0 %2399
        %2403 = vset.pattern.permute.xlu0 0
        %2404 = vperm.xlu0 %2403, %v1980
        %v2405 = vpop.permute.xlu0 %2404
        %2408 = vset.pattern.permute.xlu0 0
        %2409 = vperm.xlu0 %2408, %v1981
        %v2410 = vpop.permute.xlu0 %2409
        %2413 = vset.pattern.permute.xlu0 0
        %2414 = vperm.xlu0 %2413, %v1982
        %v2415 = vpop.permute.xlu0 %2414
        %v2417 = vadd.f32 %v2389, %v2400
        %v2418 = vadd.f32 %v2390, %v2400
        %v2419 = vadd.f32 %v2391, %v2405
        %v2420 = vadd.f32 %v2392, %v2405
        %v2421 = vadd.f32 %v2393, %v2410
        %v2422 = vadd.f32 %v2394, %v2410
        %v2423 = vadd.f32 %v2395, %v2415
        %v2424 = vadd.f32 %v2396, %v2415
        %v2425 = vmax.f32 %v2417, 0.0
        %v2426 = vmax.f32 %v2418, 0.0
        %v2427 = vmax.f32 %v2419, 0.0
        %v2428 = vmax.f32 %v2420, 0.0
        %v2429 = vmax.f32 %v2421, 0.0
        %v2430 = vmax.f32 %v2422, 0.0
        %v2431 = vmax.f32 %v2423, 0.0
        %v2432 = vmax.f32 %v2424, 0.0
        %v2433 = vld [vmem:[%s4] sm:$0xff]
        %v2434 = vld [vmem:[%s4 + $0x8] sm:$0xff]
        %v2435 = vld [vmem:[%s4 + $0x10] sm:$0xff]
        %v2436 = vld [vmem:[%s4 + $0x18] sm:$0xff]
        %v2438 = vsel %vm712, %v2433, 0
        %v2441 = vsel %vm712, %v2434, 0
        %v2444 = vsel %vm712, %v2435, 0
        %v2447 = vsel %vm712, %v2436, 0
        %2449 = vmatprep.subr.mxu0 %v2426
        %2450 = vmatpush1.msra.mxu0 %v2425
        %2451 = vmatprep.subr.mxu0 %v2428
        %2452 = vmatpush1.msra.mxu0 %v2427
        %2453 = vmatprep.subr.mxu0 %v2430
        %2454 = vmatpush1.msra.mxu0 %v2429
        %2455 = vmatprep.subr.mxu0 %v2432
        %2456 = vmatpush1.msra.mxu0 %v2431
        %2457 = vmatprep.subr.mxu0 0.0
        %2458 = vmatpush1.msra.mxu0 0.0
        %2459 = vmatprep.subr.mxu0 0.0
        %2460 = vmatpush1.msra.mxu0 0.0
        %2461 = vmatprep.subr.mxu0 0.0
        %2462 = vmatpush1.msra.mxu0 0.0
        %2463 = vmatprep.subr.mxu0 0.0
        %2464 = vmatpush1.msra.mxu0 0.0
        %2465 = vmatprep.subr.mxu0 0.0
        %2466 = vmatpush1.msra.mxu0 0.0
        %2467 = vmatprep.subr.mxu0 0.0
        %2468 = vmatpush1.msra.mxu0 0.0
        %2469 = vmatprep.subr.mxu0 0.0
        %2470 = vmatpush1.msra.mxu0 0.0
        %2471 = vmatprep.subr.mxu0 0.0
        %2472 = vmatpush1.msra.mxu0 0.0
        %2473 = vmatprep.subr.mxu0 0.0
        %2474 = vmatpush1.msra.mxu0 0.0
        %2475 = vmatprep.subr.mxu0 0.0
        %2476 = vmatpush1.msra.mxu0 0.0
        %2477 = vmatprep.subr.mxu0 0.0
        %2478 = vmatpush1.msra.mxu0 0.0
        %2479 = vmatprep.subr.mxu0 0.0
        %2480 = vmatpush1.msra.mxu0 0.0
        %2481 = vmatprep.subr.mxu0 0.0
        %2482 = vmatpush1.msra.mxu0 0.0
        %2483 = vmatprep.subr.mxu0 0.0
        %2484 = vmatpush1.msra.mxu0 0.0
        %2485 = vmatprep.subr.mxu0 0.0
        %2486 = vmatpush1.msra.mxu0 0.0
        %2487 = vmatprep.subr.mxu0 0.0
        %2488 = vmatpush1.msra.mxu0 0.0
        %2489 = vmatprep.subr.mxu0 0.0
        %2490 = vmatpush1.msra.mxu0 0.0
        %2491 = vmatprep.subr.mxu0 0.0
        %2492 = vmatpush1.msra.mxu0 0.0
        %2493 = vmatprep.subr.mxu0 0.0
        %2494 = vmatpush1.msra.mxu0 0.0
        %2495 = vmatprep.subr.mxu0 0.0
        %2496 = vmatpush1.msra.mxu0 0.0
        %2497 = vmatprep.subr.mxu0 0.0
        %2498 = vmatpush1.msra.mxu0 0.0
        %2499 = vmatprep.subr.mxu0 0.0
        %2500 = vmatpush1.msra.mxu0 0.0
        %2501 = vmatprep.subr.mxu0 0.0
        %2502 = vmatpush1.msra.mxu0 0.0
        %2503 = vmatprep.subr.mxu0 0.0
        %2504 = vmatpush1.msra.mxu0 0.0
        %2505 = vmatprep.subr.mxu0 0.0
        %2506 = vmatpush1.msra.mxu0 0.0
        %2507 = vmatprep.subr.mxu0 0.0
        %2508 = vmatpush1.msra.mxu0 0.0
        %2509 = vmatprep.subr.mxu0 0.0
        %2510 = vmatpush1.msra.mxu0 0.0
        %2511 = vmatprep.subr.mxu0 0.0
        %2512 = vmatpush1.msra.mxu0 0.0
        %2513 = vmatprep.mubr.f32.mxu0 0.0
        %2514 = vmatmul.mubr.f32.gmra.mrb[0].mxu0 %v2438
        %v2515 = vpop.f32.mrb[0].mxu0
        %v2516 = vadd.f32 0.0, %v2515
        %v2517 = vpop.f32.mrb[0].mxu0
        %v2518 = vadd.f32 0.0, %v2517
        %2519 = vmatprep.mubr.f32.mxu0 0.0
        %2520 = vmatmul.mubr.f32.gmra.mrb[0].mxu0 %v2441
        %v2521 = vpop.f32.mrb[0].mxu0
        %v2522 = vadd.f32 0.0, %v2521
        %v2523 = vpop.f32.mrb[0].mxu0
        %v2524 = vadd.f32 0.0, %v2523
        %2525 = vmatprep.mubr.f32.mxu0 0.0
        %2526 = vmatmul.mubr.f32.gmra.mrb[0].mxu0 %v2444
        %v2527 = vpop.f32.mrb[0].mxu0
        %v2528 = vadd.f32 0.0, %v2527
        %v2529 = vpop.f32.mrb[0].mxu0
        %v2530 = vadd.f32 0.0, %v2529
        %2531 = vmatprep.mubr.f32.mxu0 0.0
        %2532 = vmatmul.mubr.f32.gmra.mrb[0].mxu0 %v2447
        %v2533 = vpop.f32.mrb[0].mxu0
        %v2534 = vadd.f32 0.0, %v2533
        %v2535 = vpop.f32.mrb[0].mxu0
        %v2536 = vadd.f32 0.0, %v2535
        %2537 = vdwg.mxu0
        %v2538 = vld [vmem:[%s10] sm:$0xff]
        %v2539 = vld [vmem:[%s10 + $0x8] sm:$0xff]
        %v2540 = vld [vmem:[%s10 + $0x10] sm:$0xff]
        %v2541 = vld [vmem:[%s10 + $0x18] sm:$0xff]
        %v2542 = vld [vmem:[%s11] sm:$0xff]
        %v2543 = vld [vmem:[%s11 + $0x8] sm:$0xff]
        %v2544 = vld [vmem:[%s11 + $0x10] sm:$0xff]
        %v2545 = vld [vmem:[%s11 + $0x18] sm:$0xff]
        %v2547 = vsel %vm712, %v589, 0
        %v2550 = vsel %vm712, %v590, 0
        %2552 = vmatprep.subr.mxu0 %v2518
        %2553 = vmatpush1.msra.mxu0 %v2516
        %2554 = vmatprep.subr.mxu0 %v2524
        %2555 = vmatpush1.msra.mxu0 %v2522
        %2556 = vmatprep.subr.mxu0 %v2530
        %2557 = vmatpush1.msra.mxu0 %v2528
        %2558 = vmatprep.subr.mxu0 %v2536
        %2559 = vmatpush1.msra.mxu0 %v2534
        %2560 = vmatprep.subr.mxu0 0.0
        %2561 = vmatpush1.msra.mxu0 0.0
        %2562 = vmatprep.subr.mxu0 0.0
        %2563 = vmatpush1.msra.mxu0 0.0
        %2564 = vmatprep.subr.mxu0 0.0
        %2565 = vmatpush1.msra.mxu0 0.0
        %2566 = vmatprep.subr.mxu0 0.0
        %2567 = vmatpush1.msra.mxu0 0.0
        %2568 = vmatprep.subr.mxu0 0.0
        %2569 = vmatpush1.msra.mxu0 0.0
        %2570 = vmatprep.subr.mxu0 0.0
        %2571 = vmatpush1.msra.mxu0 0.0
        %2572 = vmatprep.subr.mxu0 0.0
        %2573 = vmatpush1.msra.mxu0 0.0
        %2574 = vmatprep.subr.mxu0 0.0
        %2575 = vmatpush1.msra.mxu0 0.0
        %2576 = vmatprep.subr.mxu0 0.0
        %2577 = vmatpush1.msra.mxu0 0.0
        %2578 = vmatprep.subr.mxu0 0.0
        %2579 = vmatpush1.msra.mxu0 0.0
        %2580 = vmatprep.subr.mxu0 0.0
        %2581 = vmatpush1.msra.mxu0 0.0
        %2582 = vmatprep.subr.mxu0 0.0
        %2583 = vmatpush1.msra.mxu0 0.0
        %2584 = vmatprep.subr.mxu0 0.0
        %2585 = vmatpush1.msra.mxu0 0.0
        %2586 = vmatprep.subr.mxu0 0.0
        %2587 = vmatpush1.msra.mxu0 0.0
        %2588 = vmatprep.subr.mxu0 0.0
        %2589 = vmatpush1.msra.mxu0 0.0
        %2590 = vmatprep.subr.mxu0 0.0
        %2591 = vmatpush1.msra.mxu0 0.0
        %2592 = vmatprep.subr.mxu0 0.0
        %2593 = vmatpush1.msra.mxu0 0.0
        %2594 = vmatprep.subr.mxu0 0.0
        %2595 = vmatpush1.msra.mxu0 0.0
        %2596 = vmatprep.subr.mxu0 0.0
        %2597 = vmatpush1.msra.mxu0 0.0
        %2598 = vmatprep.subr.mxu0 0.0
        %2599 = vmatpush1.msra.mxu0 0.0
        %2600 = vmatprep.subr.mxu0 0.0
        %2601 = vmatpush1.msra.mxu0 0.0
        %2602 = vmatprep.subr.mxu0 0.0
        %2603 = vmatpush1.msra.mxu0 0.0
        %2604 = vmatprep.subr.mxu0 0.0
        %2605 = vmatpush1.msra.mxu0 0.0
        %2606 = vmatprep.subr.mxu0 0.0
        %2607 = vmatpush1.msra.mxu0 0.0
        %2608 = vmatprep.subr.mxu0 0.0
        %2609 = vmatpush1.msra.mxu0 0.0
        %2610 = vmatprep.subr.mxu0 0.0
        %2611 = vmatpush1.msra.mxu0 0.0
        %2612 = vmatprep.subr.mxu0 0.0
        %2613 = vmatpush1.msra.mxu0 0.0
        %2614 = vmatprep.subr.mxu0 0.0
        %2615 = vmatpush1.msra.mxu0 0.0
        %2616 = vmatprep.mubr.f32.mxu0 0.0
        %2617 = vmatmul.mubr.f32.gmra.mrb[0].mxu0 %v2547
        %v2618 = vpop.f32.mrb[0].mxu0
        %v2619 = vadd.f32 0.0, %v2618
        %v2620 = vpop.f32.mrb[0].mxu0
        %v2621 = vadd.f32 0.0, %v2620
        %2622 = vmatprep.mubr.f32.mxu0 0.0
        %2623 = vmatmul.mubr.f32.gmra.mrb[0].mxu0 %v2550
        %v2624 = vpop.f32.mrb[0].mxu0
        %v2625 = vadd.f32 0.0, %v2624
        %v2626 = vpop.f32.mrb[0].mxu0
        %v2627 = vadd.f32 0.0, %v2626
        %2628 = vdwg.mxu0
        %v2629 = vadd.f32 %v2619, %v2621
        %2630 = vadd.xlane.f32.xlu0 %v2629
        %v2631 = vpop.xlane.xlu0 %2630
        %v2632 = vadd.f32 %v2625, %v2627
        %2633 = vadd.xlane.f32.xlu0 %v2632
        %v2634 = vpop.xlane.xlu0 %2633
        %v2636 = vsel %vm802, %v585, 0
        %v2639 = vsel %vm802, %v586, 0
        %v2642 = vsel %vm802, %v587, 0
        %v2645 = vsel %vm802, %v588, 0
        %2647 = vmatprep.subr.mxu0 0.0
        %2648 = vmatpush1.msra.mxu0 %v2631
        %2649 = vmatprep.subr.mxu0 0.0
        %2650 = vmatpush1.msra.mxu0 %v2634
        %2651 = vmatprep.subr.mxu0 0.0
        %2652 = vmatpush1.msra.mxu0 0.0
        %2653 = vmatprep.subr.mxu0 0.0
        %2654 = vmatpush1.msra.mxu0 0.0
        %2655 = vmatprep.subr.mxu0 0.0
        %2656 = vmatpush1.msra.mxu0 0.0
        %2657 = vmatprep.subr.mxu0 0.0
        %2658 = vmatpush1.msra.mxu0 0.0
        %2659 = vmatprep.subr.mxu0 0.0
        %2660 = vmatpush1.msra.mxu0 0.0
        %2661 = vmatprep.subr.mxu0 0.0
        %2662 = vmatpush1.msra.mxu0 0.0
        %2663 = vmatprep.subr.mxu0 0.0
        %2664 = vmatpush1.msra.mxu0 0.0
        %2665 = vmatprep.subr.mxu0 0.0
        %2666 = vmatpush1.msra.mxu0 0.0
        %2667 = vmatprep.subr.mxu0 0.0
        %2668 = vmatpush1.msra.mxu0 0.0
        %2669 = vmatprep.subr.mxu0 0.0
        %2670 = vmatpush1.msra.mxu0 0.0
        %2671 = vmatprep.subr.mxu0 0.0
        %2672 = vmatpush1.msra.mxu0 0.0
        %2673 = vmatprep.subr.mxu0 0.0
        %2674 = vmatpush1.msra.mxu0 0.0
        %2675 = vmatprep.subr.mxu0 0.0
        %2676 = vmatpush1.msra.mxu0 0.0
        %2677 = vmatprep.subr.mxu0 0.0
        %2678 = vmatpush1.msra.mxu0 0.0
        %2679 = vmatprep.subr.mxu0 0.0
        %2680 = vmatpush1.msra.mxu0 0.0
        %2681 = vmatprep.subr.mxu0 0.0
        %2682 = vmatpush1.msra.mxu0 0.0
        %2683 = vmatprep.subr.mxu0 0.0
        %2684 = vmatpush1.msra.mxu0 0.0
        %2685 = vmatprep.subr.mxu0 0.0
        %2686 = vmatpush1.msra.mxu0 0.0
        %2687 = vmatprep.subr.mxu0 0.0
        %2688 = vmatpush1.msra.mxu0 0.0
        %2689 = vmatprep.subr.mxu0 0.0
        %2690 = vmatpush1.msra.mxu0 0.0
        %2691 = vmatprep.subr.mxu0 0.0
        %2692 = vmatpush1.msra.mxu0 0.0
        %2693 = vmatprep.subr.mxu0 0.0
        %2694 = vmatpush1.msra.mxu0 0.0
        %2695 = vmatprep.subr.mxu0 0.0
        %2696 = vmatpush1.msra.mxu0 0.0
        %2697 = vmatprep.subr.mxu0 0.0
        %2698 = vmatpush1.msra.mxu0 0.0
        %2699 = vmatprep.subr.mxu0 0.0
        %2700 = vmatpush1.msra.mxu0 0.0
        %2701 = vmatprep.subr.mxu0 0.0
        %2702 = vmatpush1.msra.mxu0 0.0
        %2703 = vmatprep.subr.mxu0 0.0
        %2704 = vmatpush1.msra.mxu0 0.0
        %2705 = vmatprep.subr.mxu0 0.0
        %2706 = vmatpush1.msra.mxu0 0.0
        %2707 = vmatprep.subr.mxu0 0.0
        %2708 = vmatpush1.msra.mxu0 0.0
        %2709 = vmatprep.subr.mxu0 0.0
        %2710 = vmatpush1.msra.mxu0 0.0
        %2711 = vmatprep.mubr.f32.mxu0 0.0
        %2712 = vmatmul.mubr.f32.gmra.mrb[0].mxu0 %v2636
        %v2713 = vpop.f32.mrb[0].mxu0
        %v2714 = vadd.f32 0.0, %v2713
        %v2715 = vpop.f32.mrb[0].mxu0
        %2716 = vmatprep.mubr.f32.mxu0 0.0
        %2717 = vmatmul.mubr.f32.gmra.mrb[0].mxu0 %v2639
        %v2718 = vpop.f32.mrb[0].mxu0
        %v2719 = vadd.f32 0.0, %v2718
        %v2720 = vpop.f32.mrb[0].mxu0
        %2721 = vmatprep.mubr.f32.mxu0 0.0
        %2722 = vmatmul.mubr.f32.gmra.mrb[0].mxu0 %v2642
        %v2723 = vpop.f32.mrb[0].mxu0
        %v2724 = vadd.f32 0.0, %v2723
        %v2725 = vpop.f32.mrb[0].mxu0
        %2726 = vmatprep.mubr.f32.mxu0 0.0
        %2727 = vmatmul.mubr.f32.gmra.mrb[0].mxu0 %v2645
        %v2728 = vpop.f32.mrb[0].mxu0
        %v2729 = vadd.f32 0.0, %v2728
        %v2730 = vpop.f32.mrb[0].mxu0
        %2731 = vdwg.mxu0
        %v2732 = vmul.f32 %v2714, 0.001953125
        %v2733 = vmul.f32 %v2719, 0.001953125
        %v2734 = vmul.f32 %v2724, 0.001953125
        %v2735 = vmul.f32 %v2729, 0.001953125
        %2737 = vset.pattern.permute.xlu0 0
        %2738 = vperm.xlu0 %2737, %v2732
        %v2739 = vpop.permute.xlu0 %2738
        %2742 = vset.pattern.permute.xlu0 0
        %2743 = vperm.xlu0 %2742, %v2733
        %v2744 = vpop.permute.xlu0 %2743
        %2747 = vset.pattern.permute.xlu0 0
        %2748 = vperm.xlu0 %2747, %v2734
        %v2749 = vpop.permute.xlu0 %2748
        %2752 = vset.pattern.permute.xlu0 0
        %2753 = vperm.xlu0 %2752, %v2735
        %v2754 = vpop.permute.xlu0 %2753
        %v2756 = vsub.f32 %v2516, %v2739
        %v2757 = vsub.f32 %v2518, %v2739
        %v2758 = vsub.f32 %v2522, %v2744
        %v2759 = vsub.f32 %v2524, %v2744
        %v2760 = vsub.f32 %v2528, %v2749
        %v2761 = vsub.f32 %v2530, %v2749
        %v2762 = vsub.f32 %v2534, %v2754
        %v2763 = vsub.f32 %v2536, %v2754
        %v2764 = vmul.f32 %v2756, %v2756
        %v2765 = vmul.f32 %v2757, %v2757
        %v2766 = vmul.f32 %v2758, %v2758
        %v2767 = vmul.f32 %v2759, %v2759
        %v2768 = vmul.f32 %v2760, %v2760
        %v2769 = vmul.f32 %v2761, %v2761
        %v2770 = vmul.f32 %v2762, %v2762
        %v2771 = vmul.f32 %v2763, %v2763
        %2772 = vmatprep.subr.mxu0 %v2765
        %2773 = vmatpush1.msra.mxu0 %v2764
        %2774 = vmatprep.subr.mxu0 %v2767
        %2775 = vmatpush1.msra.mxu0 %v2766
        %2776 = vmatprep.subr.mxu0 %v2769
        %2777 = vmatpush1.msra.mxu0 %v2768
        %2778 = vmatprep.subr.mxu0 %v2771
        %2779 = vmatpush1.msra.mxu0 %v2770
        %2780 = vmatprep.subr.mxu0 0.0
        %2781 = vmatpush1.msra.mxu0 0.0
        %2782 = vmatprep.subr.mxu0 0.0
        %2783 = vmatpush1.msra.mxu0 0.0
        %2784 = vmatprep.subr.mxu0 0.0
        %2785 = vmatpush1.msra.mxu0 0.0
        %2786 = vmatprep.subr.mxu0 0.0
        %2787 = vmatpush1.msra.mxu0 0.0
        %2788 = vmatprep.subr.mxu0 0.0
        %2789 = vmatpush1.msra.mxu0 0.0
        %2790 = vmatprep.subr.mxu0 0.0
        %2791 = vmatpush1.msra.mxu0 0.0
        %2792 = vmatprep.subr.mxu0 0.0
        %2793 = vmatpush1.msra.mxu0 0.0
        %2794 = vmatprep.subr.mxu0 0.0
        %2795 = vmatpush1.msra.mxu0 0.0
        %2796 = vmatprep.subr.mxu0 0.0
        %2797 = vmatpush1.msra.mxu0 0.0
        %2798 = vmatprep.subr.mxu0 0.0
        %2799 = vmatpush1.msra.mxu0 0.0
        %2800 = vmatprep.subr.mxu0 0.0
        %2801 = vmatpush1.msra.mxu0 0.0
        %2802 = vmatprep.subr.mxu0 0.0
        %2803 = vmatpush1.msra.mxu0 0.0
        %2804 = vmatprep.subr.mxu0 0.0
        %2805 = vmatpush1.msra.mxu0 0.0
        %2806 = vmatprep.subr.mxu0 0.0
        %2807 = vmatpush1.msra.mxu0 0.0
        %2808 = vmatprep.subr.mxu0 0.0
        %2809 = vmatpush1.msra.mxu0 0.0
        %2810 = vmatprep.subr.mxu0 0.0
        %2811 = vmatpush1.msra.mxu0 0.0
        %2812 = vmatprep.subr.mxu0 0.0
        %2813 = vmatpush1.msra.mxu0 0.0
        %2814 = vmatprep.subr.mxu0 0.0
        %2815 = vmatpush1.msra.mxu0 0.0
        %2816 = vmatprep.subr.mxu0 0.0
        %2817 = vmatpush1.msra.mxu0 0.0
        %2818 = vmatprep.subr.mxu0 0.0
        %2819 = vmatpush1.msra.mxu0 0.0
        %2820 = vmatprep.subr.mxu0 0.0
        %2821 = vmatpush1.msra.mxu0 0.0
        %2822 = vmatprep.subr.mxu0 0.0
        %2823 = vmatpush1.msra.mxu0 0.0
        %2824 = vmatprep.subr.mxu0 0.0
        %2825 = vmatpush1.msra.mxu0 0.0
        %2826 = vmatprep.subr.mxu0 0.0
        %2827 = vmatpush1.msra.mxu0 0.0
        %2828 = vmatprep.subr.mxu0 0.0
        %2829 = vmatpush1.msra.mxu0 0.0
        %2830 = vmatprep.subr.mxu0 0.0
        %2831 = vmatpush1.msra.mxu0 0.0
        %2832 = vmatprep.subr.mxu0 0.0
        %2833 = vmatpush1.msra.mxu0 0.0
        %2834 = vmatprep.subr.mxu0 0.0
        %2835 = vmatpush1.msra.mxu0 0.0
        %2836 = vmatprep.mubr.f32.mxu0 0.0
        %2837 = vmatmul.mubr.f32.gmra.mrb[0].mxu0 %v2547
        %v2838 = vpop.f32.mrb[0].mxu0
        %v2839 = vadd.f32 0.0, %v2838
        %v2840 = vpop.f32.mrb[0].mxu0
        %v2841 = vadd.f32 0.0, %v2840
        %2842 = vmatprep.mubr.f32.mxu0 0.0
        %2843 = vmatmul.mubr.f32.gmra.mrb[0].mxu0 %v2550
        %v2844 = vpop.f32.mrb[0].mxu0
        %v2845 = vadd.f32 0.0, %v2844
        %v2846 = vpop.f32.mrb[0].mxu0
        %v2847 = vadd.f32 0.0, %v2846
        %2848 = vdwg.mxu0
        %v2849 = vadd.f32 %v2839, %v2841
        %2850 = vadd.xlane.f32.xlu0 %v2849
        %v2851 = vpop.xlane.xlu0 %2850
        %v2852 = vadd.f32 %v2845, %v2847
        %2853 = vadd.xlane.f32.xlu0 %v2852
        %v2854 = vpop.xlane.xlu0 %2853
        %v2855 = vmul.f32 %v2851, 0.001953125
        %v2856 = vmul.f32 %v2854, 0.001953125
        %v2857 = vadd.f32 %v2855, 1e-05
        %v2858 = vadd.f32 %v2856, 1e-05
        %v2859 = vrsqrt.pop %v2857
        %v2860 = vrsqrt.pop %v2858
        %2861 = vmatprep.subr.mxu0 0.0
        %2862 = vmatpush1.msra.mxu0 %v2859
        %2863 = vmatprep.subr.mxu0 0.0
        %2864 = vmatpush1.msra.mxu0 %v2860
        %2865 = vmatprep.subr.mxu0 0.0
        %2866 = vmatpush1.msra.mxu0 0.0
        %2867 = vmatprep.subr.mxu0 0.0
        %2868 = vmatpush1.msra.mxu0 0.0
        %2869 = vmatprep.subr.mxu0 0.0
        %2870 = vmatpush1.msra.mxu0 0.0
        %2871 = vmatprep.subr.mxu0 0.0
        %2872 = vmatpush1.msra.mxu0 0.0
        %2873 = vmatprep.subr.mxu0 0.0
        %2874 = vmatpush1.msra.mxu0 0.0
        %2875 = vmatprep.subr.mxu0 0.0
        %2876 = vmatpush1.msra.mxu0 0.0
        %2877 = vmatprep.subr.mxu0 0.0
        %2878 = vmatpush1.msra.mxu0 0.0
        %2879 = vmatprep.subr.mxu0 0.0
        %2880 = vmatpush1.msra.mxu0 0.0
        %2881 = vmatprep.subr.mxu0 0.0
        %2882 = vmatpush1.msra.mxu0 0.0
        %2883 = vmatprep.subr.mxu0 0.0
        %2884 = vmatpush1.msra.mxu0 0.0
        %2885 = vmatprep.subr.mxu0 0.0
        %2886 = vmatpush1.msra.mxu0 0.0
        %2887 = vmatprep.subr.mxu0 0.0
        %2888 = vmatpush1.msra.mxu0 0.0
        %2889 = vmatprep.subr.mxu0 0.0
        %2890 = vmatpush1.msra.mxu0 0.0
        %2891 = vmatprep.subr.mxu0 0.0
        %2892 = vmatpush1.msra.mxu0 0.0
        %2893 = vmatprep.subr.mxu0 0.0
        %2894 = vmatpush1.msra.mxu0 0.0
        %2895 = vmatprep.subr.mxu0 0.0
        %2896 = vmatpush1.msra.mxu0 0.0
        %2897 = vmatprep.subr.mxu0 0.0
        %2898 = vmatpush1.msra.mxu0 0.0
        %2899 = vmatprep.subr.mxu0 0.0
        %2900 = vmatpush1.msra.mxu0 0.0
        %2901 = vmatprep.subr.mxu0 0.0
        %2902 = vmatpush1.msra.mxu0 0.0
        %2903 = vmatprep.subr.mxu0 0.0
        %2904 = vmatpush1.msra.mxu0 0.0
        %2905 = vmatprep.subr.mxu0 0.0
        %2906 = vmatpush1.msra.mxu0 0.0
        %2907 = vmatprep.subr.mxu0 0.0
        %2908 = vmatpush1.msra.mxu0 0.0
        %2909 = vmatprep.subr.mxu0 0.0
        %2910 = vmatpush1.msra.mxu0 0.0
        %2911 = vmatprep.subr.mxu0 0.0
        %2912 = vmatpush1.msra.mxu0 0.0
        %2913 = vmatprep.subr.mxu0 0.0
        %2914 = vmatpush1.msra.mxu0 0.0
        %2915 = vmatprep.subr.mxu0 0.0
        %2916 = vmatpush1.msra.mxu0 0.0
        %2917 = vmatprep.subr.mxu0 0.0
        %2918 = vmatpush1.msra.mxu0 0.0
        %2919 = vmatprep.subr.mxu0 0.0
        %2920 = vmatpush1.msra.mxu0 0.0
        %2921 = vmatprep.subr.mxu0 0.0
        %2922 = vmatpush1.msra.mxu0 0.0
        %2923 = vmatprep.subr.mxu0 0.0
        %2924 = vmatpush1.msra.mxu0 0.0
        %2925 = vmatprep.mubr.f32.mxu0 0.0
        %2926 = vmatmul.mubr.f32.gmra.mrb[0].mxu0 %v2636
        %v2927 = vpop.f32.mrb[0].mxu0
        %v2928 = vadd.f32 0.0, %v2927
        %v2929 = vpop.f32.mrb[0].mxu0
        %2930 = vmatprep.mubr.f32.mxu0 0.0
        %2931 = vmatmul.mubr.f32.gmra.mrb[0].mxu0 %v2639
        %v2932 = vpop.f32.mrb[0].mxu0
        %v2933 = vadd.f32 0.0, %v2932
        %v2934 = vpop.f32.mrb[0].mxu0
        %2935 = vmatprep.mubr.f32.mxu0 0.0
        %2936 = vmatmul.mubr.f32.gmra.mrb[0].mxu0 %v2642
        %v2937 = vpop.f32.mrb[0].mxu0
        %v2938 = vadd.f32 0.0, %v2937
        %v2939 = vpop.f32.mrb[0].mxu0
        %2940 = vmatprep.mubr.f32.mxu0 0.0
        %2941 = vmatmul.mubr.f32.gmra.mrb[0].mxu0 %v2645
        %v2942 = vpop.f32.mrb[0].mxu0
        %v2943 = vadd.f32 0.0, %v2942
        %v2944 = vpop.f32.mrb[0].mxu0
        %2945 = vdwg.mxu0
        %v2946 = vmul.f32 %v2928, %v2538
        %v2947 = vmul.f32 %v2933, %v2539
        %v2948 = vmul.f32 %v2938, %v2540
        %v2949 = vmul.f32 %v2943, %v2541
        %2951 = vset.pattern.permute.xlu0 0
        %2952 = vperm.xlu0 %2951, %v2946
        %v2953 = vpop.permute.xlu0 %2952
        %2956 = vset.pattern.permute.xlu0 0
        %2957 = vperm.xlu0 %2956, %v2947
        %v2958 = vpop.permute.xlu0 %2957
        %2961 = vset.pattern.permute.xlu0 0
        %2962 = vperm.xlu0 %2961, %v2948
        %v2963 = vpop.permute.xlu0 %2962
        %2966 = vset.pattern.permute.xlu0 0
        %2967 = vperm.xlu0 %2966, %v2949
        %v2968 = vpop.permute.xlu0 %2967
        %v2970 = vmul.f32 %v2756, %v2953
        %v2971 = vmul.f32 %v2757, %v2953
        %v2972 = vmul.f32 %v2758, %v2958
        %v2973 = vmul.f32 %v2759, %v2958
        %v2974 = vmul.f32 %v2760, %v2963
        %v2975 = vmul.f32 %v2761, %v2963
        %v2976 = vmul.f32 %v2762, %v2968
        %v2977 = vmul.f32 %v2763, %v2968
        %2979 = vset.pattern.permute.xlu0 0
        %2980 = vperm.xlu0 %2979, %v2542
        %v2981 = vpop.permute.xlu0 %2980
        %2984 = vset.pattern.permute.xlu0 0
        %2985 = vperm.xlu0 %2984, %v2543
        %v2986 = vpop.permute.xlu0 %2985
        %2989 = vset.pattern.permute.xlu0 0
        %2990 = vperm.xlu0 %2989, %v2544
        %v2991 = vpop.permute.xlu0 %2990
        %2994 = vset.pattern.permute.xlu0 0
        %2995 = vperm.xlu0 %2994, %v2545
        %v2996 = vpop.permute.xlu0 %2995
        %v2998 = vadd.f32 %v2970, %v2981
        %v2999 = vadd.f32 %v2971, %v2981
        %v3000 = vadd.f32 %v2972, %v2986
        %v3001 = vadd.f32 %v2973, %v2986
        %v3002 = vadd.f32 %v2974, %v2991
        %v3003 = vadd.f32 %v2975, %v2991
        %v3004 = vadd.f32 %v2976, %v2996
        %v3005 = vadd.f32 %v2977, %v2996
        %v3006 = vld [vmem:[%s5] sm:$0xff]
        %v3007 = vld [vmem:[%s5 + $0x8] sm:$0xff]
        %v3008 = vld [vmem:[%s5 + $0x10] sm:$0xff]
        %v3009 = vld [vmem:[%s5 + $0x18] sm:$0xff]
        %v3011 = vsel %vm597, %v3006, 0
        %v3014 = vsel %vm597, %v3007, 0
        %v3017 = vsel %vm597, %v3008, 0
        %v3020 = vsel %vm597, %v3009, 0
        %3022 = vmatprep.subr.mxu0 %v613
        %3023 = vmatpush1.msra.mxu0 %v611
        %3024 = vmatprep.subr.mxu0 0.0
        %3025 = vmatpush1.msra.mxu0 0.0
        %3026 = vmatprep.subr.mxu0 0.0
        %3027 = vmatpush1.msra.mxu0 0.0
        %3028 = vmatprep.subr.mxu0 0.0
        %3029 = vmatpush1.msra.mxu0 0.0
        %3030 = vmatprep.subr.mxu0 0.0
        %3031 = vmatpush1.msra.mxu0 0.0
        %3032 = vmatprep.subr.mxu0 0.0
        %3033 = vmatpush1.msra.mxu0 0.0
        %3034 = vmatprep.subr.mxu0 0.0
        %3035 = vmatpush1.msra.mxu0 0.0
        %3036 = vmatprep.subr.mxu0 0.0
        %3037 = vmatpush1.msra.mxu0 0.0
        %3038 = vmatprep.subr.mxu0 0.0
        %3039 = vmatpush1.msra.mxu0 0.0
        %3040 = vmatprep.subr.mxu0 0.0
        %3041 = vmatpush1.msra.mxu0 0.0
        %3042 = vmatprep.subr.mxu0 0.0
        %3043 = vmatpush1.msra.mxu0 0.0
        %3044 = vmatprep.subr.mxu0 0.0
        %3045 = vmatpush1.msra.mxu0 0.0
        %3046 = vmatprep.subr.mxu0 0.0
        %3047 = vmatpush1.msra.mxu0 0.0
        %3048 = vmatprep.subr.mxu0 0.0
        %3049 = vmatpush1.msra.mxu0 0.0
        %3050 = vmatprep.subr.mxu0 0.0
        %3051 = vmatpush1.msra.mxu0 0.0
        %3052 = vmatprep.subr.mxu0 0.0
        %3053 = vmatpush1.msra.mxu0 0.0
        %3054 = vmatprep.subr.mxu0 0.0
        %3055 = vmatpush1.msra.mxu0 0.0
        %3056 = vmatprep.subr.mxu0 0.0
        %3057 = vmatpush1.msra.mxu0 0.0
        %3058 = vmatprep.subr.mxu0 0.0
        %3059 = vmatpush1.msra.mxu0 0.0
        %3060 = vmatprep.subr.mxu0 0.0
        %3061 = vmatpush1.msra.mxu0 0.0
        %3062 = vmatprep.subr.mxu0 0.0
        %3063 = vmatpush1.msra.mxu0 0.0
        %3064 = vmatprep.subr.mxu0 0.0
        %3065 = vmatpush1.msra.mxu0 0.0
        %3066 = vmatprep.subr.mxu0 0.0
        %3067 = vmatpush1.msra.mxu0 0.0
        %3068 = vmatprep.subr.mxu0 0.0
        %3069 = vmatpush1.msra.mxu0 0.0
        %3070 = vmatprep.subr.mxu0 0.0
        %3071 = vmatpush1.msra.mxu0 0.0
        %3072 = vmatprep.subr.mxu0 0.0
        %3073 = vmatpush1.msra.mxu0 0.0
        %3074 = vmatprep.subr.mxu0 0.0
        %3075 = vmatpush1.msra.mxu0 0.0
        %3076 = vmatprep.subr.mxu0 0.0
        %3077 = vmatpush1.msra.mxu0 0.0
        %3078 = vmatprep.subr.mxu0 0.0
        %3079 = vmatpush1.msra.mxu0 0.0
        %3080 = vmatprep.subr.mxu0 0.0
        %3081 = vmatpush1.msra.mxu0 0.0
        %3082 = vmatprep.subr.mxu0 0.0
        %3083 = vmatpush1.msra.mxu0 0.0
        %3084 = vmatprep.subr.mxu0 0.0
        %3085 = vmatpush1.msra.mxu0 0.0
        %3086 = vmatprep.mubr.f32.mxu0 0.0
        %3087 = vmatmul.mubr.f32.gmra.mrb[0].mxu0 %v3011
        %v3088 = vpop.f32.mrb[0].mxu0
        %v3089 = vadd.f32 0.0, %v3088
        %v3090 = vpop.f32.mrb[0].mxu0
        %v3091 = vadd.f32 0.0, %v3090
        %3092 = vmatprep.mubr.f32.mxu0 0.0
        %3093 = vmatmul.mubr.f32.gmra.mrb[0].mxu0 %v3014
        %v3094 = vpop.f32.mrb[0].mxu0
        %v3095 = vadd.f32 0.0, %v3094
        %v3096 = vpop.f32.mrb[0].mxu0
        %v3097 = vadd.f32 0.0, %v3096
        %3098 = vmatprep.mubr.f32.mxu0 0.0
        %3099 = vmatmul.mubr.f32.gmra.mrb[0].mxu0 %v3017
        %v3100 = vpop.f32.mrb[0].mxu0
        %v3101 = vadd.f32 0.0, %v3100
        %v3102 = vpop.f32.mrb[0].mxu0
        %v3103 = vadd.f32 0.0, %v3102
        %3104 = vmatprep.mubr.f32.mxu0 0.0
        %3105 = vmatmul.mubr.f32.gmra.mrb[0].mxu0 %v3020
        %v3106 = vpop.f32.mrb[0].mxu0
        %v3107 = vadd.f32 0.0, %v3106
        %v3108 = vpop.f32.mrb[0].mxu0
        %v3109 = vadd.f32 0.0, %v3108
        %3110 = vdwg.mxu0
        %v3111 = vld [vmem:[%s12] sm:$0xff]
        %v3112 = vld [vmem:[%s12 + $0x8] sm:$0xff]
        %v3113 = vld [vmem:[%s12 + $0x10] sm:$0xff]
        %v3114 = vld [vmem:[%s12 + $0x18] sm:$0xff]
        %v3115 = vld [vmem:[%s13] sm:$0xff]
        %v3116 = vld [vmem:[%s13 + $0x8] sm:$0xff]
        %v3117 = vld [vmem:[%s13 + $0x10] sm:$0xff]
        %v3118 = vld [vmem:[%s13 + $0x18] sm:$0xff]
        %3119 = vmatprep.subr.mxu0 %v3091
        %3120 = vmatpush1.msra.mxu0 %v3089
        %3121 = vmatprep.subr.mxu0 %v3097
        %3122 = vmatpush1.msra.mxu0 %v3095
        %3123 = vmatprep.subr.mxu0 %v3103
        %3124 = vmatpush1.msra.mxu0 %v3101
        %3125 = vmatprep.subr.mxu0 %v3109
        %3126 = vmatpush1.msra.mxu0 %v3107
        %3127 = vmatprep.subr.mxu0 0.0
        %3128 = vmatpush1.msra.mxu0 0.0
        %3129 = vmatprep.subr.mxu0 0.0
        %3130 = vmatpush1.msra.mxu0 0.0
        %3131 = vmatprep.subr.mxu0 0.0
        %3132 = vmatpush1.msra.mxu0 0.0
        %3133 = vmatprep.subr.mxu0 0.0
        %3134 = vmatpush1.msra.mxu0 0.0
        %3135 = vmatprep.subr.mxu0 0.0
        %3136 = vmatpush1.msra.mxu0 0.0
        %3137 = vmatprep.subr.mxu0 0.0
        %3138 = vmatpush1.msra.mxu0 0.0
        %3139 = vmatprep.subr.mxu0 0.0
        %3140 = vmatpush1.msra.mxu0 0.0
        %3141 = vmatprep.subr.mxu0 0.0
        %3142 = vmatpush1.msra.mxu0 0.0
        %3143 = vmatprep.subr.mxu0 0.0
        %3144 = vmatpush1.msra.mxu0 0.0
        %3145 = vmatprep.subr.mxu0 0.0
        %3146 = vmatpush1.msra.mxu0 0.0
        %3147 = vmatprep.subr.mxu0 0.0
        %3148 = vmatpush1.msra.mxu0 0.0
        %3149 = vmatprep.subr.mxu0 0.0
        %3150 = vmatpush1.msra.mxu0 0.0
        %3151 = vmatprep.subr.mxu0 0.0
        %3152 = vmatpush1.msra.mxu0 0.0
        %3153 = vmatprep.subr.mxu0 0.0
        %3154 = vmatpush1.msra.mxu0 0.0
        %3155 = vmatprep.subr.mxu0 0.0
        %3156 = vmatpush1.msra.mxu0 0.0
        %3157 = vmatprep.subr.mxu0 0.0
        %3158 = vmatpush1.msra.mxu0 0.0
        %3159 = vmatprep.subr.mxu0 0.0
        %3160 = vmatpush1.msra.mxu0 0.0
        %3161 = vmatprep.subr.mxu0 0.0
        %3162 = vmatpush1.msra.mxu0 0.0
        %3163 = vmatprep.subr.mxu0 0.0
        %3164 = vmatpush1.msra.mxu0 0.0
        %3165 = vmatprep.subr.mxu0 0.0
        %3166 = vmatpush1.msra.mxu0 0.0
        %3167 = vmatprep.subr.mxu0 0.0
        %3168 = vmatpush1.msra.mxu0 0.0
        %3169 = vmatprep.subr.mxu0 0.0
        %3170 = vmatpush1.msra.mxu0 0.0
        %3171 = vmatprep.subr.mxu0 0.0
        %3172 = vmatpush1.msra.mxu0 0.0
        %3173 = vmatprep.subr.mxu0 0.0
        %3174 = vmatpush1.msra.mxu0 0.0
        %3175 = vmatprep.subr.mxu0 0.0
        %3176 = vmatpush1.msra.mxu0 0.0
        %3177 = vmatprep.subr.mxu0 0.0
        %3178 = vmatpush1.msra.mxu0 0.0
        %3179 = vmatprep.subr.mxu0 0.0
        %3180 = vmatpush1.msra.mxu0 0.0
        %3181 = vmatprep.subr.mxu0 0.0
        %3182 = vmatpush1.msra.mxu0 0.0
        %3183 = vmatprep.mubr.f32.mxu0 0.0
        %3184 = vmatmul.mubr.f32.gmra.mrb[0].mxu0 %v2547
        %v3185 = vpop.f32.mrb[0].mxu0
        %v3186 = vadd.f32 0.0, %v3185
        %v3187 = vpop.f32.mrb[0].mxu0
        %v3188 = vadd.f32 0.0, %v3187
        %3189 = vmatprep.mubr.f32.mxu0 0.0
        %3190 = vmatmul.mubr.f32.gmra.mrb[0].mxu0 %v2550
        %v3191 = vpop.f32.mrb[0].mxu0
        %v3192 = vadd.f32 0.0, %v3191
        %v3193 = vpop.f32.mrb[0].mxu0
        %v3194 = vadd.f32 0.0, %v3193
        %3195 = vdwg.mxu0
        %v3196 = vadd.f32 %v3186, %v3188
        %3197 = vadd.xlane.f32.xlu0 %v3196
        %v3198 = vpop.xlane.xlu0 %3197
        %v3199 = vadd.f32 %v3192, %v3194
        %3200 = vadd.xlane.f32.xlu0 %v3199
        %v3201 = vpop.xlane.xlu0 %3200
        %3202 = vmatprep.subr.mxu0 0.0
        %3203 = vmatpush1.msra.mxu0 %v3198
        %3204 = vmatprep.subr.mxu0 0.0
        %3205 = vmatpush1.msra.mxu0 %v3201
        %3206 = vmatprep.subr.mxu0 0.0
        %3207 = vmatpush1.msra.mxu0 0.0
        %3208 = vmatprep.subr.mxu0 0.0
        %3209 = vmatpush1.msra.mxu0 0.0
        %3210 = vmatprep.subr.mxu0 0.0
        %3211 = vmatpush1.msra.mxu0 0.0
        %3212 = vmatprep.subr.mxu0 0.0
        %3213 = vmatpush1.msra.mxu0 0.0
        %3214 = vmatprep.subr.mxu0 0.0
        %3215 = vmatpush1.msra.mxu0 0.0
        %3216 = vmatprep.subr.mxu0 0.0
        %3217 = vmatpush1.msra.mxu0 0.0
        %3218 = vmatprep.subr.mxu0 0.0
        %3219 = vmatpush1.msra.mxu0 0.0
        %3220 = vmatprep.subr.mxu0 0.0
        %3221 = vmatpush1.msra.mxu0 0.0
        %3222 = vmatprep.subr.mxu0 0.0
        %3223 = vmatpush1.msra.mxu0 0.0
        %3224 = vmatprep.subr.mxu0 0.0
        %3225 = vmatpush1.msra.mxu0 0.0
        %3226 = vmatprep.subr.mxu0 0.0
        %3227 = vmatpush1.msra.mxu0 0.0
        %3228 = vmatprep.subr.mxu0 0.0
        %3229 = vmatpush1.msra.mxu0 0.0
        %3230 = vmatprep.subr.mxu0 0.0
        %3231 = vmatpush1.msra.mxu0 0.0
        %3232 = vmatprep.subr.mxu0 0.0
        %3233 = vmatpush1.msra.mxu0 0.0
        %3234 = vmatprep.subr.mxu0 0.0
        %3235 = vmatpush1.msra.mxu0 0.0
        %3236 = vmatprep.subr.mxu0 0.0
        %3237 = vmatpush1.msra.mxu0 0.0
        %3238 = vmatprep.subr.mxu0 0.0
        %3239 = vmatpush1.msra.mxu0 0.0
        %3240 = vmatprep.subr.mxu0 0.0
        %3241 = vmatpush1.msra.mxu0 0.0
        %3242 = vmatprep.subr.mxu0 0.0
        %3243 = vmatpush1.msra.mxu0 0.0
        %3244 = vmatprep.subr.mxu0 0.0
        %3245 = vmatpush1.msra.mxu0 0.0
        %3246 = vmatprep.subr.mxu0 0.0
        %3247 = vmatpush1.msra.mxu0 0.0
        %3248 = vmatprep.subr.mxu0 0.0
        %3249 = vmatpush1.msra.mxu0 0.0
        %3250 = vmatprep.subr.mxu0 0.0
        %3251 = vmatpush1.msra.mxu0 0.0
        %3252 = vmatprep.subr.mxu0 0.0
        %3253 = vmatpush1.msra.mxu0 0.0
        %3254 = vmatprep.subr.mxu0 0.0
        %3255 = vmatpush1.msra.mxu0 0.0
        %3256 = vmatprep.subr.mxu0 0.0
        %3257 = vmatpush1.msra.mxu0 0.0
        %3258 = vmatprep.subr.mxu0 0.0
        %3259 = vmatpush1.msra.mxu0 0.0
        %3260 = vmatprep.subr.mxu0 0.0
        %3261 = vmatpush1.msra.mxu0 0.0
        %3262 = vmatprep.subr.mxu0 0.0
        %3263 = vmatpush1.msra.mxu0 0.0
        %3264 = vmatprep.subr.mxu0 0.0
        %3265 = vmatpush1.msra.mxu0 0.0
        %3266 = vmatprep.mubr.f32.mxu0 0.0
        %3267 = vmatmul.mubr.f32.gmra.mrb[0].mxu0 %v2636
        %v3268 = vpop.f32.mrb[0].mxu0
        %v3269 = vadd.f32 0.0, %v3268
        %v3270 = vpop.f32.mrb[0].mxu0
        %3271 = vmatprep.mubr.f32.mxu0 0.0
        %3272 = vmatmul.mubr.f32.gmra.mrb[0].mxu0 %v2639
        %v3273 = vpop.f32.mrb[0].mxu0
        %v3274 = vadd.f32 0.0, %v3273
        %v3275 = vpop.f32.mrb[0].mxu0
        %3276 = vmatprep.mubr.f32.mxu0 0.0
        %3277 = vmatmul.mubr.f32.gmra.mrb[0].mxu0 %v2642
        %v3278 = vpop.f32.mrb[0].mxu0
        %v3279 = vadd.f32 0.0, %v3278
        %v3280 = vpop.f32.mrb[0].mxu0
        %3281 = vmatprep.mubr.f32.mxu0 0.0
        %3282 = vmatmul.mubr.f32.gmra.mrb[0].mxu0 %v2645
        %v3283 = vpop.f32.mrb[0].mxu0
        %v3284 = vadd.f32 0.0, %v3283
        %v3285 = vpop.f32.mrb[0].mxu0
        %3286 = vdwg.mxu0
        %v3287 = vmul.f32 %v3269, 0.001953125
        %v3288 = vmul.f32 %v3274, 0.001953125
        %v3289 = vmul.f32 %v3279, 0.001953125
        %v3290 = vmul.f32 %v3284, 0.001953125
        %3292 = vset.pattern.permute.xlu0 0
        %3293 = vperm.xlu0 %3292, %v3287
        %v3294 = vpop.permute.xlu0 %3293
        %3297 = vset.pattern.permute.xlu0 0
        %3298 = vperm.xlu0 %3297, %v3288
        %v3299 = vpop.permute.xlu0 %3298
        %3302 = vset.pattern.permute.xlu0 0
        %3303 = vperm.xlu0 %3302, %v3289
        %v3304 = vpop.permute.xlu0 %3303
        %3307 = vset.pattern.permute.xlu0 0
        %3308 = vperm.xlu0 %3307, %v3290
        %v3309 = vpop.permute.xlu0 %3308
        %v3311 = vsub.f32 %v3089, %v3294
        %v3312 = vsub.f32 %v3091, %v3294
        %v3313 = vsub.f32 %v3095, %v3299
        %v3314 = vsub.f32 %v3097, %v3299
        %v3315 = vsub.f32 %v3101, %v3304
        %v3316 = vsub.f32 %v3103, %v3304
        %v3317 = vsub.f32 %v3107, %v3309
        %v3318 = vsub.f32 %v3109, %v3309
        %v3319 = vmul.f32 %v3311, %v3311
        %v3320 = vmul.f32 %v3312, %v3312
        %v3321 = vmul.f32 %v3313, %v3313
        %v3322 = vmul.f32 %v3314, %v3314
        %v3323 = vmul.f32 %v3315, %v3315
        %v3324 = vmul.f32 %v3316, %v3316
        %v3325 = vmul.f32 %v3317, %v3317
        %v3326 = vmul.f32 %v3318, %v3318
        %3327 = vmatprep.subr.mxu0 %v3320
        %3328 = vmatpush1.msra.mxu0 %v3319
        %3329 = vmatprep.subr.mxu0 %v3322
        %3330 = vmatpush1.msra.mxu0 %v3321
        %3331 = vmatprep.subr.mxu0 %v3324
        %3332 = vmatpush1.msra.mxu0 %v3323
        %3333 = vmatprep.subr.mxu0 %v3326
        %3334 = vmatpush1.msra.mxu0 %v3325
        %3335 = vmatprep.subr.mxu0 0.0
        %3336 = vmatpush1.msra.mxu0 0.0
        %3337 = vmatprep.subr.mxu0 0.0
        %3338 = vmatpush1.msra.mxu0 0.0
        %3339 = vmatprep.subr.mxu0 0.0
        %3340 = vmatpush1.msra.mxu0 0.0
        %3341 = vmatprep.subr.mxu0 0.0
        %3342 = vmatpush1.msra.mxu0 0.0
        %3343 = vmatprep.subr.mxu0 0.0
        %3344 = vmatpush1.msra.mxu0 0.0
        %3345 = vmatprep.subr.mxu0 0.0
        %3346 = vmatpush1.msra.mxu0 0.0
        %3347 = vmatprep.subr.mxu0 0.0
        %3348 = vmatpush1.msra.mxu0 0.0
        %3349 = vmatprep.subr.mxu0 0.0
        %3350 = vmatpush1.msra.mxu0 0.0
        %3351 = vmatprep.subr.mxu0 0.0
        %3352 = vmatpush1.msra.mxu0 0.0
        %3353 = vmatprep.subr.mxu0 0.0
        %3354 = vmatpush1.msra.mxu0 0.0
        %3355 = vmatprep.subr.mxu0 0.0
        %3356 = vmatpush1.msra.mxu0 0.0
        %3357 = vmatprep.subr.mxu0 0.0
        %3358 = vmatpush1.msra.mxu0 0.0
        %3359 = vmatprep.subr.mxu0 0.0
        %3360 = vmatpush1.msra.mxu0 0.0
        %3361 = vmatprep.subr.mxu0 0.0
        %3362 = vmatpush1.msra.mxu0 0.0
        %3363 = vmatprep.subr.mxu0 0.0
        %3364 = vmatpush1.msra.mxu0 0.0
        %3365 = vmatprep.subr.mxu0 0.0
        %3366 = vmatpush1.msra.mxu0 0.0
        %3367 = vmatprep.subr.mxu0 0.0
        %3368 = vmatpush1.msra.mxu0 0.0
        %3369 = vmatprep.subr.mxu0 0.0
        %3370 = vmatpush1.msra.mxu0 0.0
        %3371 = vmatprep.subr.mxu0 0.0
        %3372 = vmatpush1.msra.mxu0 0.0
        %3373 = vmatprep.subr.mxu0 0.0
        %3374 = vmatpush1.msra.mxu0 0.0
        %3375 = vmatprep.subr.mxu0 0.0
        %3376 = vmatpush1.msra.mxu0 0.0
        %3377 = vmatprep.subr.mxu0 0.0
        %3378 = vmatpush1.msra.mxu0 0.0
        %3379 = vmatprep.subr.mxu0 0.0
        %3380 = vmatpush1.msra.mxu0 0.0
        %3381 = vmatprep.subr.mxu0 0.0
        %3382 = vmatpush1.msra.mxu0 0.0
        %3383 = vmatprep.subr.mxu0 0.0
        %3384 = vmatpush1.msra.mxu0 0.0
        %3385 = vmatprep.subr.mxu0 0.0
        %3386 = vmatpush1.msra.mxu0 0.0
        %3387 = vmatprep.subr.mxu0 0.0
        %3388 = vmatpush1.msra.mxu0 0.0
        %3389 = vmatprep.subr.mxu0 0.0
        %3390 = vmatpush1.msra.mxu0 0.0
        %3391 = vmatprep.mubr.f32.mxu0 0.0
        %3392 = vmatmul.mubr.f32.gmra.mrb[0].mxu0 %v2547
        %v3393 = vpop.f32.mrb[0].mxu0
        %v3394 = vadd.f32 0.0, %v3393
        %v3395 = vpop.f32.mrb[0].mxu0
        %v3396 = vadd.f32 0.0, %v3395
        %3397 = vmatprep.mubr.f32.mxu0 0.0
        %3398 = vmatmul.mubr.f32.gmra.mrb[0].mxu0 %v2550
        %v3399 = vpop.f32.mrb[0].mxu0
        %v3400 = vadd.f32 0.0, %v3399
        %v3401 = vpop.f32.mrb[0].mxu0
        %v3402 = vadd.f32 0.0, %v3401
        %3403 = vdwg.mxu0
        %v3404 = vadd.f32 %v3394, %v3396
        %3405 = vadd.xlane.f32.xlu0 %v3404
        %v3406 = vpop.xlane.xlu0 %3405
        %v3407 = vadd.f32 %v3400, %v3402
        %3408 = vadd.xlane.f32.xlu0 %v3407
        %v3409 = vpop.xlane.xlu0 %3408
        %v3410 = vmul.f32 %v3406, 0.001953125
        %v3411 = vmul.f32 %v3409, 0.001953125
        %v3412 = vadd.f32 %v3410, 1e-05
        %v3413 = vadd.f32 %v3411, 1e-05
        %v3414 = vrsqrt.pop %v3412
        %v3415 = vrsqrt.pop %v3413
        %3416 = vmatprep.subr.mxu0 0.0
        %3417 = vmatpush1.msra.mxu0 %v3414
        %3418 = vmatprep.subr.mxu0 0.0
        %3419 = vmatpush1.msra.mxu0 %v3415
        %3420 = vmatprep.subr.mxu0 0.0
        %3421 = vmatpush1.msra.mxu0 0.0
        %3422 = vmatprep.subr.mxu0 0.0
        %3423 = vmatpush1.msra.mxu0 0.0
        %3424 = vmatprep.subr.mxu0 0.0
        %3425 = vmatpush1.msra.mxu0 0.0
        %3426 = vmatprep.subr.mxu0 0.0
        %3427 = vmatpush1.msra.mxu0 0.0
        %3428 = vmatprep.subr.mxu0 0.0
        %3429 = vmatpush1.msra.mxu0 0.0
        %3430 = vmatprep.subr.mxu0 0.0
        %3431 = vmatpush1.msra.mxu0 0.0
        %3432 = vmatprep.subr.mxu0 0.0
        %3433 = vmatpush1.msra.mxu0 0.0
        %3434 = vmatprep.subr.mxu0 0.0
        %3435 = vmatpush1.msra.mxu0 0.0
        %3436 = vmatprep.subr.mxu0 0.0
        %3437 = vmatpush1.msra.mxu0 0.0
        %3438 = vmatprep.subr.mxu0 0.0
        %3439 = vmatpush1.msra.mxu0 0.0
        %3440 = vmatprep.subr.mxu0 0.0
        %3441 = vmatpush1.msra.mxu0 0.0
        %3442 = vmatprep.subr.mxu0 0.0
        %3443 = vmatpush1.msra.mxu0 0.0
        %3444 = vmatprep.subr.mxu0 0.0
        %3445 = vmatpush1.msra.mxu0 0.0
        %3446 = vmatprep.subr.mxu0 0.0
        %3447 = vmatpush1.msra.mxu0 0.0
        %3448 = vmatprep.subr.mxu0 0.0
        %3449 = vmatpush1.msra.mxu0 0.0
        %3450 = vmatprep.subr.mxu0 0.0
        %3451 = vmatpush1.msra.mxu0 0.0
        %3452 = vmatprep.subr.mxu0 0.0
        %3453 = vmatpush1.msra.mxu0 0.0
        %3454 = vmatprep.subr.mxu0 0.0
        %3455 = vmatpush1.msra.mxu0 0.0
        %3456 = vmatprep.subr.mxu0 0.0
        %3457 = vmatpush1.msra.mxu0 0.0
        %3458 = vmatprep.subr.mxu0 0.0
        %3459 = vmatpush1.msra.mxu0 0.0
        %3460 = vmatprep.subr.mxu0 0.0
        %3461 = vmatpush1.msra.mxu0 0.0
        %3462 = vmatprep.subr.mxu0 0.0
        %3463 = vmatpush1.msra.mxu0 0.0
        %3464 = vmatprep.subr.mxu0 0.0
        %3465 = vmatpush1.msra.mxu0 0.0
        %3466 = vmatprep.subr.mxu0 0.0
        %3467 = vmatpush1.msra.mxu0 0.0
        %3468 = vmatprep.subr.mxu0 0.0
        %3469 = vmatpush1.msra.mxu0 0.0
        %3470 = vmatprep.subr.mxu0 0.0
        %3471 = vmatpush1.msra.mxu0 0.0
        %3472 = vmatprep.subr.mxu0 0.0
        %3473 = vmatpush1.msra.mxu0 0.0
        %3474 = vmatprep.subr.mxu0 0.0
        %3475 = vmatpush1.msra.mxu0 0.0
        %3476 = vmatprep.subr.mxu0 0.0
        %3477 = vmatpush1.msra.mxu0 0.0
        %3478 = vmatprep.subr.mxu0 0.0
        %3479 = vmatpush1.msra.mxu0 0.0
        %3480 = vmatprep.mubr.f32.mxu0 0.0
        %3481 = vmatmul.mubr.f32.gmra.mrb[0].mxu0 %v2636
        %v3482 = vpop.f32.mrb[0].mxu0
        %v3483 = vadd.f32 0.0, %v3482
        %v3484 = vpop.f32.mrb[0].mxu0
        %3485 = vmatprep.mubr.f32.mxu0 0.0
        %3486 = vmatmul.mubr.f32.gmra.mrb[0].mxu0 %v2639
        %v3487 = vpop.f32.mrb[0].mxu0
        %v3488 = vadd.f32 0.0, %v3487
        %v3489 = vpop.f32.mrb[0].mxu0
        %3490 = vmatprep.mubr.f32.mxu0 0.0
        %3491 = vmatmul.mubr.f32.gmra.mrb[0].mxu0 %v2642
        %v3492 = vpop.f32.mrb[0].mxu0
        %v3493 = vadd.f32 0.0, %v3492
        %v3494 = vpop.f32.mrb[0].mxu0
        %3495 = vmatprep.mubr.f32.mxu0 0.0
        %3496 = vmatmul.mubr.f32.gmra.mrb[0].mxu0 %v2645
        %v3497 = vpop.f32.mrb[0].mxu0
        %v3498 = vadd.f32 0.0, %v3497
        %v3499 = vpop.f32.mrb[0].mxu0
        %3500 = vdwg.mxu0
        %v3501 = vmul.f32 %v3483, %v3111
        %v3502 = vmul.f32 %v3488, %v3112
        %v3503 = vmul.f32 %v3493, %v3113
        %v3504 = vmul.f32 %v3498, %v3114
        %3506 = vset.pattern.permute.xlu0 0
        %3507 = vperm.xlu0 %3506, %v3501
        %v3508 = vpop.permute.xlu0 %3507
        %3511 = vset.pattern.permute.xlu0 0
        %3512 = vperm.xlu0 %3511, %v3502
        %v3513 = vpop.permute.xlu0 %3512
        %3516 = vset.pattern.permute.xlu0 0
        %3517 = vperm.xlu0 %3516, %v3503
        %v3518 = vpop.permute.xlu0 %3517
        %3521 = vset.pattern.permute.xlu0 0
        %3522 = vperm.xlu0 %3521, %v3504
        %v3523 = vpop.permute.xlu0 %3522
        %v3525 = vmul.f32 %v3311, %v3508
        %v3526 = vmul.f32 %v3312, %v3508
        %v3527 = vmul.f32 %v3313, %v3513
        %v3528 = vmul.f32 %v3314, %v3513
        %v3529 = vmul.f32 %v3315, %v3518
        %v3530 = vmul.f32 %v3316, %v3518
        %v3531 = vmul.f32 %v3317, %v3523
        %v3532 = vmul.f32 %v3318, %v3523
        %3534 = vset.pattern.permute.xlu0 0
        %3535 = vperm.xlu0 %3534, %v3115
        %v3536 = vpop.permute.xlu0 %3535
        %3539 = vset.pattern.permute.xlu0 0
        %3540 = vperm.xlu0 %3539, %v3116
        %v3541 = vpop.permute.xlu0 %3540
        %3544 = vset.pattern.permute.xlu0 0
        %3545 = vperm.xlu0 %3544, %v3117
        %v3546 = vpop.permute.xlu0 %3545
        %3549 = vset.pattern.permute.xlu0 0
        %3550 = vperm.xlu0 %3549, %v3118
        %v3551 = vpop.permute.xlu0 %3550
        %v3553 = vadd.f32 %v3525, %v3536
        %v3554 = vadd.f32 %v3526, %v3536
        %v3555 = vadd.f32 %v3527, %v3541
        %v3556 = vadd.f32 %v3528, %v3541
        %v3557 = vadd.f32 %v3529, %v3546
        %v3558 = vadd.f32 %v3530, %v3546
        %v3559 = vadd.f32 %v3531, %v3551
        %v3560 = vadd.f32 %v3532, %v3551
        %v3561 = vadd.f32 %v2998, %v3553
        %v3562 = vadd.f32 %v2999, %v3554
        %v3563 = vadd.f32 %v3000, %v3555
        %v3564 = vadd.f32 %v3001, %v3556
        %v3565 = vadd.f32 %v3002, %v3557
        %v3566 = vadd.f32 %v3003, %v3558
        %v3567 = vadd.f32 %v3004, %v3559
        %v3568 = vadd.f32 %v3005, %v3560
        %3569 = vst [vmem:[%s568] sm:$0xff] %v3561
        %3570 = vst [vmem:[%s568 + $0x8] sm:$0xff] %v3562
        %3571 = vst [vmem:[%s568 + $0x10] sm:$0xff] %v3563
        %3572 = vst [vmem:[%s568 + $0x18] sm:$0xff] %v3564
        %3573 = vst [vmem:[%s568 + $0x20] sm:$0xff] %v3565
        %3574 = vst [vmem:[%s568 + $0x28] sm:$0xff] %v3566
        %3575 = vst [vmem:[%s568 + $0x30] sm:$0xff] %v3567
        %3576 = vst [vmem:[%s568 + $0x38] sm:$0xff] %v3568
        %s3577 = sand.u32 %s423, 1
        %s3578 = scalar_lea.sflag [#allocation4], %s3577
        %s3579 = sand.u32 %s423, 1
        %s3580 = smul.addr %s3579, 64
        %s3581 = scalar_lea.vmem [#allocation3], %s3580
        // Predicated region
        $region93: #{tpu_custom_call.1} parent=91 // pred_check
          %p3582 = pneg %p433
        $region94: #{tpu_custom_call.1} parent=91 // pred_check_branch
          %3584 = sbr.rel (%p3582) target = $region96
        $region95: #{tpu_custom_call.1} parent=91 // pred_region
          %s3586 = ssub.s32 1024, 1024
          %3587 = vsyncadd %s3578, %s3586
          %s3588 = smul.addr %s32, 8
          %s3589 = smul.addr %s3588, 128
          %s3590 = scalar_lea.hbm %s18, %s3589
          %s3591 = sshll.u32 %s3581, 4
          %s3592 = int_to_ptr.vmem [resolvable:$true] %s3591
          %3597 = dma.vmem_to_hbm [thread:$0]  %s3592, 1024, %s3590, %s3578, 256, 256, 16
        $region96: #{tpu_custom_call.1} parent=91 // pred_fallthru
          _
      $region92: #{tpu_custom_call.1} parent=5 // pred_fallthru
        _
      %p3598 = scmp.le.s32.totalorder 2, %s27
      // Predicated region
      $region97: #{tpu_custom_call.1} parent=5 // pred_check
        %p3599 = pneg %p3598
      $region98: #{tpu_custom_call.1} parent=5 // pred_check_branch
        %3601 = sbr.rel (%p3599) target = $region100
      $region99: #{tpu_custom_call.1} parent=5 // pred_region
        %s3602 = ssub.s32 %s27, 2
        // Predicated region
        $region101: #{tpu_custom_call.1} parent=99 // pred_check
          %p3603 = pneg %p439
        $region102: #{tpu_custom_call.1} parent=99 // pred_check_branch
          %3605 = sbr.rel (%p3603) target = $region104
        $region103: #{tpu_custom_call.1} parent=99 // pred_region
          %s3606 = sand.u32 %s424, 1
          %s3607 = scalar_lea.sflag [#allocation4], %s3606
          %s3608 = sand.u32 %s424, 1
          %s3609 = smul.addr %s3608, 64
          %s3610 = scalar_lea.vmem [#allocation3], %s3609
          %3611 = dma.done %s3607, 1024
        $region104: #{tpu_custom_call.1} parent=99 // pred_fallthru
          _
      $region100: #{tpu_custom_call.1} parent=5 // pred_fallthru
        _
    $region6: #{tpu_custom_call.1} parent=1 // loop_footer
      %s31 = sadd.s32 1, %s27
    $region7: #{tpu_custom_call.1} parent=1 // loop_footer_branch
      %26 = sbr.rel target = $region3
    $region8: #{tpu_custom_call.1} parent=1 // loop_exit
      _
    %3612 = vsyncpa [#allocation4], 1
    %s3613 = scalar_lea.sflag [#allocation4], 1
    %3614 = vsyncpa %s3613, 1

</llo_original>
